<compile_context>
chip_gen: v6e
topology: v6e:2x2x1
jax: 0.10.0
libtpu: 0.0.40
codegen_flags: <defaults>
</compile_context>

<pallas_src>
import numpy as np
import jax
import jax.numpy as jnp
from jax.experimental import pallas as pl
from jax.experimental.pallas import tpu as pltpu


# ----------------------------- Pallas kernel -------------------------------

def make_fused_kernel(N, td, H1, C, n_tiles):
    """Fused DynamicGAT forward.  grid = (phase, dst_tile)."""
    NEG = -1e30

    def gat_tile(xl_sc, feat_ref, row_start, ea_f32, mask,
                 wr, br, we, attm, bias, H, out_sc):
        HC = H * C
        xl = xl_sc[...]                                          # [N, HC] source proj (all nodes)
        feat_dst = feat_ref[pl.ds(row_start, td), :]             # [td, F]  this tile's targets
        xr = jnp.dot(feat_dst, wr[...],
                     preferred_element_type=jnp.float32) + br[...]            # [td, HC]
        ep = jnp.dot(ea_f32, we[...],
                     preferred_element_type=jnp.float32)                       # [td*N, HC]

        # GATv2 pre-activation in [dst, src, HC] (dst-major, same layout as the ea tile).
        z = xr[:, None, :] + xl[None, :, :] + ep.reshape(td, N, HC)
        z = jnp.where(z > 0.0, z, 0.2 * z)                                     # LeakyReLU(0.2)

        # Attention contraction for ALL heads in one MXU matmul.
        logits = jnp.dot(z.reshape(td * N, HC), attm[...],
                         preferred_element_type=jnp.float32).reshape(td, N, H)

        for h in range(H):                                # static unroll; H is 1 or 2
            # Width-1 minor-axis reduce == squeeze of head h (layout-safe relayout).
            lg = jnp.sum(logits[:, :, h:h + 1], axis=-1)                       # [td(dst), N(src)]
            lg = jnp.where(mask, lg, NEG)
            m = jnp.max(lg, axis=-1, keepdims=True)                            # [td, 1]
            # No `* adj`: masked entries give exp(-1e30 - m) == 0 exactly; self-loops
            # guarantee m is a real edge logit, so the denominator is >= 1.
            p = jnp.exp(lg - m)
            s = jnp.sum(p, axis=-1, keepdims=True)
            alpha = p * pl.reciprocal(s, approx=True)                          # EUP recip
            # [dst, src] @ [src, C]: direct MXU matmul, no alpha transpose.
            agg = jnp.dot(alpha, xl[:, h * C:(h + 1) * C],
                          preferred_element_type=jnp.float32)                  # [td, C]
            # bias + ReLU, written straight into this head's column slice of the
            # layer scratch (no in-kernel concatenate).
            out_sc[pl.ds(row_start, td), pl.ds(h * C, C)] = jnp.maximum(
                agg + bias[:, h * C:(h + 1) * C], 0.0)

    def kernel(x_ref, adj_ref, ea_ref,
               wl1, bl1, wr1, br1, we1, attm1, bias1,
               wl2, bl2, wr2, br2, we2, attm2, bias2,
               onehot_ref, invc_ref, wfc_ref, bfc_ref,
               out_ref,
               h1_sc, h2_sc, xl1_sc, xl2_sc):
        phase = pl.program_id(0)
        j = pl.program_id(1)
        row_start = pl.multiple_of(j * td, td)

        mask = adj_ref[...] > 0.0                       # [td(dst), N(src)]
        ea = ea_ref[...].astype(jnp.float32)            # bf16 in HBM -> f32 once after load

        @pl.when(phase == 0)
        def _():
            @pl.when(j == 0)
            def _():
                # Source projection of the whole graph, computed once per layer.
                xl1_sc[...] = jnp.dot(x_ref[...], wl1[...],
                                      preferred_element_type=jnp.float32) + bl1[...]
            gat_tile(xl1_sc, x_ref, row_start, ea, mask,
                     wr1, br1, we1, attm1, bias1, H1, h1_sc)

        @pl.when(phase == 1)
        def _():
            @pl.when(j == 0)
            def _():
                xl2_sc[...] = jnp.dot(h1_sc[...], wl2[...],
                                      preferred_element_type=jnp.float32) + bl2[...]
            gat_tile(xl2_sc, h1_sc, row_start, ea, mask,
                     wr2, br2, we2, attm2, bias2, 1, h2_sc)

            @pl.when(j == n_tiles - 1)
            def _():
                # global_mean_pool (one-hot matmul) fused with the final Linear.
                pooled = jnp.dot(onehot_ref[...], h2_sc[...],
                                 preferred_element_type=jnp.float32) * invc_ref[...]
                out_ref[...] = jnp.dot(pooled, wfc_ref[...],
                                       preferred_element_type=jnp.float32) + bfc_ref[...]

    return kernel


# ------------------------------ JAX wrappers -------------------------------

def build_att_mat(att):
    """[H, C] attention vectors -> [H*C, H] block matrix for one MXU contraction."""
    H, C = att.shape
    eye = jnp.eye(H, dtype=jnp.float32)
    return (att[:, :, None] * eye[:, None, :]).reshape(H * C, H)


def dynamic_gat_forward(x, adj_ds, ea_flat_bf16, p1, p2, w_fc, b_fc, onehot, inv_cnt,
                        *, heads, hidden, td=8):
    """Single fused pallas_call for the whole forward pass, tiled over dst rows."""
    N = x.shape[0]
    B, out_ch = onehot.shape[0], w_fc.shape[1]
    Ed = ea_flat_bf16.shape[1]
    assert N % td == 0
    n_tiles = N // td

    attm1 = build_att_mat(p1[5])                      # [H1*C, H1]
    attm2 = build_att_mat(p2[5])                      # [C, 1]
    args = (x, adj_ds, ea_flat_bf16,
            p1[0], p1[1], p1[2], p1[3], p1[4], attm1, p1[6],
            p2[0], p2[1], p2[2], p2[3], p2[4], attm2, p2[6],
            onehot, inv_cnt, w_fc, b_fc)

    def _resident(a):  # full array, kept resident in VMEM (constant block index)
        return pl.BlockSpec(a.shape, lambda p, j: (0,) * a.ndim)

    in_specs = [
        _resident(x),                                              # node features (all nodes)
        pl.BlockSpec((td, N), lambda p, j: (j, 0)),                # adjacency rows of dst tile
        pl.BlockSpec((td * N, Ed), lambda p, j: (j, 0)),           # ea tile streams (bf16)
    ] + [_resident(a) for a in args[3:]]

    kernel = make_fused_kernel(N, td, heads, hidden, n_tiles)
    return pl.pallas_call(
        kernel,
        out_shape=jax.ShapeDtypeStruct((B, out_ch), jnp.float32),
        grid_spec=pltpu.PrefetchScalarGridSpec(
            num_scalar_prefetch=0,
            grid=(2, n_tiles),                                     # (phase, dst tile)
            in_specs=in_specs,
            out_specs=pl.BlockSpec((B, out_ch), lambda p, j: (0, 0)),
            scratch_shapes=[pltpu.VMEM((N, heads * hidden), jnp.float32),   # h1 (layer-1 out)
                            pltpu.VMEM((N, hidden), jnp.float32),           # h2 (layer-2 out)
                            pltpu.VMEM((N, heads * hidden), jnp.float32),   # xl1 (src proj L1)
                            pltpu.VMEM((N, hidden), jnp.float32)]),         # xl2 (src proj L2)
        compiler_params=pltpu.CompilerParams(
            # Both axes sequential: layer 2 consumes the full layer-1 VMEM scratch.
            dimension_semantics=("arbitrary", "arbitrary"),
            vmem_limit_bytes=32 * 1024 * 1024),
    )(*args)


def densify_graph_dst_major(src, dst, edge_attr, N):
    """Dense adjacency/edge_attr in [dst, src] layout with self-loops (fill='mean'),
    matching PyG GATv2Conv.  Done in JAX glue outside the kernel."""
    Ed = edge_attr.shape[1]
    sums = jnp.zeros((N, Ed), jnp.float32).at[dst].add(edge_attr)
    cnts = jnp.zeros((N,), jnp.float32).at[dst].add(1.0)
    loop_attr = sums / jnp.maximum(cnts, 1.0)[:, None]

    adj = jnp.zeros((N, N), jnp.float32).at[dst, src].set(1.0)          # adj[dst, src]
    ea = jnp.zeros((N, N, Ed), jnp.float32).at[dst, src].set(edge_attr)  # ea[dst, src, :]

    idx = jnp.arange(N)
    adj = adj.at[idx, idx].set(1.0)
    ea = ea.at[idx, idx].set(loop_attr)
    return adj, ea


# --------------------------- pure-JAX reference ----------------------------

def gatv2_ref(x, adj_ds, ea_ds, params, H, C):
    wl, bl, wr, br, we, att, bias = params
    N = x.shape[0]
    xl = (x @ wl + bl).reshape(N, H, C)                        # source projections
    xr = (x @ wr + br).reshape(N, H, C)                        # target projections
    ep = (ea_ds.reshape(N * N, -1) @ we).reshape(N, N, H, C)   # [dst, src, H, C]
    z = xr[:, None] + xl[None, :] + ep
    z = jnp.where(z > 0, z, 0.2 * z)
    logits = jnp.einsum('dshc,hc->dsh', z, att)
    logits = jnp.where(adj_ds[:, :, None] > 0, logits, -jnp.inf)
    alpha = jax.nn.softmax(logits, axis=1)                     # softmax over src per (dst, head)
    out = jnp.einsum('dsh,shc->dhc', alpha, xl).reshape(N, H * C)
    return out + bias


def forward_ref(x, adj_ds, ea_ds, p1, p2, w_fc, b_fc, onehot, inv_cnt, heads, hidden):
    h = jax.nn.relu(gatv2_ref(x, adj_ds, ea_ds, p1, heads, hidden))
    h = jax.nn.relu(gatv2_ref(h, adj_ds, ea_ds, p2, 1, hidden))
    pooled = (onehot @ h) * inv_cnt
    return pooled @ w_fc + b_fc


# --------------------------------- main -------------------------------------

if __name__ == "__main__":
    N, F_in, hidden, heads, edge_dim, out_ch, B = 16, 8, 8, 2, 4, 4, 2
    per = N // B
    TD = 8  # dst-tile rows

    key = jax.random.PRNGKey(0)
    k_x, k_ea, k_p = jax.random.split(key, 3)

    # node features
    x = jax.random.normal(k_x, (N, F_in), jnp.float32)

    # deterministic edges: bidirectional ring within each graph + one chord
    src_list, dst_list = [], []
    for g in range(B):
        base = g * per
        for i in range(per):
            a, b = base + i, base + (i + 1) % per
            src_list += [a, b]
            dst_list += [b, a]
        src_list += [base, base + per // 2]
        dst_list += [base + per // 2, base]
    src = jnp.array(src_list, dtype=jnp.int32)
    dst = jnp.array(dst_list, dtype=jnp.int32)
    E = int(src.shape[0])
    edge_attr = jax.random.normal(k_ea, (E, edge_dim), jnp.float32)
    batch = jnp.repeat(jnp.arange(B, dtype=jnp.int32), per)

    # deterministic parameters (synthetic init)
    ks = jax.random.split(k_p, 16)
    g_ = lambda k, s: (jax.random.normal(k, s, jnp.float32) * 0.2)
    HC1 = heads * hidden
    p1 = (g_(ks[0], (F_in, HC1)), g_(ks[1], (1, HC1)),        # wl, bl
          g_(ks[2], (F_in, HC1)), g_(ks[3], (1, HC1)),        # wr, br
          g_(ks[4], (edge_dim, HC1)),                         # we
          g_(ks[5], (heads, hidden)),                         # att
          g_(ks[6], (1, HC1)))                                # bias
    p2 = (g_(ks[7], (HC1, hidden)), g_(ks[8], (1, hidden)),
          g_(ks[9], (HC1, hidden)), g_(ks[10], (1, hidden)),
          g_(ks[11], (edge_dim, hidden)),
          g_(ks[12], (1, hidden)),
          g_(ks[13], (1, hidden)))
    w_fc = g_(ks[14], (hidden, out_ch))
    b_fc = g_(ks[15], (1, out_ch))

    # densify graph (glue): [dst, src] adjacency + edge_attr with mean-filled self-loops
    adj_ds, ea_ds = densify_graph_dst_major(src, dst, edge_attr, N)
    # ship edge attributes to the kernel as bf16 (halves HBM bytes); reference uses the
    # same bf16-rounded values so the comparison is apples-to-apples.
    ea_flat_bf16 = ea_ds.reshape(N * N, edge_dim).astype(jnp.bfloat16)
    ea_ds_ref = ea_flat_bf16.astype(jnp.float32).reshape(N, N, edge_dim)

    # pooling helpers (glue)
    onehot = (batch[None, :] == jnp.arange(B)[:, None]).astype(jnp.float32)  # [B, N]
    inv_cnt = 1.0 / jnp.maximum(onehot.sum(axis=1, keepdims=True), 1.0)      # [B, 1]

    # ---- Pallas forward (single fused, dst-tiled kernel) ----
    out = dynamic_gat_forward(x, adj_ds, ea_flat_bf16, p1, p2, w_fc, b_fc,
                              onehot, inv_cnt, heads=heads, hidden=hidden, td=TD)
    out = jax.block_until_ready(out)

    # ---- reference check ----
    ref = forward_ref(x, adj_ds, ea_ds_ref, p1, p2, w_fc, b_fc, onehot, inv_cnt,
                      heads, hidden)
    ref = jax.block_until_ready(ref)
    assert np.allclose(np.asarray(out), np.asarray(ref), rtol=2e-2, atol=2e-2), (
        f"mismatch: {np.abs(np.asarray(out) - np.asarray(ref)).max()}")

    print("KERNEL_OK")
</pallas_src>

<mosaic_0001>
module attributes {stable_mosaic.version = 11 : i64} {
  func.func @kernel(%arg0: i32, %arg1: i32, %arg2: memref<16x8xf32, #tpu.memory_space<vmem>>, %arg3: memref<8x16xf32, #tpu.memory_space<vmem>>, %arg4: memref<128x4xbf16, #tpu.memory_space<vmem>>, %arg5: memref<8x16xf32, #tpu.memory_space<vmem>>, %arg6: memref<1x16xf32, #tpu.memory_space<vmem>>, %arg7: memref<8x16xf32, #tpu.memory_space<vmem>>, %arg8: memref<1x16xf32, #tpu.memory_space<vmem>>, %arg9: memref<4x16xf32, #tpu.memory_space<vmem>>, %arg10: memref<16x2xf32, #tpu.memory_space<vmem>>, %arg11: memref<1x16xf32, #tpu.memory_space<vmem>>, %arg12: memref<16x8xf32, #tpu.memory_space<vmem>>, %arg13: memref<1x8xf32, #tpu.memory_space<vmem>>, %arg14: memref<16x8xf32, #tpu.memory_space<vmem>>, %arg15: memref<1x8xf32, #tpu.memory_space<vmem>>, %arg16: memref<4x8xf32, #tpu.memory_space<vmem>>, %arg17: memref<8x1xf32, #tpu.memory_space<vmem>>, %arg18: memref<1x8xf32, #tpu.memory_space<vmem>>, %arg19: memref<2x16xf32, #tpu.memory_space<vmem>>, %arg20: memref<2x1xf32, #tpu.memory_space<vmem>>, %arg21: memref<8x4xf32, #tpu.memory_space<vmem>>, %arg22: memref<1x4xf32, #tpu.memory_space<vmem>>, %arg23: memref<2x4xf32, #tpu.memory_space<vmem>>, %arg24: memref<16x16xf32, #tpu.memory_space<vmem>>, %arg25: memref<16x8xf32, #tpu.memory_space<vmem>>, %arg26: memref<16x16xf32, #tpu.memory_space<vmem>>, %arg27: memref<16x8xf32, #tpu.memory_space<vmem>>) attributes {dimension_semantics = [#tpu.dimension_semantics<arbitrary>, #tpu.dimension_semantics<arbitrary>], iteration_bounds = array<i64: 2, 2>, scalar_prefetch = 0 : i64, scratch_operands = 4 : i64, tpu.core_type = #tpu.core_type<tc>, window_params = [{pipeline_mode = #tpu.pipeline_mode<synchronous>, transform_indices = @transform_0, window_bounds = array<i64: 16, 8>}, {transform_indices = @transform_1, window_bounds = array<i64: 8, 16>}, {transform_indices = @transform_2, window_bounds = array<i64: 128, 4>}, {pipeline_mode = #tpu.pipeline_mode<synchronous>, transform_indices = @transform_3, window_bounds = array<i64: 8, 16>}, {pipeline_mode = #tpu.pipeline_mode<synchronous>, transform_indices = @transform_4, window_bounds = array<i64: 1, 16>}, {pipeline_mode = #tpu.pipeline_mode<synchronous>, transform_indices = @transform_5, window_bounds = array<i64: 8, 16>}, {pipeline_mode = #tpu.pipeline_mode<synchronous>, transform_indices = @transform_6, window_bounds = array<i64: 1, 16>}, {pipeline_mode = #tpu.pipeline_mode<synchronous>, transform_indices = @transform_7, window_bounds = array<i64: 4, 16>}, {pipeline_mode = #tpu.pipeline_mode<synchronous>, transform_indices = @transform_8, window_bounds = array<i64: 16, 2>}, {pipeline_mode = #tpu.pipeline_mode<synchronous>, transform_indices = @transform_9, window_bounds = array<i64: 1, 16>}, {pipeline_mode = #tpu.pipeline_mode<synchronous>, transform_indices = @transform_10, window_bounds = array<i64: 16, 8>}, {pipeline_mode = #tpu.pipeline_mode<synchronous>, transform_indices = @transform_11, window_bounds = array<i64: 1, 8>}, {pipeline_mode = #tpu.pipeline_mode<synchronous>, transform_indices = @transform_12, window_bounds = array<i64: 16, 8>}, {pipeline_mode = #tpu.pipeline_mode<synchronous>, transform_indices = @transform_13, window_bounds = array<i64: 1, 8>}, {pipeline_mode = #tpu.pipeline_mode<synchronous>, transform_indices = @transform_14, window_bounds = array<i64: 4, 8>}, {pipeline_mode = #tpu.pipeline_mode<synchronous>, transform_indices = @transform_15, window_bounds = array<i64: 8, 1>}, {pipeline_mode = #tpu.pipeline_mode<synchronous>, transform_indices = @transform_16, window_bounds = array<i64: 1, 8>}, {pipeline_mode = #tpu.pipeline_mode<synchronous>, transform_indices = @transform_17, window_bounds = array<i64: 2, 16>}, {pipeline_mode = #tpu.pipeline_mode<synchronous>, transform_indices = @transform_18, window_bounds = array<i64: 2, 1>}, {pipeline_mode = #tpu.pipeline_mode<synchronous>, transform_indices = @transform_19, window_bounds = array<i64: 8, 4>}, {pipeline_mode = #tpu.pipeline_mode<synchronous>, transform_indices = @transform_20, window_bounds = array<i64: 1, 4>}, {pipeline_mode = #tpu.pipeline_mode<synchronous>, transform_indices = @transform_21, window_bounds = array<i64: 2, 4>}]} {
    %c8_i32 = arith.constant 8 : i32
    %0 = arith.muli %arg1, %c8_i32 : i32
    %1 = tpu.assume_multiple %0, 8 : i32
    %c0 = arith.constant 0 : index
    %c0_0 = arith.constant 0 : index
    %2 = vector.load %arg3[%c0, %c0_0] : memref<8x16xf32, #tpu.memory_space<vmem>>, vector<8x16xf32>
    %cst = arith.constant 0.000000e+00 : f32
    %3 = vector.broadcast %cst : f32 to vector<8x16xf32>
    %4 = arith.cmpf ogt, %2, %3 : vector<8x16xf32>
    %c0_1 = arith.constant 0 : index
    %c0_2 = arith.constant 0 : index
    %5 = vector.load %arg4[%c0_1, %c0_2] : memref<128x4xbf16, #tpu.memory_space<vmem>>, vector<128x4xbf16>
    %6 = arith.extf %5 : vector<128x4xbf16> to vector<128x4xf32>
    %c0_i32 = arith.constant 0 : i32
    %7 = arith.cmpi eq, %arg0, %c0_i32 : i32
    %8 = arith.extui %7 : i1 to i32
    %c0_i32_3 = arith.constant 0 : i32
    %9 = arith.cmpi ne, %8, %c0_i32_3 : i32
    scf.if %9 {
      %c0_i32_5 = arith.constant 0 : i32
      %13 = arith.cmpi eq, %arg1, %c0_i32_5 : i32
      %14 = arith.extui %13 : i1 to i32
      %c0_i32_6 = arith.constant 0 : i32
      %15 = arith.cmpi ne, %14, %c0_i32_6 : i32
      scf.if %15 {
        %c0_40 = arith.constant 0 : index
        %c0_41 = arith.constant 0 : index
        %88 = vector.load %arg2[%c0_40, %c0_41] : memref<16x8xf32, #tpu.memory_space<vmem>>, vector<16x8xf32>
        %c0_42 = arith.constant 0 : index
        %c0_43 = arith.constant 0 : index
        %89 = vector.load %arg5[%c0_42, %c0_43] : memref<8x16xf32, #tpu.memory_space<vmem>>, vector<8x16xf32>
        %cst_44 = arith.constant dense<0.000000e+00> : vector<16x16xf32>
        %90 = tpu.matmul %88, %89, %cst_44 {dimension_numbers = #tpu.dot_dimension_numbers<[1], [0], [0], [1], [0, 0, 1, 1], [], []>} : vector<16x8xf32>, vector<8x16xf32>, vector<16x16xf32> -> vector<16x16xf32>
        %c0_45 = arith.constant 0 : index
        %c0_46 = arith.constant 0 : index
        %91 = vector.load %arg6[%c0_45, %c0_46] : memref<1x16xf32, #tpu.memory_space<vmem>>, vector<1x16xf32>
        %92 = vector.broadcast %91 : vector<1x16xf32> to vector<16x16xf32>
        %93 = arith.addf %90, %92 : vector<16x16xf32>
        %c0_47 = arith.constant 0 : index
        %c0_48 = arith.constant 0 : index
        %94 = vector.load %arg26[%c0_47, %c0_48] : memref<16x16xf32, #tpu.memory_space<vmem>>, vector<16x16xf32>
        tpu.vector_store %arg26[%c0_47, %c0_48], %93 {strides = array<i32>} : memref<16x16xf32, #tpu.memory_space<vmem>>, vector<16x16xf32>,
      } else {
      }
      %c0_7 = arith.constant 0 : index
      %c0_8 = arith.constant 0 : index
      %16 = vector.load %arg26[%c0_7, %c0_8] : memref<16x16xf32, #tpu.memory_space<vmem>>, vector<16x16xf32>
      %17 = arith.index_cast %1 : i32 to index
      %c0_9 = arith.constant 0 : index
      %18 = vector.load %arg2[%17, %c0_9] : memref<16x8xf32, #tpu.memory_space<vmem>>, vector<8x8xf32>
      %c0_10 = arith.constant 0 : index
      %c0_11 = arith.constant 0 : index
      %19 = vector.load %arg7[%c0_10, %c0_11] : memref<8x16xf32, #tpu.memory_space<vmem>>, vector<8x16xf32>
      %cst_12 = arith.constant dense<0.000000e+00> : vector<8x16xf32>
      %20 = tpu.matmul %18, %19, %cst_12 {dimension_numbers = #tpu.dot_dimension_numbers<[1], [0], [0], [1], [0, 0, 1, 1], [], []>} : vector<8x8xf32>, vector<8x16xf32>, vector<8x16xf32> -> vector<8x16xf32>
      %c0_13 = arith.constant 0 : index
      %c0_14 = arith.constant 0 : index
      %21 = vector.load %arg8[%c0_13, %c0_14] : memref<1x16xf32, #tpu.memory_space<vmem>>, vector<1x16xf32>
      %22 = vector.broadcast %21 : vector<1x16xf32> to vector<8x16xf32>
      %23 = arith.addf %20, %22 : vector<8x16xf32>
      %c0_15 = arith.constant 0 : index
      %c0_16 = arith.constant 0 : index
      %24 = vector.load %arg9[%c0_15, %c0_16] : memref<4x16xf32, #tpu.memory_space<vmem>>, vector<4x16xf32>
      %cst_17 = arith.constant dense<0.000000e+00> : vector<128x16xf32>
      %25 = tpu.matmul %6, %24, %cst_17 {dimension_numbers = #tpu.dot_dimension_numbers<[1], [0], [0], [1], [0, 0, 1, 1], [], []>} : vector<128x4xf32>, vector<4x16xf32>, vector<128x16xf32> -> vector<128x16xf32>
      %26 = vector.shape_cast %23 : vector<8x16xf32> to vector<8x1x16xf32>
      %27 = vector.shape_cast %16 : vector<16x16xf32> to vector<1x16x16xf32>
      %28 = vector.broadcast %26 : vector<8x1x16xf32> to vector<8x16x16xf32>
      %29 = vector.broadcast %27 : vector<1x16x16xf32> to vector<8x16x16xf32>
      %30 = arith.addf %28, %29 : vector<8x16x16xf32>
      %31 = vector.shape_cast %25 : vector<128x16xf32> to vector<8x16x16xf32>
      %32 = arith.addf %30, %31 : vector<8x16x16xf32>
      %cst_18 = arith.constant 0.000000e+00 : f32
      %33 = vector.broadcast %cst_18 : f32 to vector<8x16x16xf32>
      %34 = arith.cmpf ogt, %32, %33 : vector<8x16x16xf32>
      %cst_19 = arith.constant 2.000000e-01 : f32
      %35 = vector.broadcast %cst_19 : f32 to vector<8x16x16xf32>
      %36 = arith.mulf %35, %32 : vector<8x16x16xf32>
      %37 = arith.select %34, %32, %36 : vector<8x16x16xi1>, vector<8x16x16xf32>
      %38 = vector.shape_cast %37 : vector<8x16x16xf32> to vector<128x16xf32>
      %c0_20 = arith.constant 0 : index
      %c0_21 = arith.constant 0 : index
      %39 = vector.load %arg10[%c0_20, %c0_21] : memref<16x2xf32, #tpu.memory_space<vmem>>, vector<16x2xf32>
      %cst_22 = arith.constant dense<0.000000e+00> : vector<128x2xf32>
      %40 = tpu.matmul %38, %39, %cst_22 {dimension_numbers = #tpu.dot_dimension_numbers<[1], [0], [0], [1], [0, 0, 1, 1], [], []>} : vector<128x16xf32>, vector<16x2xf32>, vector<128x2xf32> -> vector<128x2xf32>
      %41 = vector.shape_cast %40 : vector<128x2xf32> to vector<8x16x2xf32>
      %42 = vector.extract_strided_slice %41 {offsets = [0, 0, 0], sizes = [8, 16, 1], strides = [1, 1, 1]} : vector<8x16x2xf32> to vector<8x16x1xf32>
      %cst_23 = arith.constant dense<0.000000e+00> : vector<8x16xf32>
      %43 = vector.multi_reduction <add>, %42, %cst_23 [2] : vector<8x16x1xf32> to vector<8x16xf32>
      %cst_24 = arith.constant -1.000000e+30 : f32
      %44 = vector.broadcast %cst_24 : f32 to vector<8x16xf32>
      %45 = arith.select %4, %43, %44 : vector<8x16xi1>, vector<8x16xf32>
      %cst_25 = arith.constant dense<0xFF800000> : vector<8xf32>
      %46 = vector.multi_reduction <maximumf>, %45, %cst_25 [1] : vector<8x16xf32> to vector<8xf32>
      %47 = vector.shape_cast %46 : vector<8xf32> to vector<8x1xf32>
      %48 = vector.broadcast %47 : vector<8x1xf32> to vector<8x16xf32>
      %49 = arith.subf %45, %48 : vector<8x16xf32>
      %50 = math.exp %49 : vector<8x16xf32>
      %cst_26 = arith.constant dense<0.000000e+00> : vector<8xf32>
      %51 = vector.multi_reduction <add>, %50, %cst_26 [1] : vector<8x16xf32> to vector<8xf32>
      %52 = vector.shape_cast %51 : vector<8xf32> to vector<8x1xf32>
      %53 = tpu.reciprocal %52 {approx = true} : vector<8x1xf32> -> vector<8x1xf32>
      %54 = vector.broadcast %53 : vector<8x1xf32> to vector<8x16xf32>
      %55 = arith.mulf %50, %54 : vector<8x16xf32>
      %56 = vector.extract_strided_slice %16 {offsets = [0, 0], sizes = [16, 8], strides = [1, 1]} : vector<16x16xf32> to vector<16x8xf32>
      %cst_27 = arith.constant dense<0.000000e+00> : vector<8x8xf32>
      %57 = tpu.matmul %55, %56, %cst_27 {dimension_numbers = #tpu.dot_dimension_numbers<[1], [0], [0], [1], [0, 0, 1, 1], [], []>} : vector<8x16xf32>, vector<16x8xf32>, vector<8x8xf32> -> vector<8x8xf32>
      %c0_28 = arith.constant 0 : index
      %c0_29 = arith.constant 0 : index
      %58 = vector.load %arg11[%c0_28, %c0_29] : memref<1x16xf32, #tpu.memory_space<vmem>>, vector<1x8xf32>
      %59 = vector.broadcast %58 : vector<1x8xf32> to vector<8x8xf32>
      %60 = arith.addf %57, %59 : vector<8x8xf32>
      %cst_30 = arith.constant 0.000000e+00 : f32
      %61 = vector.broadcast %cst_30 : f32 to vector<8x8xf32>
      %62 = arith.maximumf %60, %61 : vector<8x8xf32>
      %63 = arith.index_cast %1 : i32 to index
      %c0_31 = arith.constant 0 : index
      %64 = vector.load %arg24[%63, %c0_31] : memref<16x16xf32, #tpu.memory_space<vmem>>, vector<8x8xf32>
      tpu.vector_store %arg24[%63, %c0_31], %62 {strides = array<i32>} : memref<16x16xf32, #tpu.memory_space<vmem>>, vector<8x8xf32>,
      %65 = vector.extract_strided_slice %41 {offsets = [0, 0, 1], sizes = [8, 16, 1], strides = [1, 1, 1]} : vector<8x16x2xf32> to vector<8x16x1xf32>
      %cst_32 = arith.constant dense<0.000000e+00> : vector<8x16xf32>
      %66 = vector.multi_reduction <add>, %65, %cst_32 [2] : vector<8x16x1xf32> to vector<8x16xf32>
      %cst_33 = arith.constant -1.000000e+30 : f32
      %67 = vector.broadcast %cst_33 : f32 to vector<8x16xf32>
      %68 = arith.select %4, %66, %67 : vector<8x16xi1>, vector<8x16xf32>
      %cst_34 = arith.constant dense<0xFF800000> : vector<8xf32>
      %69 = vector.multi_reduction <maximumf>, %68, %cst_34 [1] : vector<8x16xf32> to vector<8xf32>
      %70 = vector.shape_cast %69 : vector<8xf32> to vector<8x1xf32>
      %71 = vector.broadcast %70 : vector<8x1xf32> to vector<8x16xf32>
      %72 = arith.subf %68, %71 : vector<8x16xf32>
      %73 = math.exp %72 : vector<8x16xf32>
      %cst_35 = arith.constant dense<0.000000e+00> : vector<8xf32>
      %74 = vector.multi_reduction <add>, %73, %cst_35 [1] : vector<8x16xf32> to vector<8xf32>
      %75 = vector.shape_cast %74 : vector<8xf32> to vector<8x1xf32>
      %76 = tpu.reciprocal %75 {approx = true} : vector<8x1xf32> -> vector<8x1xf32>
      %77 = vector.broadcast %76 : vector<8x1xf32> to vector<8x16xf32>
      %78 = arith.mulf %73, %77 : vector<8x16xf32>
      %79 = vector.extract_strided_slice %16 {offsets = [0, 8], sizes = [16, 8], strides = [1, 1]} : vector<16x16xf32> to vector<16x8xf32>
      %cst_36 = arith.constant dense<0.000000e+00> : vector<8x8xf32>
      %80 = tpu.matmul %78, %79, %cst_36 {dimension_numbers = #tpu.dot_dimension_numbers<[1], [0], [0], [1], [0, 0, 1, 1], [], []>} : vector<8x16xf32>, vector<16x8xf32>, vector<8x8xf32> -> vector<8x8xf32>
      %c0_37 = arith.constant 0 : index
      %c8 = arith.constant 8 : index
      %81 = vector.load %arg11[%c0_37, %c8] : memref<1x16xf32, #tpu.memory_space<vmem>>, vector<1x8xf32>
      %82 = vector.broadcast %81 : vector<1x8xf32> to vector<8x8xf32>
      %83 = arith.addf %80, %82 : vector<8x8xf32>
      %cst_38 = arith.constant 0.000000e+00 : f32
      %84 = vector.broadcast %cst_38 : f32 to vector<8x8xf32>
      %85 = arith.maximumf %83, %84 : vector<8x8xf32>
      %86 = arith.index_cast %1 : i32 to index
      %c8_39 = arith.constant 8 : index
      %87 = vector.load %arg24[%86, %c8_39] : memref<16x16xf32, #tpu.memory_space<vmem>>, vector<8x8xf32>
      tpu.vector_store %arg24[%86, %c8_39], %85 {strides = array<i32>} : memref<16x16xf32, #tpu.memory_space<vmem>>, vector<8x8xf32>,
    } else {
    }
    %c1_i32 = arith.constant 1 : i32
    %10 = arith.cmpi eq, %arg0, %c1_i32 : i32
    %11 = arith.extui %10 : i1 to i32
    %c0_i32_4 = arith.constant 0 : i32
    %12 = arith.cmpi ne, %11, %c0_i32_4 : i32
    scf.if %12 {
      %c0_i32_5 = arith.constant 0 : i32
      %13 = arith.cmpi eq, %arg1, %c0_i32_5 : i32
      %14 = arith.extui %13 : i1 to i32
      %c0_i32_6 = arith.constant 0 : i32
      %15 = arith.cmpi ne, %14, %c0_i32_6 : i32
      scf.if %15 {
        %c0_34 = arith.constant 0 : index
        %c0_35 = arith.constant 0 : index
        %66 = vector.load %arg24[%c0_34, %c0_35] : memref<16x16xf32, #tpu.memory_space<vmem>>, vector<16x16xf32>
        %c0_36 = arith.constant 0 : index
        %c0_37 = arith.constant 0 : index
        %67 = vector.load %arg12[%c0_36, %c0_37] : memref<16x8xf32, #tpu.memory_space<vmem>>, vector<16x8xf32>
        %cst_38 = arith.constant dense<0.000000e+00> : vector<16x8xf32>
        %68 = tpu.matmul %66, %67, %cst_38 {dimension_numbers = #tpu.dot_dimension_numbers<[1], [0], [0], [1], [0, 0, 1, 1], [], []>} : vector<16x16xf32>, vector<16x8xf32>, vector<16x8xf32> -> vector<16x8xf32>
        %c0_39 = arith.constant 0 : index
        %c0_40 = arith.constant 0 : index
        %69 = vector.load %arg13[%c0_39, %c0_40] : memref<1x8xf32, #tpu.memory_space<vmem>>, vector<1x8xf32>
        %70 = vector.broadcast %69 : vector<1x8xf32> to vector<16x8xf32>
        %71 = arith.addf %68, %70 : vector<16x8xf32>
        %c0_41 = arith.constant 0 : index
        %c0_42 = arith.constant 0 : index
        %72 = vector.load %arg27[%c0_41, %c0_42] : memref<16x8xf32, #tpu.memory_space<vmem>>, vector<16x8xf32>
        tpu.vector_store %arg27[%c0_41, %c0_42], %71 {strides = array<i32>} : memref<16x8xf32, #tpu.memory_space<vmem>>, vector<16x8xf32>,
      } else {
      }
      %c0_7 = arith.constant 0 : index
      %c0_8 = arith.constant 0 : index
      %16 = vector.load %arg27[%c0_7, %c0_8] : memref<16x8xf32, #tpu.memory_space<vmem>>, vector<16x8xf32>
      %17 = arith.index_cast %1 : i32 to index
      %c0_9 = arith.constant 0 : index
      %18 = vector.load %arg24[%17, %c0_9] : memref<16x16xf32, #tpu.memory_space<vmem>>, vector<8x16xf32>
      %c0_10 = arith.constant 0 : index
      %c0_11 = arith.constant 0 : index
      %19 = vector.load %arg14[%c0_10, %c0_11] : memref<16x8xf32, #tpu.memory_space<vmem>>, vector<16x8xf32>
      %cst_12 = arith.constant dense<0.000000e+00> : vector<8x8xf32>
      %20 = tpu.matmul %18, %19, %cst_12 {dimension_numbers = #tpu.dot_dimension_numbers<[1], [0], [0], [1], [0, 0, 1, 1], [], []>} : vector<8x16xf32>, vector<16x8xf32>, vector<8x8xf32> -> vector<8x8xf32>
      %c0_13 = arith.constant 0 : index
      %c0_14 = arith.constant 0 : index
      %21 = vector.load %arg15[%c0_13, %c0_14] : memref<1x8xf32, #tpu.memory_space<vmem>>, vector<1x8xf32>
      %22 = vector.broadcast %21 : vector<1x8xf32> to vector<8x8xf32>
      %23 = arith.addf %20, %22 : vector<8x8xf32>
      %c0_15 = arith.constant 0 : index
      %c0_16 = arith.constant 0 : index
      %24 = vector.load %arg16[%c0_15, %c0_16] : memref<4x8xf32, #tpu.memory_space<vmem>>, vector<4x8xf32>
      %cst_17 = arith.constant dense<0.000000e+00> : vector<128x8xf32>
      %25 = tpu.matmul %6, %24, %cst_17 {dimension_numbers = #tpu.dot_dimension_numbers<[1], [0], [0], [1], [0, 0, 1, 1], [], []>} : vector<128x4xf32>, vector<4x8xf32>, vector<128x8xf32> -> vector<128x8xf32>
      %26 = vector.shape_cast %23 : vector<8x8xf32> to vector<8x1x8xf32>
      %27 = vector.shape_cast %16 : vector<16x8xf32> to vector<1x16x8xf32>
      %28 = vector.broadcast %26 : vector<8x1x8xf32> to vector<8x16x8xf32>
      %29 = vector.broadcast %27 : vector<1x16x8xf32> to vector<8x16x8xf32>
      %30 = arith.addf %28, %29 : vector<8x16x8xf32>
      %31 = vector.shape_cast %25 : vector<128x8xf32> to vector<8x16x8xf32>
      %32 = arith.addf %30, %31 : vector<8x16x8xf32>
      %cst_18 = arith.constant 0.000000e+00 : f32
      %33 = vector.broadcast %cst_18 : f32 to vector<8x16x8xf32>
      %34 = arith.cmpf ogt, %32, %33 : vector<8x16x8xf32>
      %cst_19 = arith.constant 2.000000e-01 : f32
      %35 = vector.broadcast %cst_19 : f32 to vector<8x16x8xf32>
      %36 = arith.mulf %35, %32 : vector<8x16x8xf32>
      %37 = arith.select %34, %32, %36 : vector<8x16x8xi1>, vector<8x16x8xf32>
      %38 = vector.shape_cast %37 : vector<8x16x8xf32> to vector<128x8xf32>
      %c0_20 = arith.constant 0 : index
      %c0_21 = arith.constant 0 : index
      %39 = vector.load %arg17[%c0_20, %c0_21] : memref<8x1xf32, #tpu.memory_space<vmem>>, vector<8x1xf32>
      %cst_22 = arith.constant dense<0.000000e+00> : vector<128x1xf32>
      %40 = tpu.matmul %38, %39, %cst_22 {dimension_numbers = #tpu.dot_dimension_numbers<[1], [0], [0], [1], [0, 0, 1, 1], [], []>} : vector<128x8xf32>, vector<8x1xf32>, vector<128x1xf32> -> vector<128x1xf32>
      %41 = vector.shape_cast %40 : vector<128x1xf32> to vector<8x16x1xf32>
      %cst_23 = arith.constant dense<0.000000e+00> : vector<8x16xf32>
      %42 = vector.multi_reduction <add>, %41, %cst_23 [2] : vector<8x16x1xf32> to vector<8x16xf32>
      %cst_24 = arith.constant -1.000000e+30 : f32
      %43 = vector.broadcast %cst_24 : f32 to vector<8x16xf32>
      %44 = arith.select %4, %42, %43 : vector<8x16xi1>, vector<8x16xf32>
      %cst_25 = arith.constant dense<0xFF800000> : vector<8xf32>
      %45 = vector.multi_reduction <maximumf>, %44, %cst_25 [1] : vector<8x16xf32> to vector<8xf32>
      %46 = vector.shape_cast %45 : vector<8xf32> to vector<8x1xf32>
      %47 = vector.broadcast %46 : vector<8x1xf32> to vector<8x16xf32>
      %48 = arith.subf %44, %47 : vector<8x16xf32>
      %49 = math.exp %48 : vector<8x16xf32>
      %cst_26 = arith.constant dense<0.000000e+00> : vector<8xf32>
      %50 = vector.multi_reduction <add>, %49, %cst_26 [1] : vector<8x16xf32> to vector<8xf32>
      %51 = vector.shape_cast %50 : vector<8xf32> to vector<8x1xf32>
      %52 = tpu.reciprocal %51 {approx = true} : vector<8x1xf32> -> vector<8x1xf32>
      %53 = vector.broadcast %52 : vector<8x1xf32> to vector<8x16xf32>
      %54 = arith.mulf %49, %53 : vector<8x16xf32>
      %cst_27 = arith.constant dense<0.000000e+00> : vector<8x8xf32>
      %55 = tpu.matmul %54, %16, %cst_27 {dimension_numbers = #tpu.dot_dimension_numbers<[1], [0], [0], [1], [0, 0, 1, 1], [], []>} : vector<8x16xf32>, vector<16x8xf32>, vector<8x8xf32> -> vector<8x8xf32>
      %c0_28 = arith.constant 0 : index
      %c0_29 = arith.constant 0 : index
      %56 = vector.load %arg18[%c0_28, %c0_29] : memref<1x8xf32, #tpu.memory_space<vmem>>, vector<1x8xf32>
      %57 = vector.broadcast %56 : vector<1x8xf32> to vector<8x8xf32>
      %58 = arith.addf %55, %57 : vector<8x8xf32>
      %cst_30 = arith.constant 0.000000e+00 : f32
      %59 = vector.broadcast %cst_30 : f32 to vector<8x8xf32>
      %60 = arith.maximumf %58, %59 : vector<8x8xf32>
      %61 = arith.index_cast %1 : i32 to index
      %c0_31 = arith.constant 0 : index
      %62 = vector.load %arg25[%61, %c0_31] : memref<16x8xf32, #tpu.memory_space<vmem>>, vector<8x8xf32>
      tpu.vector_store %arg25[%61, %c0_31], %60 {strides = array<i32>} : memref<16x8xf32, #tpu.memory_space<vmem>>, vector<8x8xf32>,
      %c1_i32_32 = arith.constant 1 : i32
      %63 = arith.cmpi eq, %arg1, %c1_i32_32 : i32
      %64 = arith.extui %63 : i1 to i32
      %c0_i32_33 = arith.constant 0 : i32
      %65 = arith.cmpi ne, %64, %c0_i32_33 : i32
      scf.if %65 {
        %c0_34 = arith.constant 0 : index
        %c0_35 = arith.constant 0 : index
        %66 = vector.load %arg19[%c0_34, %c0_35] : memref<2x16xf32, #tpu.memory_space<vmem>>, vector<2x16xf32>
        %c0_36 = arith.constant 0 : index
        %c0_37 = arith.constant 0 : index
        %67 = vector.load %arg25[%c0_36, %c0_37] : memref<16x8xf32, #tpu.memory_space<vmem>>, vector<16x8xf32>
        %cst_38 = arith.constant dense<0.000000e+00> : vector<2x8xf32>
        %68 = tpu.matmul %66, %67, %cst_38 {dimension_numbers = #tpu.dot_dimension_numbers<[1], [0], [0], [1], [0, 0, 1, 1], [], []>} : vector<2x16xf32>, vector<16x8xf32>, vector<2x8xf32> -> vector<2x8xf32>
        %c0_39 = arith.constant 0 : index
        %c0_40 = arith.constant 0 : index
        %69 = vector.load %arg20[%c0_39, %c0_40] : memref<2x1xf32, #tpu.memory_space<vmem>>, vector<2x1xf32>
        %70 = vector.broadcast %69 : vector<2x1xf32> to vector<2x8xf32>
        %71 = arith.mulf %68, %70 : vector<2x8xf32>
        %c0_41 = arith.constant 0 : index
        %c0_42 = arith.constant 0 : index
        %72 = vector.load %arg21[%c0_41, %c0_42] : memref<8x4xf32, #tpu.memory_space<vmem>>, vector<8x4xf32>
        %cst_43 = arith.constant dense<0.000000e+00> : vector<2x4xf32>
        %73 = tpu.matmul %71, %72, %cst_43 {dimension_numbers = #tpu.dot_dimension_numbers<[1], [0], [0], [1], [0, 0, 1, 1], [], []>} : vector<2x8xf32>, vector<8x4xf32>, vector<2x4xf32> -> vector<2x4xf32>
        %c0_44 = arith.constant 0 : index
        %c0_45 = arith.constant 0 : index
        %74 = vector.load %arg22[%c0_44, %c0_45] : memref<1x4xf32, #tpu.memory_space<vmem>>, vector<1x4xf32>
        %75 = vector.broadcast %74 : vector<1x4xf32> to vector<2x4xf32>
        %76 = arith.addf %73, %75 : vector<2x4xf32>
        %c0_46 = arith.constant 0 : index
        %c0_47 = arith.constant 0 : index
        %77 = vector.load %arg23[%c0_46, %c0_47] : memref<2x4xf32, #tpu.memory_space<vmem>>, vector<2x4xf32>
        tpu.vector_store %arg23[%c0_46, %c0_47], %76 {strides = array<i32>} : memref<2x4xf32, #tpu.memory_space<vmem>>, vector<2x4xf32>,
      } else {
      }
    } else {
    }
    return
  }
  func.func @transform_0(%arg0: i32, %arg1: i32) -> (i32, i32) {
    %c0_i32 = arith.constant 0 : i32
    %c0_i32_0 = arith.constant 0 : i32
    %c0_i32_1 = arith.constant 0 : i32
    return %c0_i32, %c0_i32_0 : i32, i32
  }
  func.func @transform_1(%arg0: i32, %arg1: i32) -> (i32, i32) {
    %c0_i32 = arith.constant 0 : i32
    %c0_i32_0 = arith.constant 0 : i32
    return %arg1, %c0_i32 : i32, i32
  }
  func.func @transform_2(%arg0: i32, %arg1: i32) -> (i32, i32) {
    %c0_i32 = arith.constant 0 : i32
    %c0_i32_0 = arith.constant 0 : i32
    return %arg1, %c0_i32 : i32, i32
  }
  func.func @transform_3(%arg0: i32, %arg1: i32) -> (i32, i32) {
    %c0_i32 = arith.constant 0 : i32
    %c0_i32_0 = arith.constant 0 : i32
    %c0_i32_1 = arith.constant 0 : i32
    return %c0_i32, %c0_i32_0 : i32, i32
  }
  func.func @transform_4(%arg0: i32, %arg1: i32) -> (i32, i32) {
    %c0_i32 = arith.constant 0 : i32
    %c0_i32_0 = arith.constant 0 : i32
    %c0_i32_1 = arith.constant 0 : i32
    return %c0_i32, %c0_i32_0 : i32, i32
  }
  func.func @transform_5(%arg0: i32, %arg1: i32) -> (i32, i32) {
    %c0_i32 = arith.constant 0 : i32
    %c0_i32_0 = arith.constant 0 : i32
    %c0_i32_1 = arith.constant 0 : i32
    return %c0_i32, %c0_i32_0 : i32, i32
  }
  func.func @transform_6(%arg0: i32, %arg1: i32) -> (i32, i32) {
    %c0_i32 = arith.constant 0 : i32
    %c0_i32_0 = arith.constant 0 : i32
    %c0_i32_1 = arith.constant 0 : i32
    return %c0_i32, %c0_i32_0 : i32, i32
  }
  func.func @transform_7(%arg0: i32, %arg1: i32) -> (i32, i32) {
    %c0_i32 = arith.constant 0 : i32
    %c0_i32_0 = arith.constant 0 : i32
    %c0_i32_1 = arith.constant 0 : i32
    return %c0_i32, %c0_i32_0 : i32, i32
  }
  func.func @transform_8(%arg0: i32, %arg1: i32) -> (i32, i32) {
    %c0_i32 = arith.constant 0 : i32
    %c0_i32_0 = arith.constant 0 : i32
    %c0_i32_1 = arith.constant 0 : i32
    return %c0_i32, %c0_i32_0 : i32, i32
  }
  func.func @transform_9(%arg0: i32, %arg1: i32) -> (i32, i32) {
    %c0_i32 = arith.constant 0 : i32
    %c0_i32_0 = arith.constant 0 : i32
    %c0_i32_1 = arith.constant 0 : i32
    return %c0_i32, %c0_i32_0 : i32, i32
  }
  func.func @transform_10(%arg0: i32, %arg1: i32) -> (i32, i32) {
    %c0_i32 = arith.constant 0 : i32
    %c0_i32_0 = arith.constant 0 : i32
    %c0_i32_1 = arith.constant 0 : i32
    return %c0_i32, %c0_i32_0 : i32, i32
  }
  func.func @transform_11(%arg0: i32, %arg1: i32) -> (i32, i32) {
    %c0_i32 = arith.constant 0 : i32
    %c0_i32_0 = arith.constant 0 : i32
    %c0_i32_1 = arith.constant 0 : i32
    return %c0_i32, %c0_i32_0 : i32, i32
  }
  func.func @transform_12(%arg0: i32, %arg1: i32) -> (i32, i32) {
    %c0_i32 = arith.constant 0 : i32
    %c0_i32_0 = arith.constant 0 : i32
    %c0_i32_1 = arith.constant 0 : i32
    return %c0_i32, %c0_i32_0 : i32, i32
  }
  func.func @transform_13(%arg0: i32, %arg1: i32) -> (i32, i32) {
    %c0_i32 = arith.constant 0 : i32
    %c0_i32_0 = arith.constant 0 : i32
    %c0_i32_1 = arith.constant 0 : i32
    return %c0_i32, %c0_i32_0 : i32, i32
  }
  func.func @transform_14(%arg0: i32, %arg1: i32) -> (i32, i32) {
    %c0_i32 = arith.constant 0 : i32
    %c0_i32_0 = arith.constant 0 : i32
    %c0_i32_1 = arith.constant 0 : i32
    return %c0_i32, %c0_i32_0 : i32, i32
  }
  func.func @transform_15(%arg0: i32, %arg1: i32) -> (i32, i32) {
    %c0_i32 = arith.constant 0 : i32
    %c0_i32_0 = arith.constant 0 : i32
    %c0_i32_1 = arith.constant 0 : i32
    return %c0_i32, %c0_i32_0 : i32, i32
  }
  func.func @transform_16(%arg0: i32, %arg1: i32) -> (i32, i32) {
    %c0_i32 = arith.constant 0 : i32
    %c0_i32_0 = arith.constant 0 : i32
    %c0_i32_1 = arith.constant 0 : i32
    return %c0_i32, %c0_i32_0 : i32, i32
  }
  func.func @transform_17(%arg0: i32, %arg1: i32) -> (i32, i32) {
    %c0_i32 = arith.constant 0 : i32
    %c0_i32_0 = arith.constant 0 : i32
    %c0_i32_1 = arith.constant 0 : i32
    return %c0_i32, %c0_i32_0 : i32, i32
  }
  func.func @transform_18(%arg0: i32, %arg1: i32) -> (i32, i32) {
    %c0_i32 = arith.constant 0 : i32
    %c0_i32_0 = arith.constant 0 : i32
    %c0_i32_1 = arith.constant 0 : i32
    return %c0_i32, %c0_i32_0 : i32, i32
  }
  func.func @transform_19(%arg0: i32, %arg1: i32) -> (i32, i32) {
    %c0_i32 = arith.constant 0 : i32
    %c0_i32_0 = arith.constant 0 : i32
    %c0_i32_1 = arith.constant 0 : i32
    return %c0_i32, %c0_i32_0 : i32, i32
  }
  func.func @transform_20(%arg0: i32, %arg1: i32) -> (i32, i32) {
    %c0_i32 = arith.constant 0 : i32
    %c0_i32_0 = arith.constant 0 : i32
    %c0_i32_1 = arith.constant 0 : i32
    return %c0_i32, %c0_i32_0 : i32, i32
  }
  func.func @transform_21(%arg0: i32, %arg1: i32) -> (i32, i32) {
    %c0_i32 = arith.constant 0 : i32
    %c0_i32_0 = arith.constant 0 : i32
    %c0_i32_1 = arith.constant 0 : i32
    return %c0_i32, %c0_i32_0 : i32, i32
  }
}

</mosaic_0001>

<llo_original>
// kernel: tpu_custom_call.1
$region0: #{tpu_custom_call.1}
  #allocation0 [shape = 'u32[]', space=smem, size = 0x4, offset = 0x4, fixed_abs, tag = 'smem constant byte address 0x4 - core index']
  #allocation1 [shape = 'u32[144,128]{1,0:T(1,128)}', space=vmem, size = 0x12000, scoped, tag = 'internal scratch']
  #allocation2 [shape = 'f32[16,16]{1,0:T(8,128)}', space=vmem, size = 0x2000, scoped, tag = 'scratch operand']
  #allocation3 [shape = 'f32[16,8]{1,0:T(8,128)}', space=vmem, size = 0x2000, scoped, tag = 'scratch operand']
  #allocation4 [shape = 'f32[16,16]{1,0:T(8,128)}', space=vmem, size = 0x2000, scoped, tag = 'scratch operand']
  #allocation5 [shape = 'f32[16,8]{1,0:T(8,128)}', space=vmem, size = 0x2000, scoped, tag = 'scratch operand']
  %s0 = inlined_call_operand.vmem [shape: f32[16,8], index: 0, kind: input, shape index: {}]
  %s1 = inlined_call_operand.vmem [shape: f32[16,16], index: 1, kind: input, shape index: {}]
  %s2 = inlined_call_operand.vmem [shape: bf16[256,4], index: 2, kind: input, shape index: {}]
  %s3 = inlined_call_operand.vmem [shape: f32[8,16], index: 3, kind: input, shape index: {}]
  %s4 = inlined_call_operand.vmem [shape: f32[1,16], index: 4, kind: input, shape index: {}]
  %s5 = inlined_call_operand.vmem [shape: f32[8,16], index: 5, kind: input, shape index: {}]
  %s6 = inlined_call_operand.vmem [shape: f32[1,16], index: 6, kind: input, shape index: {}]
  %s7 = inlined_call_operand.vmem [shape: f32[4,16], index: 7, kind: input, shape index: {}]
  %s8 = inlined_call_operand.vmem [shape: f32[16,2], index: 8, kind: input, shape index: {}]
  %s9 = inlined_call_operand.vmem [shape: f32[1,16], index: 9, kind: input, shape index: {}]
  %s10 = inlined_call_operand.vmem [shape: f32[16,8], index: 10, kind: input, shape index: {}]
  %s11 = inlined_call_operand.vmem [shape: f32[1,8], index: 11, kind: input, shape index: {}]
  %s12 = inlined_call_operand.vmem [shape: f32[16,8], index: 12, kind: input, shape index: {}]
  %s13 = inlined_call_operand.vmem [shape: f32[1,8], index: 13, kind: input, shape index: {}]
  %s14 = inlined_call_operand.vmem [shape: f32[4,8], index: 14, kind: input, shape index: {}]
  %s15 = inlined_call_operand.vmem [shape: f32[8,1], index: 15, kind: input, shape index: {}]
  %s16 = inlined_call_operand.vmem [shape: f32[1,8], index: 16, kind: input, shape index: {}]
  %s17 = inlined_call_operand.vmem [shape: f32[2,16], index: 17, kind: input, shape index: {}]
  %s18 = inlined_call_operand.vmem [shape: f32[2,1], index: 18, kind: input, shape index: {}]
  %s19 = inlined_call_operand.vmem [shape: f32[8,4], index: 19, kind: input, shape index: {}]
  %s20 = inlined_call_operand.vmem [shape: f32[1,4], index: 20, kind: input, shape index: {}]
  %s21 = inlined_call_operand.hbm [shape: f32[2,4], index: 21, kind: output, shape index: {}]
  %s22 = sld [smem:[#allocation0]]
  $region137: #{tpu_custom_call.1} parent=0
    _
  %s24 = ssub.s32 1, %s22
  %s25 = scalar_select 0, %s24, %s22
  $region1: #{tpu_custom_call.1} parent=0
    #allocation6 [shape = 'u8[1024]{0}', space=vmem, size = 0x400, scoped, tag = 'output window, operand 0, single buffered']
    #allocation7 [shape = 's32[2]{0}', space=sflag, size = 0x8, scoped, tag = 'scoped memory for tpu_custom_call.1']
    %26 = vsyncpa [#allocation7], 0
    loop: start=0, step=1, limit=6
    $region2: #{tpu_custom_call.1} parent=1 // loop_pre_header
      _
    $region3: #{tpu_custom_call.1} parent=1 // loop_header
      %s28 = sphi 0, %s32
      %p29 = scmp.ge.s32.totalorder %s28, 6
      %s35 = sphi 0, %s47
      %s36 = sphi 0, %s43
      %s37 = sphi 0, %s35
      %s38 = sphi 0, %s36
      %s39 = sphi 0, %s37
      %s40 = sphi 0, %s38
      %s48 = sphi 0, %s48
      %s50 = sphi 0, %s48
      %s51 = sphi 0, %s50
      %s65 = sphi 0, %s51
      %s71 = sphi 0, %s73
      %s74 = sphi 0, %s71
      %s75 = sphi 0, %s74
      %s91 = sphi 0, %s75
      %s97 = sphi 0, %s99
      %s100 = sphi 0, %s97
      %s101 = sphi 0, %s100
      %s117 = sphi 0, %s101
      %s121 = sphi 0, %s121
      %s123 = sphi 0, %s121
      %s124 = sphi 0, %s123
      %s138 = sphi 0, %s124
      %s142 = sphi 0, %s142
      %s144 = sphi 0, %s142
      %s145 = sphi 0, %s144
      %s159 = sphi 0, %s145
      %s163 = sphi 0, %s163
      %s165 = sphi 0, %s163
      %s166 = sphi 0, %s165
      %s180 = sphi 0, %s166
      %s184 = sphi 0, %s184
      %s186 = sphi 0, %s184
      %s187 = sphi 0, %s186
      %s201 = sphi 0, %s187
      %s205 = sphi 0, %s205
      %s207 = sphi 0, %s205
      %s208 = sphi 0, %s207
      %s222 = sphi 0, %s208
      %s226 = sphi 0, %s226
      %s228 = sphi 0, %s226
      %s229 = sphi 0, %s228
      %s243 = sphi 0, %s229
      %s247 = sphi 0, %s247
      %s249 = sphi 0, %s247
      %s250 = sphi 0, %s249
      %s264 = sphi 0, %s250
      %s268 = sphi 0, %s268
      %s270 = sphi 0, %s268
      %s271 = sphi 0, %s270
      %s285 = sphi 0, %s271
      %s289 = sphi 0, %s289
      %s291 = sphi 0, %s289
      %s292 = sphi 0, %s291
      %s306 = sphi 0, %s292
      %s310 = sphi 0, %s310
      %s312 = sphi 0, %s310
      %s313 = sphi 0, %s312
      %s327 = sphi 0, %s313
      %s331 = sphi 0, %s331
      %s333 = sphi 0, %s331
      %s334 = sphi 0, %s333
      %s348 = sphi 0, %s334
      %s352 = sphi 0, %s352
      %s354 = sphi 0, %s352
      %s355 = sphi 0, %s354
      %s369 = sphi 0, %s355
      %s373 = sphi 0, %s373
      %s375 = sphi 0, %s373
      %s376 = sphi 0, %s375
      %s390 = sphi 0, %s376
      %s394 = sphi 0, %s394
      %s396 = sphi 0, %s394
      %s397 = sphi 0, %s396
      %s411 = sphi 0, %s397
      %s415 = sphi 0, %s415
      %s417 = sphi 0, %s415
      %s418 = sphi 0, %s417
      %s432 = sphi 0, %s418
      %s436 = sphi 0, %s436
      %s438 = sphi 0, %s436
      %s439 = sphi 0, %s438
      %s453 = sphi 0, %s439
      %s457 = sphi 0, %s457
      %s459 = sphi 0, %s457
      %s460 = sphi 0, %s459
      %s474 = sphi 0, %s460
      %s478 = sphi 0, %s478
      %s480 = sphi 0, %s478
      %s481 = sphi 0, %s480
      %s495 = sphi 0, %s481
      %s499 = sphi 0, %s499
      %s501 = sphi 0, %s499
      %s502 = sphi 0, %s501
      %s516 = sphi 0, %s502
    $region4: #{tpu_custom_call.1} parent=1 // loop_header_branch
      %31 = sbr.rel (%p29) target = $region8
    $region5: #{tpu_custom_call.1} parent=1 // loop_body
      %s33 = ssub.s32 %s28, 1
      %s34 = ssub.s32 %s28, 2
      %s41 = sadd.s32 1, %s36
      %p42 = scmp.ge.s32.totalorder %s41, 2
      %s43 = scalar_select %p42, 0, %s41
      %s44 = sadd.s32 1, %s35
      %s45 = scalar_select %p42, %s44, %s35
      %p46 = scmp.ge.s32.totalorder %s45, 2
      %s47 = scalar_select %p46, 0, %s45
      %s49 = sadd.s32 %s48, 1
      %p52 = scmp.eq.s32.totalorder %s28, 3
      %p53 = scmp.ne.s32.totalorder %s48, %s50
      %p54 = scmp.eq.s32.totalorder %s28, 0
      %p55 = por %p53, %p54
      %p56 = scmp.ne.s32.totalorder %s48, %s50
      %p57 = scmp.eq.s32.totalorder %s33, 3
      %p58 = por %p56, %p57
      %p59 = scmp.ne.s32.totalorder %s50, %s51
      %p60 = scmp.eq.s32.totalorder %s33, 0
      %p61 = por %p59, %p60
      %p62 = scmp.ne.s32.totalorder %s50, %s51
      %p63 = scmp.eq.s32.totalorder %s34, 3
      %p64 = por %p62, %p63
      %p66 = scmp.ne.s32.totalorder %s51, %s65
      %p67 = scmp.eq.s32.totalorder %s34, 0
      %p68 = por %p66, %p67
      %s69 = ssub.s32 %s36, %s43
      %p70 = scmp.eq.s32.totalorder %s69, 0
      %s72 = sadd.s32 %s71, 1
      %s73 = scalar_select %p70, %s71, %s72
      %p76 = pneg %p70
      %p77 = scmp.eq.s32.totalorder %s28, 3
      %p78 = por %p76, %p77
      %p79 = scmp.ne.s32.totalorder %s71, %s74
      %p80 = scmp.eq.s32.totalorder %s28, 0
      %p81 = por %p79, %p80
      %p82 = scmp.ne.s32.totalorder %s71, %s74
      %p83 = scmp.eq.s32.totalorder %s33, 3
      %p84 = por %p82, %p83
      %p85 = scmp.ne.s32.totalorder %s74, %s75
      %p86 = scmp.eq.s32.totalorder %s33, 0
      %p87 = por %p85, %p86
      %p88 = scmp.ne.s32.totalorder %s74, %s75
      %p89 = scmp.eq.s32.totalorder %s34, 3
      %p90 = por %p88, %p89
      %p92 = scmp.ne.s32.totalorder %s75, %s91
      %p93 = scmp.eq.s32.totalorder %s34, 0
      %p94 = por %p92, %p93
      %s95 = ssub.s32 %s36, %s43
      %p96 = scmp.eq.s32.totalorder %s95, 0
      %s98 = sadd.s32 %s97, 1
      %s99 = scalar_select %p96, %s97, %s98
      %p102 = pneg %p96
      %p103 = scmp.eq.s32.totalorder %s28, 3
      %p104 = por %p102, %p103
      %p105 = scmp.ne.s32.totalorder %s97, %s100
      %p106 = scmp.eq.s32.totalorder %s28, 0
      %p107 = por %p105, %p106
      %p108 = scmp.ne.s32.totalorder %s97, %s100
      %p109 = scmp.eq.s32.totalorder %s33, 3
      %p110 = por %p108, %p109
      %p111 = scmp.ne.s32.totalorder %s100, %s101
      %p112 = scmp.eq.s32.totalorder %s33, 0
      %p113 = por %p111, %p112
      %p114 = scmp.ne.s32.totalorder %s100, %s101
      %p115 = scmp.eq.s32.totalorder %s34, 3
      %p116 = por %p114, %p115
      %p118 = scmp.ne.s32.totalorder %s101, %s117
      %p119 = scmp.eq.s32.totalorder %s34, 0
      %p120 = por %p118, %p119
      %s122 = sadd.s32 %s121, 1
      %p125 = scmp.eq.s32.totalorder %s28, 3
      %p126 = scmp.ne.s32.totalorder %s121, %s123
      %p127 = scmp.eq.s32.totalorder %s28, 0
      %p128 = por %p126, %p127
      %p129 = scmp.ne.s32.totalorder %s121, %s123
      %p130 = scmp.eq.s32.totalorder %s33, 3
      %p131 = por %p129, %p130
      %p132 = scmp.ne.s32.totalorder %s123, %s124
      %p133 = scmp.eq.s32.totalorder %s33, 0
      %p134 = por %p132, %p133
      %p135 = scmp.ne.s32.totalorder %s123, %s124
      %p136 = scmp.eq.s32.totalorder %s34, 3
      %p137 = por %p135, %p136
      %p139 = scmp.ne.s32.totalorder %s124, %s138
      %p140 = scmp.eq.s32.totalorder %s34, 0
      %p141 = por %p139, %p140
      %s143 = sadd.s32 %s142, 1
      %p146 = scmp.eq.s32.totalorder %s28, 3
      %p147 = scmp.ne.s32.totalorder %s142, %s144
      %p148 = scmp.eq.s32.totalorder %s28, 0
      %p149 = por %p147, %p148
      %p150 = scmp.ne.s32.totalorder %s142, %s144
      %p151 = scmp.eq.s32.totalorder %s33, 3
      %p152 = por %p150, %p151
      %p153 = scmp.ne.s32.totalorder %s144, %s145
      %p154 = scmp.eq.s32.totalorder %s33, 0
      %p155 = por %p153, %p154
      %p156 = scmp.ne.s32.totalorder %s144, %s145
      %p157 = scmp.eq.s32.totalorder %s34, 3
      %p158 = por %p156, %p157
      %p160 = scmp.ne.s32.totalorder %s145, %s159
      %p161 = scmp.eq.s32.totalorder %s34, 0
      %p162 = por %p160, %p161
      %s164 = sadd.s32 %s163, 1
      %p167 = scmp.eq.s32.totalorder %s28, 3
      %p168 = scmp.ne.s32.totalorder %s163, %s165
      %p169 = scmp.eq.s32.totalorder %s28, 0
      %p170 = por %p168, %p169
      %p171 = scmp.ne.s32.totalorder %s163, %s165
      %p172 = scmp.eq.s32.totalorder %s33, 3
      %p173 = por %p171, %p172
      %p174 = scmp.ne.s32.totalorder %s165, %s166
      %p175 = scmp.eq.s32.totalorder %s33, 0
      %p176 = por %p174, %p175
      %p177 = scmp.ne.s32.totalorder %s165, %s166
      %p178 = scmp.eq.s32.totalorder %s34, 3
      %p179 = por %p177, %p178
      %p181 = scmp.ne.s32.totalorder %s166, %s180
      %p182 = scmp.eq.s32.totalorder %s34, 0
      %p183 = por %p181, %p182
      %s185 = sadd.s32 %s184, 1
      %p188 = scmp.eq.s32.totalorder %s28, 3
      %p189 = scmp.ne.s32.totalorder %s184, %s186
      %p190 = scmp.eq.s32.totalorder %s28, 0
      %p191 = por %p189, %p190
      %p192 = scmp.ne.s32.totalorder %s184, %s186
      %p193 = scmp.eq.s32.totalorder %s33, 3
      %p194 = por %p192, %p193
      %p195 = scmp.ne.s32.totalorder %s186, %s187
      %p196 = scmp.eq.s32.totalorder %s33, 0
      %p197 = por %p195, %p196
      %p198 = scmp.ne.s32.totalorder %s186, %s187
      %p199 = scmp.eq.s32.totalorder %s34, 3
      %p200 = por %p198, %p199
      %p202 = scmp.ne.s32.totalorder %s187, %s201
      %p203 = scmp.eq.s32.totalorder %s34, 0
      %p204 = por %p202, %p203
      %s206 = sadd.s32 %s205, 1
      %p209 = scmp.eq.s32.totalorder %s28, 3
      %p210 = scmp.ne.s32.totalorder %s205, %s207
      %p211 = scmp.eq.s32.totalorder %s28, 0
      %p212 = por %p210, %p211
      %p213 = scmp.ne.s32.totalorder %s205, %s207
      %p214 = scmp.eq.s32.totalorder %s33, 3
      %p215 = por %p213, %p214
      %p216 = scmp.ne.s32.totalorder %s207, %s208
      %p217 = scmp.eq.s32.totalorder %s33, 0
      %p218 = por %p216, %p217
      %p219 = scmp.ne.s32.totalorder %s207, %s208
      %p220 = scmp.eq.s32.totalorder %s34, 3
      %p221 = por %p219, %p220
      %p223 = scmp.ne.s32.totalorder %s208, %s222
      %p224 = scmp.eq.s32.totalorder %s34, 0
      %p225 = por %p223, %p224
      %s227 = sadd.s32 %s226, 1
      %p230 = scmp.eq.s32.totalorder %s28, 3
      %p231 = scmp.ne.s32.totalorder %s226, %s228
      %p232 = scmp.eq.s32.totalorder %s28, 0
      %p233 = por %p231, %p232
      %p234 = scmp.ne.s32.totalorder %s226, %s228
      %p235 = scmp.eq.s32.totalorder %s33, 3
      %p236 = por %p234, %p235
      %p237 = scmp.ne.s32.totalorder %s228, %s229
      %p238 = scmp.eq.s32.totalorder %s33, 0
      %p239 = por %p237, %p238
      %p240 = scmp.ne.s32.totalorder %s228, %s229
      %p241 = scmp.eq.s32.totalorder %s34, 3
      %p242 = por %p240, %p241
      %p244 = scmp.ne.s32.totalorder %s229, %s243
      %p245 = scmp.eq.s32.totalorder %s34, 0
      %p246 = por %p244, %p245
      %s248 = sadd.s32 %s247, 1
      %p251 = scmp.eq.s32.totalorder %s28, 3
      %p252 = scmp.ne.s32.totalorder %s247, %s249
      %p253 = scmp.eq.s32.totalorder %s28, 0
      %p254 = por %p252, %p253
      %p255 = scmp.ne.s32.totalorder %s247, %s249
      %p256 = scmp.eq.s32.totalorder %s33, 3
      %p257 = por %p255, %p256
      %p258 = scmp.ne.s32.totalorder %s249, %s250
      %p259 = scmp.eq.s32.totalorder %s33, 0
      %p260 = por %p258, %p259
      %p261 = scmp.ne.s32.totalorder %s249, %s250
      %p262 = scmp.eq.s32.totalorder %s34, 3
      %p263 = por %p261, %p262
      %p265 = scmp.ne.s32.totalorder %s250, %s264
      %p266 = scmp.eq.s32.totalorder %s34, 0
      %p267 = por %p265, %p266
      %s269 = sadd.s32 %s268, 1
      %p272 = scmp.eq.s32.totalorder %s28, 3
      %p273 = scmp.ne.s32.totalorder %s268, %s270
      %p274 = scmp.eq.s32.totalorder %s28, 0
      %p275 = por %p273, %p274
      %p276 = scmp.ne.s32.totalorder %s268, %s270
      %p277 = scmp.eq.s32.totalorder %s33, 3
      %p278 = por %p276, %p277
      %p279 = scmp.ne.s32.totalorder %s270, %s271
      %p280 = scmp.eq.s32.totalorder %s33, 0
      %p281 = por %p279, %p280
      %p282 = scmp.ne.s32.totalorder %s270, %s271
      %p283 = scmp.eq.s32.totalorder %s34, 3
      %p284 = por %p282, %p283
      %p286 = scmp.ne.s32.totalorder %s271, %s285
      %p287 = scmp.eq.s32.totalorder %s34, 0
      %p288 = por %p286, %p287
      %s290 = sadd.s32 %s289, 1
      %p293 = scmp.eq.s32.totalorder %s28, 3
      %p294 = scmp.ne.s32.totalorder %s289, %s291
      %p295 = scmp.eq.s32.totalorder %s28, 0
      %p296 = por %p294, %p295
      %p297 = scmp.ne.s32.totalorder %s289, %s291
      %p298 = scmp.eq.s32.totalorder %s33, 3
      %p299 = por %p297, %p298
      %p300 = scmp.ne.s32.totalorder %s291, %s292
      %p301 = scmp.eq.s32.totalorder %s33, 0
      %p302 = por %p300, %p301
      %p303 = scmp.ne.s32.totalorder %s291, %s292
      %p304 = scmp.eq.s32.totalorder %s34, 3
      %p305 = por %p303, %p304
      %p307 = scmp.ne.s32.totalorder %s292, %s306
      %p308 = scmp.eq.s32.totalorder %s34, 0
      %p309 = por %p307, %p308
      %s311 = sadd.s32 %s310, 1
      %p314 = scmp.eq.s32.totalorder %s28, 3
      %p315 = scmp.ne.s32.totalorder %s310, %s312
      %p316 = scmp.eq.s32.totalorder %s28, 0
      %p317 = por %p315, %p316
      %p318 = scmp.ne.s32.totalorder %s310, %s312
      %p319 = scmp.eq.s32.totalorder %s33, 3
      %p320 = por %p318, %p319
      %p321 = scmp.ne.s32.totalorder %s312, %s313
      %p322 = scmp.eq.s32.totalorder %s33, 0
      %p323 = por %p321, %p322
      %p324 = scmp.ne.s32.totalorder %s312, %s313
      %p325 = scmp.eq.s32.totalorder %s34, 3
      %p326 = por %p324, %p325
      %p328 = scmp.ne.s32.totalorder %s313, %s327
      %p329 = scmp.eq.s32.totalorder %s34, 0
      %p330 = por %p328, %p329
      %s332 = sadd.s32 %s331, 1
      %p335 = scmp.eq.s32.totalorder %s28, 3
      %p336 = scmp.ne.s32.totalorder %s331, %s333
      %p337 = scmp.eq.s32.totalorder %s28, 0
      %p338 = por %p336, %p337
      %p339 = scmp.ne.s32.totalorder %s331, %s333
      %p340 = scmp.eq.s32.totalorder %s33, 3
      %p341 = por %p339, %p340
      %p342 = scmp.ne.s32.totalorder %s333, %s334
      %p343 = scmp.eq.s32.totalorder %s33, 0
      %p344 = por %p342, %p343
      %p345 = scmp.ne.s32.totalorder %s333, %s334
      %p346 = scmp.eq.s32.totalorder %s34, 3
      %p347 = por %p345, %p346
      %p349 = scmp.ne.s32.totalorder %s334, %s348
      %p350 = scmp.eq.s32.totalorder %s34, 0
      %p351 = por %p349, %p350
      %s353 = sadd.s32 %s352, 1
      %p356 = scmp.eq.s32.totalorder %s28, 3
      %p357 = scmp.ne.s32.totalorder %s352, %s354
      %p358 = scmp.eq.s32.totalorder %s28, 0
      %p359 = por %p357, %p358
      %p360 = scmp.ne.s32.totalorder %s352, %s354
      %p361 = scmp.eq.s32.totalorder %s33, 3
      %p362 = por %p360, %p361
      %p363 = scmp.ne.s32.totalorder %s354, %s355
      %p364 = scmp.eq.s32.totalorder %s33, 0
      %p365 = por %p363, %p364
      %p366 = scmp.ne.s32.totalorder %s354, %s355
      %p367 = scmp.eq.s32.totalorder %s34, 3
      %p368 = por %p366, %p367
      %p370 = scmp.ne.s32.totalorder %s355, %s369
      %p371 = scmp.eq.s32.totalorder %s34, 0
      %p372 = por %p370, %p371
      %s374 = sadd.s32 %s373, 1
      %p377 = scmp.eq.s32.totalorder %s28, 3
      %p378 = scmp.ne.s32.totalorder %s373, %s375
      %p379 = scmp.eq.s32.totalorder %s28, 0
      %p380 = por %p378, %p379
      %p381 = scmp.ne.s32.totalorder %s373, %s375
      %p382 = scmp.eq.s32.totalorder %s33, 3
      %p383 = por %p381, %p382
      %p384 = scmp.ne.s32.totalorder %s375, %s376
      %p385 = scmp.eq.s32.totalorder %s33, 0
      %p386 = por %p384, %p385
      %p387 = scmp.ne.s32.totalorder %s375, %s376
      %p388 = scmp.eq.s32.totalorder %s34, 3
      %p389 = por %p387, %p388
      %p391 = scmp.ne.s32.totalorder %s376, %s390
      %p392 = scmp.eq.s32.totalorder %s34, 0
      %p393 = por %p391, %p392
      %s395 = sadd.s32 %s394, 1
      %p398 = scmp.eq.s32.totalorder %s28, 3
      %p399 = scmp.ne.s32.totalorder %s394, %s396
      %p400 = scmp.eq.s32.totalorder %s28, 0
      %p401 = por %p399, %p400
      %p402 = scmp.ne.s32.totalorder %s394, %s396
      %p403 = scmp.eq.s32.totalorder %s33, 3
      %p404 = por %p402, %p403
      %p405 = scmp.ne.s32.totalorder %s396, %s397
      %p406 = scmp.eq.s32.totalorder %s33, 0
      %p407 = por %p405, %p406
      %p408 = scmp.ne.s32.totalorder %s396, %s397
      %p409 = scmp.eq.s32.totalorder %s34, 3
      %p410 = por %p408, %p409
      %p412 = scmp.ne.s32.totalorder %s397, %s411
      %p413 = scmp.eq.s32.totalorder %s34, 0
      %p414 = por %p412, %p413
      %s416 = sadd.s32 %s415, 1
      %p419 = scmp.eq.s32.totalorder %s28, 3
      %p420 = scmp.ne.s32.totalorder %s415, %s417
      %p421 = scmp.eq.s32.totalorder %s28, 0
      %p422 = por %p420, %p421
      %p423 = scmp.ne.s32.totalorder %s415, %s417
      %p424 = scmp.eq.s32.totalorder %s33, 3
      %p425 = por %p423, %p424
      %p426 = scmp.ne.s32.totalorder %s417, %s418
      %p427 = scmp.eq.s32.totalorder %s33, 0
      %p428 = por %p426, %p427
      %p429 = scmp.ne.s32.totalorder %s417, %s418
      %p430 = scmp.eq.s32.totalorder %s34, 3
      %p431 = por %p429, %p430
      %p433 = scmp.ne.s32.totalorder %s418, %s432
      %p434 = scmp.eq.s32.totalorder %s34, 0
      %p435 = por %p433, %p434
      %s437 = sadd.s32 %s436, 1
      %p440 = scmp.eq.s32.totalorder %s28, 3
      %p441 = scmp.ne.s32.totalorder %s436, %s438
      %p442 = scmp.eq.s32.totalorder %s28, 0
      %p443 = por %p441, %p442
      %p444 = scmp.ne.s32.totalorder %s436, %s438
      %p445 = scmp.eq.s32.totalorder %s33, 3
      %p446 = por %p444, %p445
      %p447 = scmp.ne.s32.totalorder %s438, %s439
      %p448 = scmp.eq.s32.totalorder %s33, 0
      %p449 = por %p447, %p448
      %p450 = scmp.ne.s32.totalorder %s438, %s439
      %p451 = scmp.eq.s32.totalorder %s34, 3
      %p452 = por %p450, %p451
      %p454 = scmp.ne.s32.totalorder %s439, %s453
      %p455 = scmp.eq.s32.totalorder %s34, 0
      %p456 = por %p454, %p455
      %s458 = sadd.s32 %s457, 1
      %p461 = scmp.eq.s32.totalorder %s28, 3
      %p462 = scmp.ne.s32.totalorder %s457, %s459
      %p463 = scmp.eq.s32.totalorder %s28, 0
      %p464 = por %p462, %p463
      %p465 = scmp.ne.s32.totalorder %s457, %s459
      %p466 = scmp.eq.s32.totalorder %s33, 3
      %p467 = por %p465, %p466
      %p468 = scmp.ne.s32.totalorder %s459, %s460
      %p469 = scmp.eq.s32.totalorder %s33, 0
      %p470 = por %p468, %p469
      %p471 = scmp.ne.s32.totalorder %s459, %s460
      %p472 = scmp.eq.s32.totalorder %s34, 3
      %p473 = por %p471, %p472
      %p475 = scmp.ne.s32.totalorder %s460, %s474
      %p476 = scmp.eq.s32.totalorder %s34, 0
      %p477 = por %p475, %p476
      %s479 = sadd.s32 %s478, 1
      %p482 = scmp.eq.s32.totalorder %s28, 3
      %p483 = scmp.ne.s32.totalorder %s478, %s480
      %p484 = scmp.eq.s32.totalorder %s28, 0
      %p485 = por %p483, %p484
      %p486 = scmp.ne.s32.totalorder %s478, %s480
      %p487 = scmp.eq.s32.totalorder %s33, 3
      %p488 = por %p486, %p487
      %p489 = scmp.ne.s32.totalorder %s480, %s481
      %p490 = scmp.eq.s32.totalorder %s33, 0
      %p491 = por %p489, %p490
      %p492 = scmp.ne.s32.totalorder %s480, %s481
      %p493 = scmp.eq.s32.totalorder %s34, 3
      %p494 = por %p492, %p493
      %p496 = scmp.ne.s32.totalorder %s481, %s495
      %p497 = scmp.eq.s32.totalorder %s34, 0
      %p498 = por %p496, %p497
      %s500 = sadd.s32 %s499, 1
      %p503 = scmp.eq.s32.totalorder %s28, 3
      %p504 = scmp.ne.s32.totalorder %s499, %s501
      %p505 = scmp.eq.s32.totalorder %s28, 0
      %p506 = por %p504, %p505
      %p507 = scmp.ne.s32.totalorder %s499, %s501
      %p508 = scmp.eq.s32.totalorder %s33, 3
      %p509 = por %p507, %p508
      %p510 = scmp.ne.s32.totalorder %s501, %s502
      %p511 = scmp.eq.s32.totalorder %s33, 0
      %p512 = por %p510, %p511
      %p513 = scmp.ne.s32.totalorder %s501, %s502
      %p514 = scmp.eq.s32.totalorder %s34, 3
      %p515 = por %p513, %p514
      %p517 = scmp.ne.s32.totalorder %s502, %s516
      %p518 = scmp.eq.s32.totalorder %s34, 0
      %p519 = por %p517, %p518
      %p520 = scmp.le.s32.totalorder 1, %s28
      %p521 = scmp.lt.s32.totalorder %s28, 5
      %p522 = pnand %p520, %p521
      %p523 = pneg %p522
      // Predicated region
      $region9: #{tpu_custom_call.1} parent=5 // pred_check
        _
      $region10: #{tpu_custom_call.1} parent=5 // pred_check_branch
        %525 = sbr.rel (%p522) target = $region12
      $region11: #{tpu_custom_call.1} parent=5 // pred_region
        %s526 = ssub.s32 %s28, 1
        // Predicated region
        $region13: #{tpu_custom_call.1} parent=11 // pred_check
          %p527 = pneg %p61
        $region14: #{tpu_custom_call.1} parent=11 // pred_check_branch
          %529 = sbr.rel (%p527) target = $region16
        $region15: #{tpu_custom_call.1} parent=11 // pred_region
          _
        $region16: #{tpu_custom_call.1} parent=11 // pred_fallthru
          _
        // Predicated region
        $region17: #{tpu_custom_call.1} parent=11 // pred_check
          %p530 = pneg %p134
        $region18: #{tpu_custom_call.1} parent=11 // pred_check_branch
          %532 = sbr.rel (%p530) target = $region20
        $region19: #{tpu_custom_call.1} parent=11 // pred_region
          _
        $region20: #{tpu_custom_call.1} parent=11 // pred_fallthru
          _
        // Predicated region
        $region21: #{tpu_custom_call.1} parent=11 // pred_check
          %p533 = pneg %p155
        $region22: #{tpu_custom_call.1} parent=11 // pred_check_branch
          %535 = sbr.rel (%p533) target = $region24
        $region23: #{tpu_custom_call.1} parent=11 // pred_region
          _
        $region24: #{tpu_custom_call.1} parent=11 // pred_fallthru
          _
        // Predicated region
        $region25: #{tpu_custom_call.1} parent=11 // pred_check
          %p536 = pneg %p176
        $region26: #{tpu_custom_call.1} parent=11 // pred_check_branch
          %538 = sbr.rel (%p536) target = $region28
        $region27: #{tpu_custom_call.1} parent=11 // pred_region
          _
        $region28: #{tpu_custom_call.1} parent=11 // pred_fallthru
          _
        // Predicated region
        $region29: #{tpu_custom_call.1} parent=11 // pred_check
          %p539 = pneg %p197
        $region30: #{tpu_custom_call.1} parent=11 // pred_check_branch
          %541 = sbr.rel (%p539) target = $region32
        $region31: #{tpu_custom_call.1} parent=11 // pred_region
          _
        $region32: #{tpu_custom_call.1} parent=11 // pred_fallthru
          _
        // Predicated region
        $region33: #{tpu_custom_call.1} parent=11 // pred_check
          %p542 = pneg %p218
        $region34: #{tpu_custom_call.1} parent=11 // pred_check_branch
          %544 = sbr.rel (%p542) target = $region36
        $region35: #{tpu_custom_call.1} parent=11 // pred_region
          _
        $region36: #{tpu_custom_call.1} parent=11 // pred_fallthru
          _
        // Predicated region
        $region37: #{tpu_custom_call.1} parent=11 // pred_check
          %p545 = pneg %p239
        $region38: #{tpu_custom_call.1} parent=11 // pred_check_branch
          %547 = sbr.rel (%p545) target = $region40
        $region39: #{tpu_custom_call.1} parent=11 // pred_region
          _
        $region40: #{tpu_custom_call.1} parent=11 // pred_fallthru
          _
        // Predicated region
        $region41: #{tpu_custom_call.1} parent=11 // pred_check
          %p548 = pneg %p260
        $region42: #{tpu_custom_call.1} parent=11 // pred_check_branch
          %550 = sbr.rel (%p548) target = $region44
        $region43: #{tpu_custom_call.1} parent=11 // pred_region
          _
        $region44: #{tpu_custom_call.1} parent=11 // pred_fallthru
          _
        // Predicated region
        $region45: #{tpu_custom_call.1} parent=11 // pred_check
          %p551 = pneg %p281
        $region46: #{tpu_custom_call.1} parent=11 // pred_check_branch
          %553 = sbr.rel (%p551) target = $region48
        $region47: #{tpu_custom_call.1} parent=11 // pred_region
          _
        $region48: #{tpu_custom_call.1} parent=11 // pred_fallthru
          _
        // Predicated region
        $region49: #{tpu_custom_call.1} parent=11 // pred_check
          %p554 = pneg %p302
        $region50: #{tpu_custom_call.1} parent=11 // pred_check_branch
          %556 = sbr.rel (%p554) target = $region52
        $region51: #{tpu_custom_call.1} parent=11 // pred_region
          _
        $region52: #{tpu_custom_call.1} parent=11 // pred_fallthru
          _
        // Predicated region
        $region53: #{tpu_custom_call.1} parent=11 // pred_check
          %p557 = pneg %p323
        $region54: #{tpu_custom_call.1} parent=11 // pred_check_branch
          %559 = sbr.rel (%p557) target = $region56
        $region55: #{tpu_custom_call.1} parent=11 // pred_region
          _
        $region56: #{tpu_custom_call.1} parent=11 // pred_fallthru
          _
        // Predicated region
        $region57: #{tpu_custom_call.1} parent=11 // pred_check
          %p560 = pneg %p344
        $region58: #{tpu_custom_call.1} parent=11 // pred_check_branch
          %562 = sbr.rel (%p560) target = $region60
        $region59: #{tpu_custom_call.1} parent=11 // pred_region
          _
        $region60: #{tpu_custom_call.1} parent=11 // pred_fallthru
          _
        // Predicated region
        $region61: #{tpu_custom_call.1} parent=11 // pred_check
          %p563 = pneg %p365
        $region62: #{tpu_custom_call.1} parent=11 // pred_check_branch
          %565 = sbr.rel (%p563) target = $region64
        $region63: #{tpu_custom_call.1} parent=11 // pred_region
          _
        $region64: #{tpu_custom_call.1} parent=11 // pred_fallthru
          _
        // Predicated region
        $region65: #{tpu_custom_call.1} parent=11 // pred_check
          %p566 = pneg %p386
        $region66: #{tpu_custom_call.1} parent=11 // pred_check_branch
          %568 = sbr.rel (%p566) target = $region68
        $region67: #{tpu_custom_call.1} parent=11 // pred_region
          _
        $region68: #{tpu_custom_call.1} parent=11 // pred_fallthru
          _
        // Predicated region
        $region69: #{tpu_custom_call.1} parent=11 // pred_check
          %p569 = pneg %p407
        $region70: #{tpu_custom_call.1} parent=11 // pred_check_branch
          %571 = sbr.rel (%p569) target = $region72
        $region71: #{tpu_custom_call.1} parent=11 // pred_region
          _
        $region72: #{tpu_custom_call.1} parent=11 // pred_fallthru
          _
        // Predicated region
        $region73: #{tpu_custom_call.1} parent=11 // pred_check
          %p572 = pneg %p428
        $region74: #{tpu_custom_call.1} parent=11 // pred_check_branch
          %574 = sbr.rel (%p572) target = $region76
        $region75: #{tpu_custom_call.1} parent=11 // pred_region
          _
        $region76: #{tpu_custom_call.1} parent=11 // pred_fallthru
          _
        // Predicated region
        $region77: #{tpu_custom_call.1} parent=11 // pred_check
          %p575 = pneg %p449
        $region78: #{tpu_custom_call.1} parent=11 // pred_check_branch
          %577 = sbr.rel (%p575) target = $region80
        $region79: #{tpu_custom_call.1} parent=11 // pred_region
          _
        $region80: #{tpu_custom_call.1} parent=11 // pred_fallthru
          _
        // Predicated region
        $region81: #{tpu_custom_call.1} parent=11 // pred_check
          %p578 = pneg %p470
        $region82: #{tpu_custom_call.1} parent=11 // pred_check_branch
          %580 = sbr.rel (%p578) target = $region84
        $region83: #{tpu_custom_call.1} parent=11 // pred_region
          _
        $region84: #{tpu_custom_call.1} parent=11 // pred_fallthru
          _
        // Predicated region
        $region85: #{tpu_custom_call.1} parent=11 // pred_check
          %p581 = pneg %p491
        $region86: #{tpu_custom_call.1} parent=11 // pred_check_branch
          %583 = sbr.rel (%p581) target = $region88
        $region87: #{tpu_custom_call.1} parent=11 // pred_region
          _
        $region88: #{tpu_custom_call.1} parent=11 // pred_fallthru
          _
      $region12: #{tpu_custom_call.1} parent=5 // pred_fallthru
        _
      %p584 = scmp.lt.s32.totalorder %s28, 4
      // Predicated region
      $region89: #{tpu_custom_call.1} parent=5 // pred_check
        %p585 = pneg %p584
      $region90: #{tpu_custom_call.1} parent=5 // pred_check_branch
        %587 = sbr.rel (%p585) target = $region92
      $region91: #{tpu_custom_call.1} parent=5 // pred_region
        // Predicated region
        $region93: #{tpu_custom_call.1} parent=91 // pred_check
          %p588 = pneg %p81
        $region94: #{tpu_custom_call.1} parent=91 // pred_check_branch
          %590 = sbr.rel (%p588) target = $region96
        $region95: #{tpu_custom_call.1} parent=91 // pred_region
          %p591 = scmp.lt.s32.totalorder %s36, 1
          %s592 = scalar_select %p591, %s36, 1
          %s593 = smul.addr %s592, 8
          %s594 = scalar_lea.vmem %s1, %s593
        $region96: #{tpu_custom_call.1} parent=91 // pred_fallthru
          _
        // Predicated region
        $region97: #{tpu_custom_call.1} parent=91 // pred_check
          %p595 = pneg %p107
        $region98: #{tpu_custom_call.1} parent=91 // pred_check_branch
          %597 = sbr.rel (%p595) target = $region100
        $region99: #{tpu_custom_call.1} parent=91 // pred_region
          %s598 = smul.u32 16, %s36
          %p599 = scmp.lt.s32.totalorder %s598, 31
          %s600 = scalar_select %p599, %s598, 31
          %s601 = smul.addr %s600, 4
          %s602 = scalar_lea.vmem %s2, %s601
          %s603 = smul.u32 16, %s36
        $region100: #{tpu_custom_call.1} parent=91 // pred_fallthru
          _
      $region92: #{tpu_custom_call.1} parent=5 // pred_fallthru
        _
      %p604 = scmp.le.s32.totalorder 1, %s28
      %p605 = scmp.lt.s32.totalorder %s28, 5
      %p606 = pnand %p604, %p605
      %p607 = pneg %p606
      // Predicated region
      $region101: #{tpu_custom_call.1} parent=5 // pred_check
        _
      $region102: #{tpu_custom_call.1} parent=5 // pred_check_branch
        %609 = sbr.rel (%p606) target = $region104
      $region103: #{tpu_custom_call.1} parent=5 // pred_region
        %s610 = ssub.s32 %s28, 1
        %p611 = pneg %p61
        %p612 = pneg %p58
        %p613 = scmp.lt.s32.totalorder %s38, 1
        %s614 = scalar_select %p613, %s38, 1
        %s615 = smul.addr %s614, 8
        %s616 = scalar_lea.vmem %s1, %s615
        %p617 = pneg %p87
        %p618 = pneg %p84
        %s619 = smul.u32 16, %s38
        %p620 = scmp.lt.s32.totalorder %s619, 31
        %s621 = scalar_select %p620, %s619, 31
        %s622 = smul.addr %s621, 4
        %s623 = scalar_lea.vmem %s2, %s622
        %p624 = pneg %p113
        %p625 = pneg %p110
        %p626 = pneg %p134
        %p627 = pneg %p131
        %p628 = pneg %p155
        %p629 = pneg %p152
        %p630 = pneg %p176
        %p631 = pneg %p173
        %p632 = pneg %p197
        %p633 = pneg %p194
        %p634 = pneg %p218
        %p635 = pneg %p215
        %p636 = pneg %p239
        %p637 = pneg %p236
        %p638 = pneg %p260
        %p639 = pneg %p257
        %p640 = pneg %p281
        %p641 = pneg %p278
        %p642 = pneg %p302
        %p643 = pneg %p299
        %p644 = pneg %p323
        %p645 = pneg %p320
        %p646 = pneg %p344
        %p647 = pneg %p341
        %p648 = pneg %p365
        %p649 = pneg %p362
        %p650 = pneg %p386
        %p651 = pneg %p383
        %p652 = pneg %p407
        %p653 = pneg %p404
        %p654 = pneg %p428
        %p655 = pneg %p425
        %p656 = pneg %p449
        %p657 = pneg %p446
        %p658 = pneg %p470
        %p659 = pneg %p467
        %p660 = pneg %p491
        %p661 = pneg %p488
        %p662 = pneg %p512
        %p663 = pneg %p509
        %p664 = scmp.lt.s32.totalorder %s38, 1
        %s665 = scalar_select %p664, %s38, 1
        %s666 = smul.addr %s665, 8
        %s667 = scalar_lea.vmem %s1, %s666
        %s668 = smul.u32 16, %s38
        %p669 = scmp.lt.s32.totalorder %s668, 31
        %s670 = scalar_select %p669, %s668, 31
        %s671 = smul.addr %s670, 4
        %s672 = scalar_lea.vmem %s2, %s671
        %s673 = smul.u32 16, %s38
        %s674 = smul.u32 %s38, 8
        %v675 = vld [vmem:[%s667] sm:$0xff]
        %vm676 = vcmp.gt.f32.partialorder %v675, 0.0
        %v677 = vld [vmem:[%s672] sm:$0xf]
        %v678 = vld [vmem:[%s672 + $0x4] sm:$0xf]
        %v679 = vld [vmem:[%s672 + $0x8] sm:$0xf]
        %v680 = vld [vmem:[%s672 + $0xc] sm:$0xf]
        %v681 = vld [vmem:[%s672 + $0x10] sm:$0xf]
        %v682 = vld [vmem:[%s672 + $0x14] sm:$0xf]
        %v683 = vld [vmem:[%s672 + $0x18] sm:$0xf]
        %v684 = vld [vmem:[%s672 + $0x1c] sm:$0xf]
        %v685 = vld [vmem:[%s672 + $0x20] sm:$0xf]
        %v686 = vld [vmem:[%s672 + $0x24] sm:$0xf]
        %v687 = vld [vmem:[%s672 + $0x28] sm:$0xf]
        %v688 = vld [vmem:[%s672 + $0x2c] sm:$0xf]
        %v689 = vld [vmem:[%s672 + $0x30] sm:$0xf]
        %v690 = vld [vmem:[%s672 + $0x34] sm:$0xf]
        %v691 = vld [vmem:[%s672 + $0x38] sm:$0xf]
        %v692 = vld [vmem:[%s672 + $0x3c] sm:$0xf]
        %v693 = vunpack.c.l.bf16 %v677
        %v694 = vunpack.c.l.bf16 %v678
        %v695 = vunpack.c.l.bf16 %v679
        %v696 = vunpack.c.l.bf16 %v680
        %v697 = vunpack.c.l.bf16 %v681
        %v698 = vunpack.c.l.bf16 %v682
        %v699 = vunpack.c.l.bf16 %v683
        %v700 = vunpack.c.l.bf16 %v684
        %v701 = vunpack.c.l.bf16 %v685
        %v702 = vunpack.c.l.bf16 %v686
        %v703 = vunpack.c.l.bf16 %v687
        %v704 = vunpack.c.l.bf16 %v688
        %v705 = vunpack.c.l.bf16 %v689
        %v706 = vunpack.c.l.bf16 %v690
        %v707 = vunpack.c.l.bf16 %v691
        %v708 = vunpack.c.l.bf16 %v692
        %p709 = scmp.eq.s32.totalorder %s37, 0
        // Predicated region
        $region105: #{tpu_custom_call.1} parent=103 // pred_check
          %p710 = pneg %p709
        $region106: #{tpu_custom_call.1} parent=103 // pred_check_branch
          %712 = sbr.rel (%p710) target = $region108
        $region107: #{tpu_custom_call.1} parent=103 // pred_region
          %p713 = scmp.eq.s32.totalorder %s38, 0
          // Predicated region
          $region109: #{tpu_custom_call.1} parent=107 // pred_check
            %p714 = pneg %p713
          $region110: #{tpu_custom_call.1} parent=107 // pred_check_branch
            %716 = sbr.rel (%p714) target = $region112
          $region111: #{tpu_custom_call.1} parent=107 // pred_region
            %v717 = vld [vmem:[%s0] sm:$0xff]
            %v718 = vld [vmem:[%s0 + $0x8] sm:$0xff]
            %v719 = vld [vmem:[%s3] sm:$0xff]
            %v720 = vld [vmem:[%s4] sm:$0x1]
            %v722 = vlaneseq
            %v723 = vshrl.u32 %v722, 7
            %v724 = vsub.s32 0, %v723
            %v725 = vrot.slane %v720, %v724
            %vm727 = vcmask 64512
            %v729 = vsel %vm727, %v717, 0
            %v732 = vsel %vm727, %v718, 0
            %734 = vmatprep.subr.mxu0 0.0
            %735 = vmatpush1.msra.mxu0 0.0
            %736 = vmatprep.subr.mxu0 0.0
            %737 = vmatpush1.msra.mxu0 0.0
            %738 = vmatprep.subr.mxu0 0.0
            %739 = vmatpush1.msra.mxu0 0.0
            %740 = vmatprep.subr.mxu0 0.0
            %741 = vmatpush1.msra.mxu0 0.0
            %742 = vmatprep.subr.mxu0 0.0
            %743 = vmatpush1.msra.mxu0 0.0
            %744 = vmatprep.subr.mxu0 0.0
            %745 = vmatpush1.msra.mxu0 0.0
            %746 = vmatprep.subr.mxu0 0.0
            %747 = vmatpush1.msra.mxu0 0.0
            %748 = vmatprep.subr.mxu0 0.0
            %749 = vmatpush1.msra.mxu0 0.0
            %750 = vmatprep.subr.mxu0 0.0
            %751 = vmatpush1.msra.mxu0 0.0
            %752 = vmatprep.subr.mxu0 0.0
            %753 = vmatpush1.msra.mxu0 0.0
            %754 = vmatprep.subr.mxu0 0.0
            %755 = vmatpush1.msra.mxu0 0.0
            %756 = vmatprep.subr.mxu0 0.0
            %757 = vmatpush1.msra.mxu0 0.0
            %758 = vmatprep.subr.mxu0 0.0
            %759 = vmatpush1.msra.mxu0 0.0
            %760 = vmatprep.subr.mxu0 0.0
            %761 = vmatpush1.msra.mxu0 0.0
            %762 = vmatprep.subr.mxu0 0.0
            %763 = vmatpush1.msra.mxu0 0.0
            %764 = vmatprep.subr.mxu0 0.0
            %765 = vmatpush1.msra.mxu0 %v719
            %766 = vmatprep.subr.mxu0 0.0
            %767 = vmatpush2.msra.mxu0 0.0
            %768 = vmatprep.subr.mxu0 0.0
            %769 = vmatpush2.msra.mxu0 0.0
            %770 = vmatprep.subr.mxu0 0.0
            %771 = vmatpush2.msra.mxu0 0.0
            %772 = vmatprep.subr.mxu0 0.0
            %773 = vmatpush2.msra.mxu0 0.0
            %774 = vmatprep.subr.mxu0 0.0
            %775 = vmatpush2.msra.mxu0 0.0
            %776 = vmatprep.subr.mxu0 0.0
            %777 = vmatpush2.msra.mxu0 0.0
            %778 = vmatprep.subr.mxu0 0.0
            %779 = vmatpush2.msra.mxu0 0.0
            %780 = vmatprep.subr.mxu0 0.0
            %781 = vmatpush2.msra.mxu0 0.0
            %782 = vmatprep.subr.mxu0 0.0
            %783 = vmatpush2.msra.mxu0 0.0
            %784 = vmatprep.subr.mxu0 0.0
            %785 = vmatpush2.msra.mxu0 0.0
            %786 = vmatprep.subr.mxu0 0.0
            %787 = vmatpush2.msra.mxu0 0.0
            %788 = vmatprep.subr.mxu0 0.0
            %789 = vmatpush2.msra.mxu0 0.0
            %790 = vmatprep.subr.mxu0 0.0
            %791 = vmatpush2.msra.mxu0 0.0
            %792 = vmatprep.subr.mxu0 0.0
            %793 = vmatpush2.msra.mxu0 0.0
            %794 = vmatprep.subr.mxu0 0.0
            %795 = vmatpush2.msra.mxu0 0.0
            %796 = vmatprep.subr.mxu0 0.0
            %797 = vmatpush2.msra.mxu0 0.0
            %798 = vmatprep.mubr.f32.mxu0 0.0
            %799 = vmatmul.mubr.f32.gmra.mxu0 %v729
            %v800 = vpop.f32.mrf.mxu0
            %v801 = vadd.f32 %v725, %v800
            %v802 = vpop.f32.mrf.mxu0
            %803 = vmatprep.mubr.f32.mxu0 0.0
            %804 = vmatmul.mubr.f32.gmra.mxu0 %v732
            %v805 = vpop.f32.mrf.mxu0
            %v806 = vadd.f32 %v725, %v805
            %v807 = vpop.f32.mrf.mxu0
            %808 = vdwg.mxu0
            %vm809 = vcmask 130048
            %810 = vst.msk [vmem:[#allocation4] sm:$0xff] %vm809, %v801
            %811 = vst.msk [vmem:[#allocation4 + $0x8] sm:$0xff] %vm809, %v806
          $region112: #{tpu_custom_call.1} parent=107 // pred_fallthru
            _
          %v812 = vld [vmem:[#allocation4] sm:$0xff]
          %v813 = vld [vmem:[#allocation4 + $0x8] sm:$0xff]
          %s814 = scalar_lea.vmem %s0, %s674
          %v815 = vld [vmem:[%s814] sm:$0xff]
          %v816 = vld [vmem:[%s5] sm:$0xff]
          %v817 = vld [vmem:[%s6] sm:$0x1]
          %v819 = vlaneseq
          %v820 = vshrl.u32 %v819, 7
          %v821 = vsub.s32 0, %v820
          %v822 = vrot.slane %v817, %v821
          %vm824 = vcmask 64512
          %v826 = vsel %vm824, %v815, 0
          %828 = vmatprep.subr.mxu0 0.0
          %829 = vmatpush1.msra.mxu0 0.0
          %830 = vmatprep.subr.mxu0 0.0
          %831 = vmatpush1.msra.mxu0 0.0
          %832 = vmatprep.subr.mxu0 0.0
          %833 = vmatpush1.msra.mxu0 0.0
          %834 = vmatprep.subr.mxu0 0.0
          %835 = vmatpush1.msra.mxu0 0.0
          %836 = vmatprep.subr.mxu0 0.0
          %837 = vmatpush1.msra.mxu0 0.0
          %838 = vmatprep.subr.mxu0 0.0
          %839 = vmatpush1.msra.mxu0 0.0
          %840 = vmatprep.subr.mxu0 0.0
          %841 = vmatpush1.msra.mxu0 0.0
          %842 = vmatprep.subr.mxu0 0.0
          %843 = vmatpush1.msra.mxu0 0.0
          %844 = vmatprep.subr.mxu0 0.0
          %845 = vmatpush1.msra.mxu0 0.0
          %846 = vmatprep.subr.mxu0 0.0
          %847 = vmatpush1.msra.mxu0 0.0
          %848 = vmatprep.subr.mxu0 0.0
          %849 = vmatpush1.msra.mxu0 0.0
          %850 = vmatprep.subr.mxu0 0.0
          %851 = vmatpush1.msra.mxu0 0.0
          %852 = vmatprep.subr.mxu0 0.0
          %853 = vmatpush1.msra.mxu0 0.0
          %854 = vmatprep.subr.mxu0 0.0
          %855 = vmatpush1.msra.mxu0 0.0
          %856 = vmatprep.subr.mxu0 0.0
          %857 = vmatpush1.msra.mxu0 0.0
          %858 = vmatprep.subr.mxu0 0.0
          %859 = vmatpush1.msra.mxu0 %v816
          %860 = vmatprep.subr.mxu0 0.0
          %861 = vmatpush2.msra.mxu0 0.0
          %862 = vmatprep.subr.mxu0 0.0
          %863 = vmatpush2.msra.mxu0 0.0
          %864 = vmatprep.subr.mxu0 0.0
          %865 = vmatpush2.msra.mxu0 0.0
          %866 = vmatprep.subr.mxu0 0.0
          %867 = vmatpush2.msra.mxu0 0.0
          %868 = vmatprep.subr.mxu0 0.0
          %869 = vmatpush2.msra.mxu0 0.0
          %870 = vmatprep.subr.mxu0 0.0
          %871 = vmatpush2.msra.mxu0 0.0
          %872 = vmatprep.subr.mxu0 0.0
          %873 = vmatpush2.msra.mxu0 0.0
          %874 = vmatprep.subr.mxu0 0.0
          %875 = vmatpush2.msra.mxu0 0.0
          %876 = vmatprep.subr.mxu0 0.0
          %877 = vmatpush2.msra.mxu0 0.0
          %878 = vmatprep.subr.mxu0 0.0
          %879 = vmatpush2.msra.mxu0 0.0
          %880 = vmatprep.subr.mxu0 0.0
          %881 = vmatpush2.msra.mxu0 0.0
          %882 = vmatprep.subr.mxu0 0.0
          %883 = vmatpush2.msra.mxu0 0.0
          %884 = vmatprep.subr.mxu0 0.0
          %885 = vmatpush2.msra.mxu0 0.0
          %886 = vmatprep.subr.mxu0 0.0
          %887 = vmatpush2.msra.mxu0 0.0
          %888 = vmatprep.subr.mxu0 0.0
          %889 = vmatpush2.msra.mxu0 0.0
          %890 = vmatprep.subr.mxu0 0.0
          %891 = vmatpush2.msra.mxu0 0.0
          %892 = vmatprep.mubr.f32.mxu0 0.0
          %893 = vmatmul.mubr.f32.gmra.mxu0 %v826
          %v894 = vpop.f32.mrf.mxu0
          %v895 = vadd.f32 %v822, %v894
          %v896 = vpop.f32.mrf.mxu0
          %897 = vdwg.mxu0
          %v898 = vld [vmem:[%s7] sm:$0xf]
          %vm899 = vcmask 31744
          %v901 = vsel %vm899, %v693, 0
          %v904 = vsel %vm899, %v694, 0
          %v907 = vsel %vm899, %v695, 0
          %v910 = vsel %vm899, %v696, 0
          %v913 = vsel %vm899, %v697, 0
          %v916 = vsel %vm899, %v698, 0
          %v919 = vsel %vm899, %v699, 0
          %v922 = vsel %vm899, %v700, 0
          %v925 = vsel %vm899, %v701, 0
          %v928 = vsel %vm899, %v702, 0
          %v931 = vsel %vm899, %v703, 0
          %v934 = vsel %vm899, %v704, 0
          %v937 = vsel %vm899, %v705, 0
          %v940 = vsel %vm899, %v706, 0
          %v943 = vsel %vm899, %v707, 0
          %v946 = vsel %vm899, %v708, 0
          %vm948 = vcmask 1043456
          %v950 = vsel %vm948, %v898, 0
          %952 = vmatprep.subr.mxu0 0.0
          %953 = vmatpush1.msra.mxu0 0.0
          %954 = vmatprep.subr.mxu0 0.0
          %955 = vmatpush1.msra.mxu0 0.0
          %956 = vmatprep.subr.mxu0 0.0
          %957 = vmatpush1.msra.mxu0 0.0
          %958 = vmatprep.subr.mxu0 0.0
          %959 = vmatpush1.msra.mxu0 0.0
          %960 = vmatprep.subr.mxu0 0.0
          %961 = vmatpush1.msra.mxu0 0.0
          %962 = vmatprep.subr.mxu0 0.0
          %963 = vmatpush1.msra.mxu0 0.0
          %964 = vmatprep.subr.mxu0 0.0
          %965 = vmatpush1.msra.mxu0 0.0
          %966 = vmatprep.subr.mxu0 0.0
          %967 = vmatpush1.msra.mxu0 0.0
          %968 = vmatprep.subr.mxu0 0.0
          %969 = vmatpush1.msra.mxu0 0.0
          %970 = vmatprep.subr.mxu0 0.0
          %971 = vmatpush1.msra.mxu0 0.0
          %972 = vmatprep.subr.mxu0 0.0
          %973 = vmatpush1.msra.mxu0 0.0
          %974 = vmatprep.subr.mxu0 0.0
          %975 = vmatpush1.msra.mxu0 0.0
          %976 = vmatprep.subr.mxu0 0.0
          %977 = vmatpush1.msra.mxu0 0.0
          %978 = vmatprep.subr.mxu0 0.0
          %979 = vmatpush1.msra.mxu0 0.0
          %980 = vmatprep.subr.mxu0 0.0
          %981 = vmatpush1.msra.mxu0 0.0
          %982 = vmatprep.subr.mxu0 0.0
          %983 = vmatpush1.msra.mxu0 %v950
          %984 = vmatprep.subr.mxu0 0.0
          %985 = vmatpush2.msra.mxu0 0.0
          %986 = vmatprep.subr.mxu0 0.0
          %987 = vmatpush2.msra.mxu0 0.0
          %988 = vmatprep.subr.mxu0 0.0
          %989 = vmatpush2.msra.mxu0 0.0
          %990 = vmatprep.subr.mxu0 0.0
          %991 = vmatpush2.msra.mxu0 0.0
          %992 = vmatprep.subr.mxu0 0.0
          %993 = vmatpush2.msra.mxu0 0.0
          %994 = vmatprep.subr.mxu0 0.0
          %995 = vmatpush2.msra.mxu0 0.0
          %996 = vmatprep.subr.mxu0 0.0
          %997 = vmatpush2.msra.mxu0 0.0
          %998 = vmatprep.subr.mxu0 0.0
          %999 = vmatpush2.msra.mxu0 0.0
          %1000 = vmatprep.subr.mxu0 0.0
          %1001 = vmatpush2.msra.mxu0 0.0
          %1002 = vmatprep.subr.mxu0 0.0
          %1003 = vmatpush2.msra.mxu0 0.0
          %1004 = vmatprep.subr.mxu0 0.0
          %1005 = vmatpush2.msra.mxu0 0.0
          %1006 = vmatprep.subr.mxu0 0.0
          %1007 = vmatpush2.msra.mxu0 0.0
          %1008 = vmatprep.subr.mxu0 0.0
          %1009 = vmatpush2.msra.mxu0 0.0
          %1010 = vmatprep.subr.mxu0 0.0
          %1011 = vmatpush2.msra.mxu0 0.0
          %1012 = vmatprep.subr.mxu0 0.0
          %1013 = vmatpush2.msra.mxu0 0.0
          %1014 = vmatprep.subr.mxu0 0.0
          %1015 = vmatpush2.msra.mxu0 0.0
          %1016 = vmatprep.mubr.f32.mxu0 0.0
          %1017 = vmatmul.mubr.f32.gmra.mxu0 %v901
          %v1018 = vpop.f32.mrf.mxu0
          %v1019 = vadd.f32 0.0, %v1018
          %v1020 = vpop.f32.mrf.mxu0
          %1021 = vmatprep.mubr.f32.mxu0 0.0
          %1022 = vmatmul.mubr.f32.gmra.mxu0 %v904
          %v1023 = vpop.f32.mrf.mxu0
          %v1024 = vadd.f32 0.0, %v1023
          %v1025 = vpop.f32.mrf.mxu0
          %1026 = vmatprep.mubr.f32.mxu0 0.0
          %1027 = vmatmul.mubr.f32.gmra.mxu0 %v907
          %v1028 = vpop.f32.mrf.mxu0
          %v1029 = vadd.f32 0.0, %v1028
          %v1030 = vpop.f32.mrf.mxu0
          %1031 = vmatprep.mubr.f32.mxu0 0.0
          %1032 = vmatmul.mubr.f32.gmra.mxu0 %v910
          %v1033 = vpop.f32.mrf.mxu0
          %v1034 = vadd.f32 0.0, %v1033
          %v1035 = vpop.f32.mrf.mxu0
          %1036 = vmatprep.mubr.f32.mxu0 0.0
          %1037 = vmatmul.mubr.f32.gmra.mxu0 %v913
          %v1038 = vpop.f32.mrf.mxu0
          %v1039 = vadd.f32 0.0, %v1038
          %v1040 = vpop.f32.mrf.mxu0
          %1041 = vmatprep.mubr.f32.mxu0 0.0
          %1042 = vmatmul.mubr.f32.gmra.mxu0 %v916
          %v1043 = vpop.f32.mrf.mxu0
          %v1044 = vadd.f32 0.0, %v1043
          %v1045 = vpop.f32.mrf.mxu0
          %1046 = vmatprep.mubr.f32.mxu0 0.0
          %1047 = vmatmul.mubr.f32.gmra.mxu0 %v919
          %v1048 = vpop.f32.mrf.mxu0
          %v1049 = vadd.f32 0.0, %v1048
          %v1050 = vpop.f32.mrf.mxu0
          %1051 = vmatprep.mubr.f32.mxu0 0.0
          %1052 = vmatmul.mubr.f32.gmra.mxu0 %v922
          %v1053 = vpop.f32.mrf.mxu0
          %v1054 = vadd.f32 0.0, %v1053
          %v1055 = vpop.f32.mrf.mxu0
          %1056 = vmatprep.mubr.f32.mxu0 0.0
          %1057 = vmatmul.mubr.f32.gmra.mxu0 %v925
          %v1058 = vpop.f32.mrf.mxu0
          %v1059 = vadd.f32 0.0, %v1058
          %v1060 = vpop.f32.mrf.mxu0
          %1061 = vmatprep.mubr.f32.mxu0 0.0
          %1062 = vmatmul.mubr.f32.gmra.mxu0 %v928
          %v1063 = vpop.f32.mrf.mxu0
          %v1064 = vadd.f32 0.0, %v1063
          %v1065 = vpop.f32.mrf.mxu0
          %1066 = vmatprep.mubr.f32.mxu0 0.0
          %1067 = vmatmul.mubr.f32.gmra.mxu0 %v931
          %v1068 = vpop.f32.mrf.mxu0
          %v1069 = vadd.f32 0.0, %v1068
          %v1070 = vpop.f32.mrf.mxu0
          %1071 = vmatprep.mubr.f32.mxu0 0.0
          %1072 = vmatmul.mubr.f32.gmra.mxu0 %v934
          %v1073 = vpop.f32.mrf.mxu0
          %v1074 = vadd.f32 0.0, %v1073
          %v1075 = vpop.f32.mrf.mxu0
          %1076 = vmatprep.mubr.f32.mxu0 0.0
          %1077 = vmatmul.mubr.f32.gmra.mxu0 %v937
          %v1078 = vpop.f32.mrf.mxu0
          %v1079 = vadd.f32 0.0, %v1078
          %v1080 = vpop.f32.mrf.mxu0
          %1081 = vmatprep.mubr.f32.mxu0 0.0
          %1082 = vmatmul.mubr.f32.gmra.mxu0 %v940
          %v1083 = vpop.f32.mrf.mxu0
          %v1084 = vadd.f32 0.0, %v1083
          %v1085 = vpop.f32.mrf.mxu0
          %1086 = vmatprep.mubr.f32.mxu0 0.0
          %1087 = vmatmul.mubr.f32.gmra.mxu0 %v943
          %v1088 = vpop.f32.mrf.mxu0
          %v1089 = vadd.f32 0.0, %v1088
          %v1090 = vpop.f32.mrf.mxu0
          %1091 = vmatprep.mubr.f32.mxu0 0.0
          %1092 = vmatmul.mubr.f32.gmra.mxu0 %v946
          %v1093 = vpop.f32.mrf.mxu0
          %v1094 = vadd.f32 0.0, %v1093
          %v1095 = vpop.f32.mrf.mxu0
          %1096 = vdwg.mxu0
          %v1098 = vcombine.high %v895, %v895
          %v1100 = vunpack.c.l.s4 1966171168
          %v1101 = vunpack.c.0.s8 %v1100
          %v1102 = vlaneseq
          %v1103 = vshrl.u32 %v1102, 7
          %v1104 = vsub.s32 %v1101, %v1103
          %v1105 = vrot.slane %v895, %v1104
          %v1107 = vunpack.c.l.s4 1966171168
          %v1108 = vunpack.c.0.s8 %v1107
          %v1109 = vlaneseq
          %v1110 = vshrl.u32 %v1109, 7
          %v1111 = vsub.s32 %v1108, %v1110
          %v1112 = vrot.slane %v1098, %v1111
          %v1113 = vcombine.high %v1105, %v1105
          %v1114 = vcombine.high %v1112, %v1112
          %v1116 = vunpack.c.l.s4 1966171168
          %v1117 = vunpack.c.0.s8 %v1116
          %v1118 = vlaneseq
          %v1119 = vshrl.u32 %v1118, 7
          %v1120 = vsub.s32 %v1117, %v1119
          %v1121 = vrot.slane %v1105, %v1120
          %v1123 = vunpack.c.l.s4 1966171168
          %v1124 = vunpack.c.0.s8 %v1123
          %v1125 = vlaneseq
          %v1126 = vshrl.u32 %v1125, 7
          %v1127 = vsub.s32 %v1124, %v1126
          %v1128 = vrot.slane %v1112, %v1127
          %v1130 = vunpack.c.l.s4 1966171168
          %v1131 = vunpack.c.0.s8 %v1130
          %v1132 = vlaneseq
          %v1133 = vshrl.u32 %v1132, 7
          %v1134 = vsub.s32 %v1131, %v1133
          %v1135 = vrot.slane %v1113, %v1134
          %v1137 = vunpack.c.l.s4 1966171168
          %v1138 = vunpack.c.0.s8 %v1137
          %v1139 = vlaneseq
          %v1140 = vshrl.u32 %v1139, 7
          %v1141 = vsub.s32 %v1138, %v1140
          %v1142 = vrot.slane %v1114, %v1141
          %v1143 = vcombine.high %v1121, %v1121
          %v1144 = vcombine.high %v1128, %v1128
          %v1145 = vcombine.high %v1135, %v1135
          %v1146 = vcombine.high %v1142, %v1142
          %v1147 = vlaneseq
          %v1148 = vshrl.u32 %v1147, 7
          %v1149 = vsub.s32 0, %v1148
          %v1150 = vrot.slane %v1121, %v1149
          %v1151 = vlaneseq
          %v1152 = vshrl.u32 %v1151, 7
          %v1153 = vsub.s32 0, %v1152
          %v1154 = vrot.slane %v1135, %v1153
          %v1155 = vlaneseq
          %v1156 = vshrl.u32 %v1155, 7
          %v1157 = vsub.s32 0, %v1156
          %v1158 = vrot.slane %v1143, %v1157
          %v1159 = vlaneseq
          %v1160 = vshrl.u32 %v1159, 7
          %v1161 = vsub.s32 0, %v1160
          %v1162 = vrot.slane %v1145, %v1161
          %v1163 = vlaneseq
          %v1164 = vshrl.u32 %v1163, 7
          %v1165 = vsub.s32 0, %v1164
          %v1166 = vrot.slane %v1128, %v1165
          %v1167 = vlaneseq
          %v1168 = vshrl.u32 %v1167, 7
          %v1169 = vsub.s32 0, %v1168
          %v1170 = vrot.slane %v1142, %v1169
          %v1171 = vlaneseq
          %v1172 = vshrl.u32 %v1171, 7
          %v1173 = vsub.s32 0, %v1172
          %v1174 = vrot.slane %v1144, %v1173
          %v1175 = vlaneseq
          %v1176 = vshrl.u32 %v1175, 7
          %v1177 = vsub.s32 0, %v1176
          %v1178 = vrot.slane %v1146, %v1177
          %v1187 = vadd.f32 %v1150, %v812
          %v1188 = vadd.f32 %v1150, %v813
          %v1189 = vadd.f32 %v1154, %v812
          %v1190 = vadd.f32 %v1154, %v813
          %v1191 = vadd.f32 %v1158, %v812
          %v1192 = vadd.f32 %v1158, %v813
          %v1193 = vadd.f32 %v1162, %v812
          %v1194 = vadd.f32 %v1162, %v813
          %v1195 = vadd.f32 %v1166, %v812
          %v1196 = vadd.f32 %v1166, %v813
          %v1197 = vadd.f32 %v1170, %v812
          %v1198 = vadd.f32 %v1170, %v813
          %v1199 = vadd.f32 %v1174, %v812
          %v1200 = vadd.f32 %v1174, %v813
          %v1201 = vadd.f32 %v1178, %v812
          %v1202 = vadd.f32 %v1178, %v813
          %v1203 = vadd.f32 %v1187, %v1019
          %v1204 = vadd.f32 %v1188, %v1024
          %v1205 = vadd.f32 %v1189, %v1029
          %v1206 = vadd.f32 %v1190, %v1034
          %v1207 = vadd.f32 %v1191, %v1039
          %v1208 = vadd.f32 %v1192, %v1044
          %v1209 = vadd.f32 %v1193, %v1049
          %v1210 = vadd.f32 %v1194, %v1054
          %v1211 = vadd.f32 %v1195, %v1059
          %v1212 = vadd.f32 %v1196, %v1064
          %v1213 = vadd.f32 %v1197, %v1069
          %v1214 = vadd.f32 %v1198, %v1074
          %v1215 = vadd.f32 %v1199, %v1079
          %v1216 = vadd.f32 %v1200, %v1084
          %v1217 = vadd.f32 %v1201, %v1089
          %v1218 = vadd.f32 %v1202, %v1094
          %vm1219 = vcmp.gt.f32.partialorder %v1203, 0.0
          %vm1220 = vcmp.gt.f32.partialorder %v1204, 0.0
          %vm1221 = vcmp.gt.f32.partialorder %v1205, 0.0
          %vm1222 = vcmp.gt.f32.partialorder %v1206, 0.0
          %vm1223 = vcmp.gt.f32.partialorder %v1207, 0.0
          %vm1224 = vcmp.gt.f32.partialorder %v1208, 0.0
          %vm1225 = vcmp.gt.f32.partialorder %v1209, 0.0
          %vm1226 = vcmp.gt.f32.partialorder %v1210, 0.0
          %vm1227 = vcmp.gt.f32.partialorder %v1211, 0.0
          %vm1228 = vcmp.gt.f32.partialorder %v1212, 0.0
          %vm1229 = vcmp.gt.f32.partialorder %v1213, 0.0
          %vm1230 = vcmp.gt.f32.partialorder %v1214, 0.0
          %vm1231 = vcmp.gt.f32.partialorder %v1215, 0.0
          %vm1232 = vcmp.gt.f32.partialorder %v1216, 0.0
          %vm1233 = vcmp.gt.f32.partialorder %v1217, 0.0
          %vm1234 = vcmp.gt.f32.partialorder %v1218, 0.0
          %v1235 = vmul.f32 %v1203, 0.2
          %v1236 = vmul.f32 %v1204, 0.2
          %v1237 = vmul.f32 %v1205, 0.2
          %v1238 = vmul.f32 %v1206, 0.2
          %v1239 = vmul.f32 %v1207, 0.2
          %v1240 = vmul.f32 %v1208, 0.2
          %v1241 = vmul.f32 %v1209, 0.2
          %v1242 = vmul.f32 %v1210, 0.2
          %v1243 = vmul.f32 %v1211, 0.2
          %v1244 = vmul.f32 %v1212, 0.2
          %v1245 = vmul.f32 %v1213, 0.2
          %v1246 = vmul.f32 %v1214, 0.2
          %v1247 = vmul.f32 %v1215, 0.2
          %v1248 = vmul.f32 %v1216, 0.2
          %v1249 = vmul.f32 %v1217, 0.2
          %v1250 = vmul.f32 %v1218, 0.2
          %v1251 = vsel %vm1219, %v1203, %v1235
          %v1252 = vsel %vm1220, %v1204, %v1236
          %v1253 = vsel %vm1221, %v1205, %v1237
          %v1254 = vsel %vm1222, %v1206, %v1238
          %v1255 = vsel %vm1223, %v1207, %v1239
          %v1256 = vsel %vm1224, %v1208, %v1240
          %v1257 = vsel %vm1225, %v1209, %v1241
          %v1258 = vsel %vm1226, %v1210, %v1242
          %v1259 = vsel %vm1227, %v1211, %v1243
          %v1260 = vsel %vm1228, %v1212, %v1244
          %v1261 = vsel %vm1229, %v1213, %v1245
          %v1262 = vsel %vm1230, %v1214, %v1246
          %v1263 = vsel %vm1231, %v1215, %v1247
          %v1264 = vsel %vm1232, %v1216, %v1248
          %v1265 = vsel %vm1233, %v1217, %v1249
          %v1266 = vsel %vm1234, %v1218, %v1250
          %v1267 = vld [vmem:[%s8] sm:$0xff]
          %v1268 = vld [vmem:[%s8 + $0x8] sm:$0xff]
          %vm1269 = vcmask 130048
          %v1271 = vsel %vm1269, %v1251, 0
          %v1274 = vsel %vm1269, %v1252, 0
          %v1277 = vsel %vm1269, %v1253, 0
          %v1280 = vsel %vm1269, %v1254, 0
          %v1283 = vsel %vm1269, %v1255, 0
          %v1286 = vsel %vm1269, %v1256, 0
          %v1289 = vsel %vm1269, %v1257, 0
          %v1292 = vsel %vm1269, %v1258, 0
          %v1295 = vsel %vm1269, %v1259, 0
          %v1298 = vsel %vm1269, %v1260, 0
          %v1301 = vsel %vm1269, %v1261, 0
          %v1304 = vsel %vm1269, %v1262, 0
          %v1307 = vsel %vm1269, %v1263, 0
          %v1310 = vsel %vm1269, %v1264, 0
          %v1313 = vsel %vm1269, %v1265, 0
          %v1316 = vsel %vm1269, %v1266, 0
          %1318 = vmatprep.subr.mxu0 0.0
          %1319 = vmatpush1.msra.mxu0 0.0
          %1320 = vmatprep.subr.mxu0 0.0
          %1321 = vmatpush1.msra.mxu0 0.0
          %1322 = vmatprep.subr.mxu0 0.0
          %1323 = vmatpush1.msra.mxu0 0.0
          %1324 = vmatprep.subr.mxu0 0.0
          %1325 = vmatpush1.msra.mxu0 0.0
          %1326 = vmatprep.subr.mxu0 0.0
          %1327 = vmatpush1.msra.mxu0 0.0
          %1328 = vmatprep.subr.mxu0 0.0
          %1329 = vmatpush1.msra.mxu0 0.0
          %1330 = vmatprep.subr.mxu0 0.0
          %1331 = vmatpush1.msra.mxu0 0.0
          %1332 = vmatprep.subr.mxu0 0.0
          %1333 = vmatpush1.msra.mxu0 0.0
          %1334 = vmatprep.subr.mxu0 0.0
          %1335 = vmatpush1.msra.mxu0 0.0
          %1336 = vmatprep.subr.mxu0 0.0
          %1337 = vmatpush1.msra.mxu0 0.0
          %1338 = vmatprep.subr.mxu0 0.0
          %1339 = vmatpush1.msra.mxu0 0.0
          %1340 = vmatprep.subr.mxu0 0.0
          %1341 = vmatpush1.msra.mxu0 0.0
          %1342 = vmatprep.subr.mxu0 0.0
          %1343 = vmatpush1.msra.mxu0 0.0
          %1344 = vmatprep.subr.mxu0 0.0
          %1345 = vmatpush1.msra.mxu0 0.0
          %1346 = vmatprep.subr.mxu0 0.0
          %1347 = vmatpush1.msra.mxu0 %v1268
          %1348 = vmatprep.subr.mxu0 0.0
          %1349 = vmatpush1.msra.mxu0 %v1267
          %1350 = vmatprep.subr.mxu0 0.0
          %1351 = vmatpush2.msra.mxu0 0.0
          %1352 = vmatprep.subr.mxu0 0.0
          %1353 = vmatpush2.msra.mxu0 0.0
          %1354 = vmatprep.subr.mxu0 0.0
          %1355 = vmatpush2.msra.mxu0 0.0
          %1356 = vmatprep.subr.mxu0 0.0
          %1357 = vmatpush2.msra.mxu0 0.0
          %1358 = vmatprep.subr.mxu0 0.0
          %1359 = vmatpush2.msra.mxu0 0.0
          %1360 = vmatprep.subr.mxu0 0.0
          %1361 = vmatpush2.msra.mxu0 0.0
          %1362 = vmatprep.subr.mxu0 0.0
          %1363 = vmatpush2.msra.mxu0 0.0
          %1364 = vmatprep.subr.mxu0 0.0
          %1365 = vmatpush2.msra.mxu0 0.0
          %1366 = vmatprep.subr.mxu0 0.0
          %1367 = vmatpush2.msra.mxu0 0.0
          %1368 = vmatprep.subr.mxu0 0.0
          %1369 = vmatpush2.msra.mxu0 0.0
          %1370 = vmatprep.subr.mxu0 0.0
          %1371 = vmatpush2.msra.mxu0 0.0
          %1372 = vmatprep.subr.mxu0 0.0
          %1373 = vmatpush2.msra.mxu0 0.0
          %1374 = vmatprep.subr.mxu0 0.0
          %1375 = vmatpush2.msra.mxu0 0.0
          %1376 = vmatprep.subr.mxu0 0.0
          %1377 = vmatpush2.msra.mxu0 0.0
          %1378 = vmatprep.subr.mxu0 0.0
          %1379 = vmatpush2.msra.mxu0 0.0
          %1380 = vmatprep.subr.mxu0 0.0
          %1381 = vmatpush2.msra.mxu0 0.0
          %1382 = vmatprep.mubr.f32.mxu0 0.0
          %1383 = vmatmul.mubr.f32.gmra.mxu0 %v1271
          %v1384 = vpop.f32.mrf.mxu0
          %v1385 = vadd.f32 0.0, %v1384
          %v1386 = vpop.f32.mrf.mxu0
          %1387 = vmatprep.mubr.f32.mxu0 0.0
          %1388 = vmatmul.mubr.f32.gmra.mxu0 %v1274
          %v1389 = vpop.f32.mrf.mxu0
          %v1390 = vadd.f32 0.0, %v1389
          %v1391 = vpop.f32.mrf.mxu0
          %1392 = vmatprep.mubr.f32.mxu0 0.0
          %1393 = vmatmul.mubr.f32.gmra.mxu0 %v1277
          %v1394 = vpop.f32.mrf.mxu0
          %v1395 = vadd.f32 0.0, %v1394
          %v1396 = vpop.f32.mrf.mxu0
          %1397 = vmatprep.mubr.f32.mxu0 0.0
          %1398 = vmatmul.mubr.f32.gmra.mxu0 %v1280
          %v1399 = vpop.f32.mrf.mxu0
          %v1400 = vadd.f32 0.0, %v1399
          %v1401 = vpop.f32.mrf.mxu0
          %1402 = vmatprep.mubr.f32.mxu0 0.0
          %1403 = vmatmul.mubr.f32.gmra.mxu0 %v1283
          %v1404 = vpop.f32.mrf.mxu0
          %v1405 = vadd.f32 0.0, %v1404
          %v1406 = vpop.f32.mrf.mxu0
          %1407 = vmatprep.mubr.f32.mxu0 0.0
          %1408 = vmatmul.mubr.f32.gmra.mxu0 %v1286
          %v1409 = vpop.f32.mrf.mxu0
          %v1410 = vadd.f32 0.0, %v1409
          %v1411 = vpop.f32.mrf.mxu0
          %1412 = vmatprep.mubr.f32.mxu0 0.0
          %1413 = vmatmul.mubr.f32.gmra.mxu0 %v1289
          %v1414 = vpop.f32.mrf.mxu0
          %v1415 = vadd.f32 0.0, %v1414
          %v1416 = vpop.f32.mrf.mxu0
          %1417 = vmatprep.mubr.f32.mxu0 0.0
          %1418 = vmatmul.mubr.f32.gmra.mxu0 %v1292
          %v1419 = vpop.f32.mrf.mxu0
          %v1420 = vadd.f32 0.0, %v1419
          %v1421 = vpop.f32.mrf.mxu0
          %1422 = vmatprep.mubr.f32.mxu0 0.0
          %1423 = vmatmul.mubr.f32.gmra.mxu0 %v1295
          %v1424 = vpop.f32.mrf.mxu0
          %v1425 = vadd.f32 0.0, %v1424
          %v1426 = vpop.f32.mrf.mxu0
          %1427 = vmatprep.mubr.f32.mxu0 0.0
          %1428 = vmatmul.mubr.f32.gmra.mxu0 %v1298
          %v1429 = vpop.f32.mrf.mxu0
          %v1430 = vadd.f32 0.0, %v1429
          %v1431 = vpop.f32.mrf.mxu0
          %1432 = vmatprep.mubr.f32.mxu0 0.0
          %1433 = vmatmul.mubr.f32.gmra.mxu0 %v1301
          %v1434 = vpop.f32.mrf.mxu0
          %v1435 = vadd.f32 0.0, %v1434
          %v1436 = vpop.f32.mrf.mxu0
          %1437 = vmatprep.mubr.f32.mxu0 0.0
          %1438 = vmatmul.mubr.f32.gmra.mxu0 %v1304
          %v1439 = vpop.f32.mrf.mxu0
          %v1440 = vadd.f32 0.0, %v1439
          %v1441 = vpop.f32.mrf.mxu0
          %1442 = vmatprep.mubr.f32.mxu0 0.0
          %1443 = vmatmul.mubr.f32.gmra.mxu0 %v1307
          %v1444 = vpop.f32.mrf.mxu0
          %v1445 = vadd.f32 0.0, %v1444
          %v1446 = vpop.f32.mrf.mxu0
          %1447 = vmatprep.mubr.f32.mxu0 0.0
          %1448 = vmatmul.mubr.f32.gmra.mxu0 %v1310
          %v1449 = vpop.f32.mrf.mxu0
          %v1450 = vadd.f32 0.0, %v1449
          %v1451 = vpop.f32.mrf.mxu0
          %1452 = vmatprep.mubr.f32.mxu0 0.0
          %1453 = vmatmul.mubr.f32.gmra.mxu0 %v1313
          %v1454 = vpop.f32.mrf.mxu0
          %v1455 = vadd.f32 0.0, %v1454
          %v1456 = vpop.f32.mrf.mxu0
          %1457 = vmatprep.mubr.f32.mxu0 0.0
          %1458 = vmatmul.mubr.f32.gmra.mxu0 %v1316
          %v1459 = vpop.f32.mrf.mxu0
          %v1460 = vadd.f32 0.0, %v1459
          %v1461 = vpop.f32.mrf.mxu0
          %1462 = vdwg.mxu0
          %v1463 = vadd.f32 %v1385, 0.0
          %v1464 = vadd.f32 %v1390, 0.0
          %v1465 = vadd.f32 %v1395, 0.0
          %v1466 = vadd.f32 %v1400, 0.0
          %v1467 = vadd.f32 %v1405, 0.0
          %v1468 = vadd.f32 %v1410, 0.0
          %v1469 = vadd.f32 %v1415, 0.0
          %v1470 = vadd.f32 %v1420, 0.0
          %v1471 = vadd.f32 %v1425, 0.0
          %v1472 = vadd.f32 %v1430, 0.0
          %v1473 = vadd.f32 %v1435, 0.0
          %v1474 = vadd.f32 %v1440, 0.0
          %v1475 = vadd.f32 %v1445, 0.0
          %v1476 = vadd.f32 %v1450, 0.0
          %v1477 = vadd.f32 %v1455, 0.0
          %v1478 = vadd.f32 %v1460, 0.0
          %1495 = vset.pattern.permute.xlu0 0
          %1496 = vperm.xlu0 %1495, %v1463
          %v1497 = vpop.permute.xlu0 %1496
          %1498 = vset.pattern.permute.xlu0 0
          %1499 = vperm.xlu0 %1498, %v1464
          %v1500 = vpop.permute.xlu0 %1499
          %1501 = vset.pattern.permute.xlu0 0
          %1502 = vperm.xlu0 %1501, %v1465
          %v1503 = vpop.permute.xlu0 %1502
          %1504 = vset.pattern.permute.xlu0 0
          %1505 = vperm.xlu0 %1504, %v1466
          %v1506 = vpop.permute.xlu0 %1505
          %1507 = vset.pattern.permute.xlu0 0
          %1508 = vperm.xlu0 %1507, %v1467
          %v1509 = vpop.permute.xlu0 %1508
          %1510 = vset.pattern.permute.xlu0 0
          %1511 = vperm.xlu0 %1510, %v1468
          %v1512 = vpop.permute.xlu0 %1511
          %1513 = vset.pattern.permute.xlu0 0
          %1514 = vperm.xlu0 %1513, %v1469
          %v1515 = vpop.permute.xlu0 %1514
          %1516 = vset.pattern.permute.xlu0 0
          %1517 = vperm.xlu0 %1516, %v1470
          %v1518 = vpop.permute.xlu0 %1517
          %1519 = vset.pattern.permute.xlu0 0
          %1520 = vperm.xlu0 %1519, %v1471
          %v1521 = vpop.permute.xlu0 %1520
          %1522 = vset.pattern.permute.xlu0 0
          %1523 = vperm.xlu0 %1522, %v1472
          %v1524 = vpop.permute.xlu0 %1523
          %1525 = vset.pattern.permute.xlu0 0
          %1526 = vperm.xlu0 %1525, %v1473
          %v1527 = vpop.permute.xlu0 %1526
          %1528 = vset.pattern.permute.xlu0 0
          %1529 = vperm.xlu0 %1528, %v1474
          %v1530 = vpop.permute.xlu0 %1529
          %1531 = vset.pattern.permute.xlu0 0
          %1532 = vperm.xlu0 %1531, %v1475
          %v1533 = vpop.permute.xlu0 %1532
          %1534 = vset.pattern.permute.xlu0 0
          %1535 = vperm.xlu0 %1534, %v1476
          %v1536 = vpop.permute.xlu0 %1535
          %1537 = vset.pattern.permute.xlu0 0
          %1538 = vperm.xlu0 %1537, %v1477
          %v1539 = vpop.permute.xlu0 %1538
          %1540 = vset.pattern.permute.xlu0 0
          %1541 = vperm.xlu0 %1540, %v1478
          %v1542 = vpop.permute.xlu0 %1541
          %v1543 = vlaneseq
          %v1544 = vand.u32 %v1543, 127
          %v1545 = vlaneseq
          %v1546 = vshrl.u32 %v1545, 7
          %v1547 = vsub.s32 %v1544, %v1546
          %v1548 = vrot.slane %v1497, %v1547
          %v1549 = vadd.s32 %v1544, 4294967288
          %v1550 = vlaneseq
          %v1551 = vshrl.u32 %v1550, 7
          %v1552 = vsub.s32 %v1549, %v1551
          %v1553 = vrot.slane %v1500, %v1552
          %vm1554 = vcmask 130112
          %v1555 = vsel %vm1554, %v1553, %v1548
          %v1556 = vlaneseq
          %v1557 = vshrl.u32 %v1556, 7
          %v1558 = vsub.s32 %v1544, %v1557
          %v1559 = vrot.slane %v1503, %v1558
          %v1560 = vlaneseq
          %v1561 = vshrl.u32 %v1560, 7
          %v1562 = vsub.s32 %v1549, %v1561
          %v1563 = vrot.slane %v1506, %v1562
          %v1564 = vsel %vm1554, %v1563, %v1559
          %v1565 = vlaneseq
          %v1566 = vshrl.u32 %v1565, 7
          %v1567 = vsub.s32 %v1544, %v1566
          %v1568 = vrot.slane %v1509, %v1567
          %v1569 = vlaneseq
          %v1570 = vshrl.u32 %v1569, 7
          %v1571 = vsub.s32 %v1549, %v1570
          %v1572 = vrot.slane %v1512, %v1571
          %v1573 = vsel %vm1554, %v1572, %v1568
          %v1574 = vlaneseq
          %v1575 = vshrl.u32 %v1574, 7
          %v1576 = vsub.s32 %v1544, %v1575
          %v1577 = vrot.slane %v1515, %v1576
          %v1578 = vlaneseq
          %v1579 = vshrl.u32 %v1578, 7
          %v1580 = vsub.s32 %v1549, %v1579
          %v1581 = vrot.slane %v1518, %v1580
          %v1582 = vsel %vm1554, %v1581, %v1577
          %v1583 = vlaneseq
          %v1584 = vshrl.u32 %v1583, 7
          %v1585 = vsub.s32 %v1544, %v1584
          %v1586 = vrot.slane %v1521, %v1585
          %v1587 = vlaneseq
          %v1588 = vshrl.u32 %v1587, 7
          %v1589 = vsub.s32 %v1549, %v1588
          %v1590 = vrot.slane %v1524, %v1589
          %v1591 = vsel %vm1554, %v1590, %v1586
          %v1592 = vlaneseq
          %v1593 = vshrl.u32 %v1592, 7
          %v1594 = vsub.s32 %v1544, %v1593
          %v1595 = vrot.slane %v1527, %v1594
          %v1596 = vlaneseq
          %v1597 = vshrl.u32 %v1596, 7
          %v1598 = vsub.s32 %v1549, %v1597
          %v1599 = vrot.slane %v1530, %v1598
          %v1600 = vsel %vm1554, %v1599, %v1595
          %v1601 = vlaneseq
          %v1602 = vshrl.u32 %v1601, 7
          %v1603 = vsub.s32 %v1544, %v1602
          %v1604 = vrot.slane %v1533, %v1603
          %v1605 = vlaneseq
          %v1606 = vshrl.u32 %v1605, 7
          %v1607 = vsub.s32 %v1549, %v1606
          %v1608 = vrot.slane %v1536, %v1607
          %v1609 = vsel %vm1554, %v1608, %v1604
          %v1610 = vlaneseq
          %v1611 = vshrl.u32 %v1610, 7
          %v1612 = vsub.s32 %v1544, %v1611
          %v1613 = vrot.slane %v1539, %v1612
          %v1614 = vlaneseq
          %v1615 = vshrl.u32 %v1614, 7
          %v1616 = vsub.s32 %v1549, %v1615
          %v1617 = vrot.slane %v1542, %v1616
          %v1618 = vsel %vm1554, %v1617, %v1613
          %vm1619 = vcmask 1041409
          %v1620 = vsel %vm1619, %v1564, %v1555
          %vm1621 = vcmask 1042434
          %v1622 = vsel %vm1621, %v1573, %v1620
          %vm1623 = vcmask 1043459
          %v1624 = vsel %vm1623, %v1582, %v1622
          %vm1625 = vcmask 1044484
          %v1626 = vsel %vm1625, %v1591, %v1624
          %vm1627 = vcmask 1045509
          %v1628 = vsel %vm1627, %v1600, %v1626
          %vm1629 = vcmask 1046534
          %v1630 = vsel %vm1629, %v1609, %v1628
          %vm1631 = vcmask 1047559
          %v1632 = vsel %vm1631, %v1618, %v1630
          %v1634 = vsel %vm676, %v1632, -1e+30
          %v1635 = vsel %vm1269, %v1634, -inf
          %1636 = vmax.xlane.f32.xlu0 %v1635
          %v1637 = vpop.xlane.xlu0 %1636
          %v1638 = vsub.f32 %v1634, %v1637
          %v1639 = vmul.f32 %v1638, 1.442695
          %v1640 = vpow.pop %v1639
          %v1641 = vsel %vm1269, %v1640, 0.0
          %1642 = vadd.xlane.f32.xlu0 %v1641
          %v1643 = vpop.xlane.xlu0 %1642
          %v1644 = vrcp.pop %v1643
          %v1645 = vmul.f32 %v1640, %v1644
          %v1646 = vld [vmem:[%s9] sm:$0x1]
          %v1648 = vlaneseq
          %v1649 = vshrl.u32 %v1648, 7
          %v1650 = vsub.s32 0, %v1649
          %v1651 = vrot.slane %v1646, %v1650
          %v1654 = vsel %vm1269, %v1645, 0
          %1656 = vmatprep.subr.mxu0 0.0
          %1657 = vmatpush1.msra.mxu0 0.0
          %1658 = vmatprep.subr.mxu0 0.0
          %1659 = vmatpush1.msra.mxu0 0.0
          %1660 = vmatprep.subr.mxu0 0.0
          %1661 = vmatpush1.msra.mxu0 0.0
          %1662 = vmatprep.subr.mxu0 0.0
          %1663 = vmatpush1.msra.mxu0 0.0
          %1664 = vmatprep.subr.mxu0 0.0
          %1665 = vmatpush1.msra.mxu0 0.0
          %1666 = vmatprep.subr.mxu0 0.0
          %1667 = vmatpush1.msra.mxu0 0.0
          %1668 = vmatprep.subr.mxu0 0.0
          %1669 = vmatpush1.msra.mxu0 0.0
          %1670 = vmatprep.subr.mxu0 0.0
          %1671 = vmatpush1.msra.mxu0 0.0
          %1672 = vmatprep.subr.mxu0 0.0
          %1673 = vmatpush1.msra.mxu0 0.0
          %1674 = vmatprep.subr.mxu0 0.0
          %1675 = vmatpush1.msra.mxu0 0.0
          %1676 = vmatprep.subr.mxu0 0.0
          %1677 = vmatpush1.msra.mxu0 0.0
          %1678 = vmatprep.subr.mxu0 0.0
          %1679 = vmatpush1.msra.mxu0 0.0
          %1680 = vmatprep.subr.mxu0 0.0
          %1681 = vmatpush1.msra.mxu0 0.0
          %1682 = vmatprep.subr.mxu0 0.0
          %1683 = vmatpush1.msra.mxu0 0.0
          %1684 = vmatprep.subr.mxu0 0.0
          %1685 = vmatpush1.msra.mxu0 %v813
          %1686 = vmatprep.subr.mxu0 0.0
          %1687 = vmatpush1.msra.mxu0 %v812
          %1688 = vmatprep.subr.mxu0 0.0
          %1689 = vmatpush2.msra.mxu0 0.0
          %1690 = vmatprep.subr.mxu0 0.0
          %1691 = vmatpush2.msra.mxu0 0.0
          %1692 = vmatprep.subr.mxu0 0.0
          %1693 = vmatpush2.msra.mxu0 0.0
          %1694 = vmatprep.subr.mxu0 0.0
          %1695 = vmatpush2.msra.mxu0 0.0
          %1696 = vmatprep.subr.mxu0 0.0
          %1697 = vmatpush2.msra.mxu0 0.0
          %1698 = vmatprep.subr.mxu0 0.0
          %1699 = vmatpush2.msra.mxu0 0.0
          %1700 = vmatprep.subr.mxu0 0.0
          %1701 = vmatpush2.msra.mxu0 0.0
          %1702 = vmatprep.subr.mxu0 0.0
          %1703 = vmatpush2.msra.mxu0 0.0
          %1704 = vmatprep.subr.mxu0 0.0
          %1705 = vmatpush2.msra.mxu0 0.0
          %1706 = vmatprep.subr.mxu0 0.0
          %1707 = vmatpush2.msra.mxu0 0.0
          %1708 = vmatprep.subr.mxu0 0.0
          %1709 = vmatpush2.msra.mxu0 0.0
          %1710 = vmatprep.subr.mxu0 0.0
          %1711 = vmatpush2.msra.mxu0 0.0
          %1712 = vmatprep.subr.mxu0 0.0
          %1713 = vmatpush2.msra.mxu0 0.0
          %1714 = vmatprep.subr.mxu0 0.0
          %1715 = vmatpush2.msra.mxu0 0.0
          %1716 = vmatprep.subr.mxu0 0.0
          %1717 = vmatpush2.msra.mxu0 0.0
          %1718 = vmatprep.subr.mxu0 0.0
          %1719 = vmatpush2.msra.mxu0 0.0
          %1720 = vmatprep.mubr.f32.mxu0 0.0
          %1721 = vmatmul.mubr.f32.gmra.mxu0 %v1654
          %v1722 = vpop.f32.mrf.mxu0
          %v1723 = vadd.f32 %v1651, %v1722
          %v1724 = vpop.f32.mrf.mxu0
          %1725 = vdwg.mxu0
          %v1726 = vmax.f32 %v1723, 0.0
          %s1727 = scalar_lea.vmem [#allocation2], %s674
          %1728 = vst.msk [vmem:[%s1727] sm:$0xff] %vm824, %v1726
          %1729 = vset.pattern.permute.xlu0 1
          %1730 = vperm.xlu0 %1729, %v1463
          %v1731 = vpop.permute.xlu0 %1730
          %1732 = vset.pattern.permute.xlu0 1
          %1733 = vperm.xlu0 %1732, %v1464
          %v1734 = vpop.permute.xlu0 %1733
          %1735 = vset.pattern.permute.xlu0 1
          %1736 = vperm.xlu0 %1735, %v1465
          %v1737 = vpop.permute.xlu0 %1736
          %1738 = vset.pattern.permute.xlu0 1
          %1739 = vperm.xlu0 %1738, %v1466
          %v1740 = vpop.permute.xlu0 %1739
          %1741 = vset.pattern.permute.xlu0 1
          %1742 = vperm.xlu0 %1741, %v1467
          %v1743 = vpop.permute.xlu0 %1742
          %1744 = vset.pattern.permute.xlu0 1
          %1745 = vperm.xlu0 %1744, %v1468
          %v1746 = vpop.permute.xlu0 %1745
          %1747 = vset.pattern.permute.xlu0 1
          %1748 = vperm.xlu0 %1747, %v1469
          %v1749 = vpop.permute.xlu0 %1748
          %1750 = vset.pattern.permute.xlu0 1
          %1751 = vperm.xlu0 %1750, %v1470
          %v1752 = vpop.permute.xlu0 %1751
          %1753 = vset.pattern.permute.xlu0 1
          %1754 = vperm.xlu0 %1753, %v1471
          %v1755 = vpop.permute.xlu0 %1754
          %1756 = vset.pattern.permute.xlu0 1
          %1757 = vperm.xlu0 %1756, %v1472
          %v1758 = vpop.permute.xlu0 %1757
          %1759 = vset.pattern.permute.xlu0 1
          %1760 = vperm.xlu0 %1759, %v1473
          %v1761 = vpop.permute.xlu0 %1760
          %1762 = vset.pattern.permute.xlu0 1
          %1763 = vperm.xlu0 %1762, %v1474
          %v1764 = vpop.permute.xlu0 %1763
          %1765 = vset.pattern.permute.xlu0 1
          %1766 = vperm.xlu0 %1765, %v1475
          %v1767 = vpop.permute.xlu0 %1766
          %1768 = vset.pattern.permute.xlu0 1
          %1769 = vperm.xlu0 %1768, %v1476
          %v1770 = vpop.permute.xlu0 %1769
          %1771 = vset.pattern.permute.xlu0 1
          %1772 = vperm.xlu0 %1771, %v1477
          %v1773 = vpop.permute.xlu0 %1772
          %1774 = vset.pattern.permute.xlu0 1
          %1775 = vperm.xlu0 %1774, %v1478
          %v1776 = vpop.permute.xlu0 %1775
          %v1777 = vlaneseq
          %v1778 = vshrl.u32 %v1777, 7
          %v1779 = vsub.s32 %v1544, %v1778
          %v1780 = vrot.slane %v1731, %v1779
          %v1781 = vlaneseq
          %v1782 = vshrl.u32 %v1781, 7
          %v1783 = vsub.s32 %v1549, %v1782
          %v1784 = vrot.slane %v1734, %v1783
          %v1785 = vsel %vm1554, %v1784, %v1780
          %v1786 = vlaneseq
          %v1787 = vshrl.u32 %v1786, 7
          %v1788 = vsub.s32 %v1544, %v1787
          %v1789 = vrot.slane %v1737, %v1788
          %v1790 = vlaneseq
          %v1791 = vshrl.u32 %v1790, 7
          %v1792 = vsub.s32 %v1549, %v1791
          %v1793 = vrot.slane %v1740, %v1792
          %v1794 = vsel %vm1554, %v1793, %v1789
          %v1795 = vlaneseq
          %v1796 = vshrl.u32 %v1795, 7
          %v1797 = vsub.s32 %v1544, %v1796
          %v1798 = vrot.slane %v1743, %v1797
          %v1799 = vlaneseq
          %v1800 = vshrl.u32 %v1799, 7
          %v1801 = vsub.s32 %v1549, %v1800
          %v1802 = vrot.slane %v1746, %v1801
          %v1803 = vsel %vm1554, %v1802, %v1798
          %v1804 = vlaneseq
          %v1805 = vshrl.u32 %v1804, 7
          %v1806 = vsub.s32 %v1544, %v1805
          %v1807 = vrot.slane %v1749, %v1806
          %v1808 = vlaneseq
          %v1809 = vshrl.u32 %v1808, 7
          %v1810 = vsub.s32 %v1549, %v1809
          %v1811 = vrot.slane %v1752, %v1810
          %v1812 = vsel %vm1554, %v1811, %v1807
          %v1813 = vlaneseq
          %v1814 = vshrl.u32 %v1813, 7
          %v1815 = vsub.s32 %v1544, %v1814
          %v1816 = vrot.slane %v1755, %v1815
          %v1817 = vlaneseq
          %v1818 = vshrl.u32 %v1817, 7
          %v1819 = vsub.s32 %v1549, %v1818
          %v1820 = vrot.slane %v1758, %v1819
          %v1821 = vsel %vm1554, %v1820, %v1816
          %v1822 = vlaneseq
          %v1823 = vshrl.u32 %v1822, 7
          %v1824 = vsub.s32 %v1544, %v1823
          %v1825 = vrot.slane %v1761, %v1824
          %v1826 = vlaneseq
          %v1827 = vshrl.u32 %v1826, 7
          %v1828 = vsub.s32 %v1549, %v1827
          %v1829 = vrot.slane %v1764, %v1828
          %v1830 = vsel %vm1554, %v1829, %v1825
          %v1831 = vlaneseq
          %v1832 = vshrl.u32 %v1831, 7
          %v1833 = vsub.s32 %v1544, %v1832
          %v1834 = vrot.slane %v1767, %v1833
          %v1835 = vlaneseq
          %v1836 = vshrl.u32 %v1835, 7
          %v1837 = vsub.s32 %v1549, %v1836
          %v1838 = vrot.slane %v1770, %v1837
          %v1839 = vsel %vm1554, %v1838, %v1834
          %v1840 = vlaneseq
          %v1841 = vshrl.u32 %v1840, 7
          %v1842 = vsub.s32 %v1544, %v1841
          %v1843 = vrot.slane %v1773, %v1842
          %v1844 = vlaneseq
          %v1845 = vshrl.u32 %v1844, 7
          %v1846 = vsub.s32 %v1549, %v1845
          %v1847 = vrot.slane %v1776, %v1846
          %v1848 = vsel %vm1554, %v1847, %v1843
          %v1849 = vsel %vm1619, %v1794, %v1785
          %v1850 = vsel %vm1621, %v1803, %v1849
          %v1851 = vsel %vm1623, %v1812, %v1850
          %v1852 = vsel %vm1625, %v1821, %v1851
          %v1853 = vsel %vm1627, %v1830, %v1852
          %v1854 = vsel %vm1629, %v1839, %v1853
          %v1855 = vsel %vm1631, %v1848, %v1854
          %v1857 = vsel %vm676, %v1855, -1e+30
          %v1858 = vsel %vm1269, %v1857, -inf
          %1859 = vmax.xlane.f32.xlu0 %v1858
          %v1860 = vpop.xlane.xlu0 %1859
          %v1861 = vsub.f32 %v1857, %v1860
          %v1862 = vmul.f32 %v1861, 1.442695
          %v1863 = vpow.pop %v1862
          %v1864 = vsel %vm1269, %v1863, 0.0
          %1865 = vadd.xlane.f32.xlu0 %v1864
          %v1866 = vpop.xlane.xlu0 %1865
          %v1867 = vrcp.pop %v1866
          %v1868 = vmul.f32 %v1863, %v1867
          %v1869 = vld [vmem:[%s9] sm:$0x1]
          %v1871 = vlaneseq
          %v1872 = vshrl.u32 %v1871, 7
          %v1873 = vsub.s32 0, %v1872
          %v1874 = vrot.slane %v1869, %v1873
          %1877 = vrot.lane.b32.xlu0 %v812, 120
          %v1878 = vpop.permute.xlu0 %1877
          %1879 = vrot.lane.b32.xlu0 %v813, 120
          %v1880 = vpop.permute.xlu0 %1879
          %1883 = vrot.lane.b32.xlu0 %v1874, 120
          %v1884 = vpop.permute.xlu0 %1883
          %v1887 = vsel %vm1269, %v1868, 0
          %1889 = vmatprep.subr.mxu0 0.0
          %1890 = vmatpush1.msra.mxu0 0.0
          %1891 = vmatprep.subr.mxu0 0.0
          %1892 = vmatpush1.msra.mxu0 0.0
          %1893 = vmatprep.subr.mxu0 0.0
          %1894 = vmatpush1.msra.mxu0 0.0
          %1895 = vmatprep.subr.mxu0 0.0
          %1896 = vmatpush1.msra.mxu0 0.0
          %1897 = vmatprep.subr.mxu0 0.0
          %1898 = vmatpush1.msra.mxu0 0.0
          %1899 = vmatprep.subr.mxu0 0.0
          %1900 = vmatpush1.msra.mxu0 0.0
          %1901 = vmatprep.subr.mxu0 0.0
          %1902 = vmatpush1.msra.mxu0 0.0
          %1903 = vmatprep.subr.mxu0 0.0
          %1904 = vmatpush1.msra.mxu0 0.0
          %1905 = vmatprep.subr.mxu0 0.0
          %1906 = vmatpush1.msra.mxu0 0.0
          %1907 = vmatprep.subr.mxu0 0.0
          %1908 = vmatpush1.msra.mxu0 0.0
          %1909 = vmatprep.subr.mxu0 0.0
          %1910 = vmatpush1.msra.mxu0 0.0
          %1911 = vmatprep.subr.mxu0 0.0
          %1912 = vmatpush1.msra.mxu0 0.0
          %1913 = vmatprep.subr.mxu0 0.0
          %1914 = vmatpush1.msra.mxu0 0.0
          %1915 = vmatprep.subr.mxu0 0.0
          %1916 = vmatpush1.msra.mxu0 0.0
          %1917 = vmatprep.subr.mxu0 0.0
          %1918 = vmatpush1.msra.mxu0 %v1880
          %1919 = vmatprep.subr.mxu0 0.0
          %1920 = vmatpush1.msra.mxu0 %v1878
          %1921 = vmatprep.subr.mxu0 0.0
          %1922 = vmatpush2.msra.mxu0 0.0
          %1923 = vmatprep.subr.mxu0 0.0
          %1924 = vmatpush2.msra.mxu0 0.0
          %1925 = vmatprep.subr.mxu0 0.0
          %1926 = vmatpush2.msra.mxu0 0.0
          %1927 = vmatprep.subr.mxu0 0.0
          %1928 = vmatpush2.msra.mxu0 0.0
          %1929 = vmatprep.subr.mxu0 0.0
          %1930 = vmatpush2.msra.mxu0 0.0
          %1931 = vmatprep.subr.mxu0 0.0
          %1932 = vmatpush2.msra.mxu0 0.0
          %1933 = vmatprep.subr.mxu0 0.0
          %1934 = vmatpush2.msra.mxu0 0.0
          %1935 = vmatprep.subr.mxu0 0.0
          %1936 = vmatpush2.msra.mxu0 0.0
          %1937 = vmatprep.subr.mxu0 0.0
          %1938 = vmatpush2.msra.mxu0 0.0
          %1939 = vmatprep.subr.mxu0 0.0
          %1940 = vmatpush2.msra.mxu0 0.0
          %1941 = vmatprep.subr.mxu0 0.0
          %1942 = vmatpush2.msra.mxu0 0.0
          %1943 = vmatprep.subr.mxu0 0.0
          %1944 = vmatpush2.msra.mxu0 0.0
          %1945 = vmatprep.subr.mxu0 0.0
          %1946 = vmatpush2.msra.mxu0 0.0
          %1947 = vmatprep.subr.mxu0 0.0
          %1948 = vmatpush2.msra.mxu0 0.0
          %1949 = vmatprep.subr.mxu0 0.0
          %1950 = vmatpush2.msra.mxu0 0.0
          %1951 = vmatprep.subr.mxu0 0.0
          %1952 = vmatpush2.msra.mxu0 0.0
          %1953 = vmatprep.mubr.f32.mxu0 0.0
          %1954 = vmatmul.mubr.f32.gmra.mxu0 %v1887
          %v1955 = vpop.f32.mrf.mxu0
          %v1956 = vadd.f32 %v1884, %v1955
          %v1957 = vpop.f32.mrf.mxu0
          %1958 = vdwg.mxu0
          %v1959 = vmax.f32 %v1956, 0.0
          %1961 = vrot.lane.b32.xlu0 %v1959, 8
          %v1962 = vpop.permute.xlu0 %1961
          %1964 = vst.msk [vmem:[%s1727] sm:$0xff] %vm1554, %v1962
        $region108: #{tpu_custom_call.1} parent=103 // pred_fallthru
          _
        %p1965 = scmp.eq.s32.totalorder %s37, 1
        // Predicated region
        $region113: #{tpu_custom_call.1} parent=103 // pred_check
          %p1966 = pneg %p1965
        $region114: #{tpu_custom_call.1} parent=103 // pred_check_branch
          %1968 = sbr.rel (%p1966) target = $region116
        $region115: #{tpu_custom_call.1} parent=103 // pred_region
          %p1969 = scmp.eq.s32.totalorder %s38, 0
          // Predicated region
          $region117: #{tpu_custom_call.1} parent=115 // pred_check
            %p1970 = pneg %p1969
          $region118: #{tpu_custom_call.1} parent=115 // pred_check_branch
            %1972 = sbr.rel (%p1970) target = $region120
          $region119: #{tpu_custom_call.1} parent=115 // pred_region
            %v1973 = vld [vmem:[#allocation2] sm:$0xff]
            %v1974 = vld [vmem:[#allocation2 + $0x8] sm:$0xff]
            %v1975 = vld [vmem:[%s10] sm:$0xff]
            %v1976 = vld [vmem:[%s10 + $0x8] sm:$0xff]
            %v1977 = vld [vmem:[%s11] sm:$0x1]
            %v1979 = vlaneseq
            %v1980 = vshrl.u32 %v1979, 7
            %v1981 = vsub.s32 0, %v1980
            %v1982 = vrot.slane %v1977, %v1981
            %vm1984 = vcmask 130048
            %v1986 = vsel %vm1984, %v1973, 0
            %v1989 = vsel %vm1984, %v1974, 0
            %1991 = vmatprep.subr.mxu0 0.0
            %1992 = vmatpush1.msra.mxu0 0.0
            %1993 = vmatprep.subr.mxu0 0.0
            %1994 = vmatpush1.msra.mxu0 0.0
            %1995 = vmatprep.subr.mxu0 0.0
            %1996 = vmatpush1.msra.mxu0 0.0
            %1997 = vmatprep.subr.mxu0 0.0
            %1998 = vmatpush1.msra.mxu0 0.0
            %1999 = vmatprep.subr.mxu0 0.0
            %2000 = vmatpush1.msra.mxu0 0.0
            %2001 = vmatprep.subr.mxu0 0.0
            %2002 = vmatpush1.msra.mxu0 0.0
            %2003 = vmatprep.subr.mxu0 0.0
            %2004 = vmatpush1.msra.mxu0 0.0
            %2005 = vmatprep.subr.mxu0 0.0
            %2006 = vmatpush1.msra.mxu0 0.0
            %2007 = vmatprep.subr.mxu0 0.0
            %2008 = vmatpush1.msra.mxu0 0.0
            %2009 = vmatprep.subr.mxu0 0.0
            %2010 = vmatpush1.msra.mxu0 0.0
            %2011 = vmatprep.subr.mxu0 0.0
            %2012 = vmatpush1.msra.mxu0 0.0
            %2013 = vmatprep.subr.mxu0 0.0
            %2014 = vmatpush1.msra.mxu0 0.0
            %2015 = vmatprep.subr.mxu0 0.0
            %2016 = vmatpush1.msra.mxu0 0.0
            %2017 = vmatprep.subr.mxu0 0.0
            %2018 = vmatpush1.msra.mxu0 0.0
            %2019 = vmatprep.subr.mxu0 0.0
            %2020 = vmatpush1.msra.mxu0 %v1976
            %2021 = vmatprep.subr.mxu0 0.0
            %2022 = vmatpush1.msra.mxu0 %v1975
            %2023 = vmatprep.subr.mxu0 0.0
            %2024 = vmatpush2.msra.mxu0 0.0
            %2025 = vmatprep.subr.mxu0 0.0
            %2026 = vmatpush2.msra.mxu0 0.0
            %2027 = vmatprep.subr.mxu0 0.0
            %2028 = vmatpush2.msra.mxu0 0.0
            %2029 = vmatprep.subr.mxu0 0.0
            %2030 = vmatpush2.msra.mxu0 0.0
            %2031 = vmatprep.subr.mxu0 0.0
            %2032 = vmatpush2.msra.mxu0 0.0
            %2033 = vmatprep.subr.mxu0 0.0
            %2034 = vmatpush2.msra.mxu0 0.0
            %2035 = vmatprep.subr.mxu0 0.0
            %2036 = vmatpush2.msra.mxu0 0.0
            %2037 = vmatprep.subr.mxu0 0.0
            %2038 = vmatpush2.msra.mxu0 0.0
            %2039 = vmatprep.subr.mxu0 0.0
            %2040 = vmatpush2.msra.mxu0 0.0
            %2041 = vmatprep.subr.mxu0 0.0
            %2042 = vmatpush2.msra.mxu0 0.0
            %2043 = vmatprep.subr.mxu0 0.0
            %2044 = vmatpush2.msra.mxu0 0.0
            %2045 = vmatprep.subr.mxu0 0.0
            %2046 = vmatpush2.msra.mxu0 0.0
            %2047 = vmatprep.subr.mxu0 0.0
            %2048 = vmatpush2.msra.mxu0 0.0
            %2049 = vmatprep.subr.mxu0 0.0
            %2050 = vmatpush2.msra.mxu0 0.0
            %2051 = vmatprep.subr.mxu0 0.0
            %2052 = vmatpush2.msra.mxu0 0.0
            %2053 = vmatprep.subr.mxu0 0.0
            %2054 = vmatpush2.msra.mxu0 0.0
            %2055 = vmatprep.mubr.f32.mxu0 0.0
            %2056 = vmatmul.mubr.f32.gmra.mxu0 %v1986
            %v2057 = vpop.f32.mrf.mxu0
            %v2058 = vadd.f32 %v1982, %v2057
            %v2059 = vpop.f32.mrf.mxu0
            %2060 = vmatprep.mubr.f32.mxu0 0.0
            %2061 = vmatmul.mubr.f32.gmra.mxu0 %v1989
            %v2062 = vpop.f32.mrf.mxu0
            %v2063 = vadd.f32 %v1982, %v2062
            %v2064 = vpop.f32.mrf.mxu0
            %2065 = vdwg.mxu0
            %vm2066 = vcmask 64512
            %2067 = vst.msk [vmem:[#allocation5] sm:$0xff] %vm2066, %v2058
            %2068 = vst.msk [vmem:[#allocation5 + $0x8] sm:$0xff] %vm2066, %v2063
          $region120: #{tpu_custom_call.1} parent=115 // pred_fallthru
            _
          %v2069 = vld [vmem:[#allocation5] sm:$0xff]
          %v2070 = vld [vmem:[#allocation5 + $0x8] sm:$0xff]
          %s2071 = scalar_lea.vmem [#allocation2], %s674
          %v2072 = vld [vmem:[%s2071] sm:$0xff]
          %v2073 = vld [vmem:[%s12] sm:$0xff]
          %v2074 = vld [vmem:[%s12 + $0x8] sm:$0xff]
          %v2075 = vld [vmem:[%s13] sm:$0x1]
          %v2077 = vlaneseq
          %v2078 = vshrl.u32 %v2077, 7
          %v2079 = vsub.s32 0, %v2078
          %v2080 = vrot.slane %v2075, %v2079
          %vm2082 = vcmask 130048
          %v2084 = vsel %vm2082, %v2072, 0
          %2086 = vmatprep.subr.mxu0 0.0
          %2087 = vmatpush1.msra.mxu0 0.0
          %2088 = vmatprep.subr.mxu0 0.0
          %2089 = vmatpush1.msra.mxu0 0.0
          %2090 = vmatprep.subr.mxu0 0.0
          %2091 = vmatpush1.msra.mxu0 0.0
          %2092 = vmatprep.subr.mxu0 0.0
          %2093 = vmatpush1.msra.mxu0 0.0
          %2094 = vmatprep.subr.mxu0 0.0
          %2095 = vmatpush1.msra.mxu0 0.0
          %2096 = vmatprep.subr.mxu0 0.0
          %2097 = vmatpush1.msra.mxu0 0.0
          %2098 = vmatprep.subr.mxu0 0.0
          %2099 = vmatpush1.msra.mxu0 0.0
          %2100 = vmatprep.subr.mxu0 0.0
          %2101 = vmatpush1.msra.mxu0 0.0
          %2102 = vmatprep.subr.mxu0 0.0
          %2103 = vmatpush1.msra.mxu0 0.0
          %2104 = vmatprep.subr.mxu0 0.0
          %2105 = vmatpush1.msra.mxu0 0.0
          %2106 = vmatprep.subr.mxu0 0.0
          %2107 = vmatpush1.msra.mxu0 0.0
          %2108 = vmatprep.subr.mxu0 0.0
          %2109 = vmatpush1.msra.mxu0 0.0
          %2110 = vmatprep.subr.mxu0 0.0
          %2111 = vmatpush1.msra.mxu0 0.0
          %2112 = vmatprep.subr.mxu0 0.0
          %2113 = vmatpush1.msra.mxu0 0.0
          %2114 = vmatprep.subr.mxu0 0.0
          %2115 = vmatpush1.msra.mxu0 %v2074
          %2116 = vmatprep.subr.mxu0 0.0
          %2117 = vmatpush1.msra.mxu0 %v2073
          %2118 = vmatprep.subr.mxu0 0.0
          %2119 = vmatpush2.msra.mxu0 0.0
          %2120 = vmatprep.subr.mxu0 0.0
          %2121 = vmatpush2.msra.mxu0 0.0
          %2122 = vmatprep.subr.mxu0 0.0
          %2123 = vmatpush2.msra.mxu0 0.0
          %2124 = vmatprep.subr.mxu0 0.0
          %2125 = vmatpush2.msra.mxu0 0.0
          %2126 = vmatprep.subr.mxu0 0.0
          %2127 = vmatpush2.msra.mxu0 0.0
          %2128 = vmatprep.subr.mxu0 0.0
          %2129 = vmatpush2.msra.mxu0 0.0
          %2130 = vmatprep.subr.mxu0 0.0
          %2131 = vmatpush2.msra.mxu0 0.0
          %2132 = vmatprep.subr.mxu0 0.0
          %2133 = vmatpush2.msra.mxu0 0.0
          %2134 = vmatprep.subr.mxu0 0.0
          %2135 = vmatpush2.msra.mxu0 0.0
          %2136 = vmatprep.subr.mxu0 0.0
          %2137 = vmatpush2.msra.mxu0 0.0
          %2138 = vmatprep.subr.mxu0 0.0
          %2139 = vmatpush2.msra.mxu0 0.0
          %2140 = vmatprep.subr.mxu0 0.0
          %2141 = vmatpush2.msra.mxu0 0.0
          %2142 = vmatprep.subr.mxu0 0.0
          %2143 = vmatpush2.msra.mxu0 0.0
          %2144 = vmatprep.subr.mxu0 0.0
          %2145 = vmatpush2.msra.mxu0 0.0
          %2146 = vmatprep.subr.mxu0 0.0
          %2147 = vmatpush2.msra.mxu0 0.0
          %2148 = vmatprep.subr.mxu0 0.0
          %2149 = vmatpush2.msra.mxu0 0.0
          %2150 = vmatprep.mubr.f32.mxu0 0.0
          %2151 = vmatmul.mubr.f32.gmra.mxu0 %v2084
          %v2152 = vpop.f32.mrf.mxu0
          %v2153 = vadd.f32 %v2080, %v2152
          %v2154 = vpop.f32.mrf.mxu0
          %2155 = vdwg.mxu0
          %v2156 = vld [vmem:[%s14] sm:$0xf]
          %vm2157 = vcmask 31744
          %v2159 = vsel %vm2157, %v693, 0
          %v2162 = vsel %vm2157, %v694, 0
          %v2165 = vsel %vm2157, %v695, 0
          %v2168 = vsel %vm2157, %v696, 0
          %v2171 = vsel %vm2157, %v697, 0
          %v2174 = vsel %vm2157, %v698, 0
          %v2177 = vsel %vm2157, %v699, 0
          %v2180 = vsel %vm2157, %v700, 0
          %v2183 = vsel %vm2157, %v701, 0
          %v2186 = vsel %vm2157, %v702, 0
          %v2189 = vsel %vm2157, %v703, 0
          %v2192 = vsel %vm2157, %v704, 0
          %v2195 = vsel %vm2157, %v705, 0
          %v2198 = vsel %vm2157, %v706, 0
          %v2201 = vsel %vm2157, %v707, 0
          %v2204 = vsel %vm2157, %v708, 0
          %vm2206 = vcmask 1043456
          %v2208 = vsel %vm2206, %v2156, 0
          %2210 = vmatprep.subr.mxu0 0.0
          %2211 = vmatpush1.msra.mxu0 0.0
          %2212 = vmatprep.subr.mxu0 0.0
          %2213 = vmatpush1.msra.mxu0 0.0
          %2214 = vmatprep.subr.mxu0 0.0
          %2215 = vmatpush1.msra.mxu0 0.0
          %2216 = vmatprep.subr.mxu0 0.0
          %2217 = vmatpush1.msra.mxu0 0.0
          %2218 = vmatprep.subr.mxu0 0.0
          %2219 = vmatpush1.msra.mxu0 0.0
          %2220 = vmatprep.subr.mxu0 0.0
          %2221 = vmatpush1.msra.mxu0 0.0
          %2222 = vmatprep.subr.mxu0 0.0
          %2223 = vmatpush1.msra.mxu0 0.0
          %2224 = vmatprep.subr.mxu0 0.0
          %2225 = vmatpush1.msra.mxu0 0.0
          %2226 = vmatprep.subr.mxu0 0.0
          %2227 = vmatpush1.msra.mxu0 0.0
          %2228 = vmatprep.subr.mxu0 0.0
          %2229 = vmatpush1.msra.mxu0 0.0
          %2230 = vmatprep.subr.mxu0 0.0
          %2231 = vmatpush1.msra.mxu0 0.0
          %2232 = vmatprep.subr.mxu0 0.0
          %2233 = vmatpush1.msra.mxu0 0.0
          %2234 = vmatprep.subr.mxu0 0.0
          %2235 = vmatpush1.msra.mxu0 0.0
          %2236 = vmatprep.subr.mxu0 0.0
          %2237 = vmatpush1.msra.mxu0 0.0
          %2238 = vmatprep.subr.mxu0 0.0
          %2239 = vmatpush1.msra.mxu0 0.0
          %2240 = vmatprep.subr.mxu0 0.0
          %2241 = vmatpush1.msra.mxu0 %v2208
          %2242 = vmatprep.subr.mxu0 0.0
          %2243 = vmatpush2.msra.mxu0 0.0
          %2244 = vmatprep.subr.mxu0 0.0
          %2245 = vmatpush2.msra.mxu0 0.0
          %2246 = vmatprep.subr.mxu0 0.0
          %2247 = vmatpush2.msra.mxu0 0.0
          %2248 = vmatprep.subr.mxu0 0.0
          %2249 = vmatpush2.msra.mxu0 0.0
          %2250 = vmatprep.subr.mxu0 0.0
          %2251 = vmatpush2.msra.mxu0 0.0
          %2252 = vmatprep.subr.mxu0 0.0
          %2253 = vmatpush2.msra.mxu0 0.0
          %2254 = vmatprep.subr.mxu0 0.0
          %2255 = vmatpush2.msra.mxu0 0.0
          %2256 = vmatprep.subr.mxu0 0.0
          %2257 = vmatpush2.msra.mxu0 0.0
          %2258 = vmatprep.subr.mxu0 0.0
          %2259 = vmatpush2.msra.mxu0 0.0
          %2260 = vmatprep.subr.mxu0 0.0
          %2261 = vmatpush2.msra.mxu0 0.0
          %2262 = vmatprep.subr.mxu0 0.0
          %2263 = vmatpush2.msra.mxu0 0.0
          %2264 = vmatprep.subr.mxu0 0.0
          %2265 = vmatpush2.msra.mxu0 0.0
          %2266 = vmatprep.subr.mxu0 0.0
          %2267 = vmatpush2.msra.mxu0 0.0
          %2268 = vmatprep.subr.mxu0 0.0
          %2269 = vmatpush2.msra.mxu0 0.0
          %2270 = vmatprep.subr.mxu0 0.0
          %2271 = vmatpush2.msra.mxu0 0.0
          %2272 = vmatprep.subr.mxu0 0.0
          %2273 = vmatpush2.msra.mxu0 0.0
          %2274 = vmatprep.mubr.f32.mxu0 0.0
          %2275 = vmatmul.mubr.f32.gmra.mxu0 %v2159
          %v2276 = vpop.f32.mrf.mxu0
          %v2277 = vadd.f32 0.0, %v2276
          %v2278 = vpop.f32.mrf.mxu0
          %2279 = vmatprep.mubr.f32.mxu0 0.0
          %2280 = vmatmul.mubr.f32.gmra.mxu0 %v2162
          %v2281 = vpop.f32.mrf.mxu0
          %v2282 = vadd.f32 0.0, %v2281
          %v2283 = vpop.f32.mrf.mxu0
          %2284 = vmatprep.mubr.f32.mxu0 0.0
          %2285 = vmatmul.mubr.f32.gmra.mxu0 %v2165
          %v2286 = vpop.f32.mrf.mxu0
          %v2287 = vadd.f32 0.0, %v2286
          %v2288 = vpop.f32.mrf.mxu0
          %2289 = vmatprep.mubr.f32.mxu0 0.0
          %2290 = vmatmul.mubr.f32.gmra.mxu0 %v2168
          %v2291 = vpop.f32.mrf.mxu0
          %v2292 = vadd.f32 0.0, %v2291
          %v2293 = vpop.f32.mrf.mxu0
          %2294 = vmatprep.mubr.f32.mxu0 0.0
          %2295 = vmatmul.mubr.f32.gmra.mxu0 %v2171
          %v2296 = vpop.f32.mrf.mxu0
          %v2297 = vadd.f32 0.0, %v2296
          %v2298 = vpop.f32.mrf.mxu0
          %2299 = vmatprep.mubr.f32.mxu0 0.0
          %2300 = vmatmul.mubr.f32.gmra.mxu0 %v2174
          %v2301 = vpop.f32.mrf.mxu0
          %v2302 = vadd.f32 0.0, %v2301
          %v2303 = vpop.f32.mrf.mxu0
          %2304 = vmatprep.mubr.f32.mxu0 0.0
          %2305 = vmatmul.mubr.f32.gmra.mxu0 %v2177
          %v2306 = vpop.f32.mrf.mxu0
          %v2307 = vadd.f32 0.0, %v2306
          %v2308 = vpop.f32.mrf.mxu0
          %2309 = vmatprep.mubr.f32.mxu0 0.0
          %2310 = vmatmul.mubr.f32.gmra.mxu0 %v2180
          %v2311 = vpop.f32.mrf.mxu0
          %v2312 = vadd.f32 0.0, %v2311
          %v2313 = vpop.f32.mrf.mxu0
          %2314 = vmatprep.mubr.f32.mxu0 0.0
          %2315 = vmatmul.mubr.f32.gmra.mxu0 %v2183
          %v2316 = vpop.f32.mrf.mxu0
          %v2317 = vadd.f32 0.0, %v2316
          %v2318 = vpop.f32.mrf.mxu0
          %2319 = vmatprep.mubr.f32.mxu0 0.0
          %2320 = vmatmul.mubr.f32.gmra.mxu0 %v2186
          %v2321 = vpop.f32.mrf.mxu0
          %v2322 = vadd.f32 0.0, %v2321
          %v2323 = vpop.f32.mrf.mxu0
          %2324 = vmatprep.mubr.f32.mxu0 0.0
          %2325 = vmatmul.mubr.f32.gmra.mxu0 %v2189
          %v2326 = vpop.f32.mrf.mxu0
          %v2327 = vadd.f32 0.0, %v2326
          %v2328 = vpop.f32.mrf.mxu0
          %2329 = vmatprep.mubr.f32.mxu0 0.0
          %2330 = vmatmul.mubr.f32.gmra.mxu0 %v2192
          %v2331 = vpop.f32.mrf.mxu0
          %v2332 = vadd.f32 0.0, %v2331
          %v2333 = vpop.f32.mrf.mxu0
          %2334 = vmatprep.mubr.f32.mxu0 0.0
          %2335 = vmatmul.mubr.f32.gmra.mxu0 %v2195
          %v2336 = vpop.f32.mrf.mxu0
          %v2337 = vadd.f32 0.0, %v2336
          %v2338 = vpop.f32.mrf.mxu0
          %2339 = vmatprep.mubr.f32.mxu0 0.0
          %2340 = vmatmul.mubr.f32.gmra.mxu0 %v2198
          %v2341 = vpop.f32.mrf.mxu0
          %v2342 = vadd.f32 0.0, %v2341
          %v2343 = vpop.f32.mrf.mxu0
          %2344 = vmatprep.mubr.f32.mxu0 0.0
          %2345 = vmatmul.mubr.f32.gmra.mxu0 %v2201
          %v2346 = vpop.f32.mrf.mxu0
          %v2347 = vadd.f32 0.0, %v2346
          %v2348 = vpop.f32.mrf.mxu0
          %2349 = vmatprep.mubr.f32.mxu0 0.0
          %2350 = vmatmul.mubr.f32.gmra.mxu0 %v2204
          %v2351 = vpop.f32.mrf.mxu0
          %v2352 = vadd.f32 0.0, %v2351
          %v2353 = vpop.f32.mrf.mxu0
          %2354 = vdwg.mxu0
          %v2356 = vcombine.high %v2153, %v2153
          %v2358 = vunpack.c.l.s4 1966171168
          %v2359 = vunpack.c.0.s8 %v2358
          %v2360 = vlaneseq
          %v2361 = vshrl.u32 %v2360, 7
          %v2362 = vsub.s32 %v2359, %v2361
          %v2363 = vrot.slane %v2153, %v2362
          %v2365 = vunpack.c.l.s4 1966171168
          %v2366 = vunpack.c.0.s8 %v2365
          %v2367 = vlaneseq
          %v2368 = vshrl.u32 %v2367, 7
          %v2369 = vsub.s32 %v2366, %v2368
          %v2370 = vrot.slane %v2356, %v2369
          %v2371 = vcombine.high %v2363, %v2363
          %v2372 = vcombine.high %v2370, %v2370
          %v2374 = vunpack.c.l.s4 1966171168
          %v2375 = vunpack.c.0.s8 %v2374
          %v2376 = vlaneseq
          %v2377 = vshrl.u32 %v2376, 7
          %v2378 = vsub.s32 %v2375, %v2377
          %v2379 = vrot.slane %v2363, %v2378
          %v2381 = vunpack.c.l.s4 1966171168
          %v2382 = vunpack.c.0.s8 %v2381
          %v2383 = vlaneseq
          %v2384 = vshrl.u32 %v2383, 7
          %v2385 = vsub.s32 %v2382, %v2384
          %v2386 = vrot.slane %v2370, %v2385
          %v2388 = vunpack.c.l.s4 1966171168
          %v2389 = vunpack.c.0.s8 %v2388
          %v2390 = vlaneseq
          %v2391 = vshrl.u32 %v2390, 7
          %v2392 = vsub.s32 %v2389, %v2391
          %v2393 = vrot.slane %v2371, %v2392
          %v2395 = vunpack.c.l.s4 1966171168
          %v2396 = vunpack.c.0.s8 %v2395
          %v2397 = vlaneseq
          %v2398 = vshrl.u32 %v2397, 7
          %v2399 = vsub.s32 %v2396, %v2398
          %v2400 = vrot.slane %v2372, %v2399
          %v2401 = vcombine.high %v2379, %v2379
          %v2402 = vcombine.high %v2386, %v2386
          %v2403 = vcombine.high %v2393, %v2393
          %v2404 = vcombine.high %v2400, %v2400
          %v2405 = vlaneseq
          %v2406 = vshrl.u32 %v2405, 7
          %v2407 = vsub.s32 0, %v2406
          %v2408 = vrot.slane %v2379, %v2407
          %v2409 = vlaneseq
          %v2410 = vshrl.u32 %v2409, 7
          %v2411 = vsub.s32 0, %v2410
          %v2412 = vrot.slane %v2393, %v2411
          %v2413 = vlaneseq
          %v2414 = vshrl.u32 %v2413, 7
          %v2415 = vsub.s32 0, %v2414
          %v2416 = vrot.slane %v2401, %v2415
          %v2417 = vlaneseq
          %v2418 = vshrl.u32 %v2417, 7
          %v2419 = vsub.s32 0, %v2418
          %v2420 = vrot.slane %v2403, %v2419
          %v2421 = vlaneseq
          %v2422 = vshrl.u32 %v2421, 7
          %v2423 = vsub.s32 0, %v2422
          %v2424 = vrot.slane %v2386, %v2423
          %v2425 = vlaneseq
          %v2426 = vshrl.u32 %v2425, 7
          %v2427 = vsub.s32 0, %v2426
          %v2428 = vrot.slane %v2400, %v2427
          %v2429 = vlaneseq
          %v2430 = vshrl.u32 %v2429, 7
          %v2431 = vsub.s32 0, %v2430
          %v2432 = vrot.slane %v2402, %v2431
          %v2433 = vlaneseq
          %v2434 = vshrl.u32 %v2433, 7
          %v2435 = vsub.s32 0, %v2434
          %v2436 = vrot.slane %v2404, %v2435
          %v2445 = vadd.f32 %v2408, %v2069
          %v2446 = vadd.f32 %v2408, %v2070
          %v2447 = vadd.f32 %v2412, %v2069
          %v2448 = vadd.f32 %v2412, %v2070
          %v2449 = vadd.f32 %v2416, %v2069
          %v2450 = vadd.f32 %v2416, %v2070
          %v2451 = vadd.f32 %v2420, %v2069
          %v2452 = vadd.f32 %v2420, %v2070
          %v2453 = vadd.f32 %v2424, %v2069
          %v2454 = vadd.f32 %v2424, %v2070
          %v2455 = vadd.f32 %v2428, %v2069
          %v2456 = vadd.f32 %v2428, %v2070
          %v2457 = vadd.f32 %v2432, %v2069
          %v2458 = vadd.f32 %v2432, %v2070
          %v2459 = vadd.f32 %v2436, %v2069
          %v2460 = vadd.f32 %v2436, %v2070
          %v2461 = vadd.f32 %v2445, %v2277
          %v2462 = vadd.f32 %v2446, %v2282
          %v2463 = vadd.f32 %v2447, %v2287
          %v2464 = vadd.f32 %v2448, %v2292
          %v2465 = vadd.f32 %v2449, %v2297
          %v2466 = vadd.f32 %v2450, %v2302
          %v2467 = vadd.f32 %v2451, %v2307
          %v2468 = vadd.f32 %v2452, %v2312
          %v2469 = vadd.f32 %v2453, %v2317
          %v2470 = vadd.f32 %v2454, %v2322
          %v2471 = vadd.f32 %v2455, %v2327
          %v2472 = vadd.f32 %v2456, %v2332
          %v2473 = vadd.f32 %v2457, %v2337
          %v2474 = vadd.f32 %v2458, %v2342
          %v2475 = vadd.f32 %v2459, %v2347
          %v2476 = vadd.f32 %v2460, %v2352
          %vm2477 = vcmp.gt.f32.partialorder %v2461, 0.0
          %vm2478 = vcmp.gt.f32.partialorder %v2462, 0.0
          %vm2479 = vcmp.gt.f32.partialorder %v2463, 0.0
          %vm2480 = vcmp.gt.f32.partialorder %v2464, 0.0
          %vm2481 = vcmp.gt.f32.partialorder %v2465, 0.0
          %vm2482 = vcmp.gt.f32.partialorder %v2466, 0.0
          %vm2483 = vcmp.gt.f32.partialorder %v2467, 0.0
          %vm2484 = vcmp.gt.f32.partialorder %v2468, 0.0
          %vm2485 = vcmp.gt.f32.partialorder %v2469, 0.0
          %vm2486 = vcmp.gt.f32.partialorder %v2470, 0.0
          %vm2487 = vcmp.gt.f32.partialorder %v2471, 0.0
          %vm2488 = vcmp.gt.f32.partialorder %v2472, 0.0
          %vm2489 = vcmp.gt.f32.partialorder %v2473, 0.0
          %vm2490 = vcmp.gt.f32.partialorder %v2474, 0.0
          %vm2491 = vcmp.gt.f32.partialorder %v2475, 0.0
          %vm2492 = vcmp.gt.f32.partialorder %v2476, 0.0
          %v2493 = vmul.f32 %v2461, 0.2
          %v2494 = vmul.f32 %v2462, 0.2
          %v2495 = vmul.f32 %v2463, 0.2
          %v2496 = vmul.f32 %v2464, 0.2
          %v2497 = vmul.f32 %v2465, 0.2
          %v2498 = vmul.f32 %v2466, 0.2
          %v2499 = vmul.f32 %v2467, 0.2
          %v2500 = vmul.f32 %v2468, 0.2
          %v2501 = vmul.f32 %v2469, 0.2
          %v2502 = vmul.f32 %v2470, 0.2
          %v2503 = vmul.f32 %v2471, 0.2
          %v2504 = vmul.f32 %v2472, 0.2
          %v2505 = vmul.f32 %v2473, 0.2
          %v2506 = vmul.f32 %v2474, 0.2
          %v2507 = vmul.f32 %v2475, 0.2
          %v2508 = vmul.f32 %v2476, 0.2
          %v2509 = vsel %vm2477, %v2461, %v2493
          %v2510 = vsel %vm2478, %v2462, %v2494
          %v2511 = vsel %vm2479, %v2463, %v2495
          %v2512 = vsel %vm2480, %v2464, %v2496
          %v2513 = vsel %vm2481, %v2465, %v2497
          %v2514 = vsel %vm2482, %v2466, %v2498
          %v2515 = vsel %vm2483, %v2467, %v2499
          %v2516 = vsel %vm2484, %v2468, %v2500
          %v2517 = vsel %vm2485, %v2469, %v2501
          %v2518 = vsel %vm2486, %v2470, %v2502
          %v2519 = vsel %vm2487, %v2471, %v2503
          %v2520 = vsel %vm2488, %v2472, %v2504
          %v2521 = vsel %vm2489, %v2473, %v2505
          %v2522 = vsel %vm2490, %v2474, %v2506
          %v2523 = vsel %vm2491, %v2475, %v2507
          %v2524 = vsel %vm2492, %v2476, %v2508
          %v2525 = vld [vmem:[%s15] sm:$0xff]
          %vm2526 = vcmask 64512
          %v2528 = vsel %vm2526, %v2509, 0
          %v2531 = vsel %vm2526, %v2510, 0
          %v2534 = vsel %vm2526, %v2511, 0
          %v2537 = vsel %vm2526, %v2512, 0
          %v2540 = vsel %vm2526, %v2513, 0
          %v2543 = vsel %vm2526, %v2514, 0
          %v2546 = vsel %vm2526, %v2515, 0
          %v2549 = vsel %vm2526, %v2516, 0
          %v2552 = vsel %vm2526, %v2517, 0
          %v2555 = vsel %vm2526, %v2518, 0
          %v2558 = vsel %vm2526, %v2519, 0
          %v2561 = vsel %vm2526, %v2520, 0
          %v2564 = vsel %vm2526, %v2521, 0
          %v2567 = vsel %vm2526, %v2522, 0
          %v2570 = vsel %vm2526, %v2523, 0
          %v2573 = vsel %vm2526, %v2524, 0
          %2575 = vmatprep.subr.mxu0 0.0
          %2576 = vmatpush1.msra.mxu0 0.0
          %2577 = vmatprep.subr.mxu0 0.0
          %2578 = vmatpush1.msra.mxu0 0.0
          %2579 = vmatprep.subr.mxu0 0.0
          %2580 = vmatpush1.msra.mxu0 0.0
          %2581 = vmatprep.subr.mxu0 0.0
          %2582 = vmatpush1.msra.mxu0 0.0
          %2583 = vmatprep.subr.mxu0 0.0
          %2584 = vmatpush1.msra.mxu0 0.0
          %2585 = vmatprep.subr.mxu0 0.0
          %2586 = vmatpush1.msra.mxu0 0.0
          %2587 = vmatprep.subr.mxu0 0.0
          %2588 = vmatpush1.msra.mxu0 0.0
          %2589 = vmatprep.subr.mxu0 0.0
          %2590 = vmatpush1.msra.mxu0 0.0
          %2591 = vmatprep.subr.mxu0 0.0
          %2592 = vmatpush1.msra.mxu0 0.0
          %2593 = vmatprep.subr.mxu0 0.0
          %2594 = vmatpush1.msra.mxu0 0.0
          %2595 = vmatprep.subr.mxu0 0.0
          %2596 = vmatpush1.msra.mxu0 0.0
          %2597 = vmatprep.subr.mxu0 0.0
          %2598 = vmatpush1.msra.mxu0 0.0
          %2599 = vmatprep.subr.mxu0 0.0
          %2600 = vmatpush1.msra.mxu0 0.0
          %2601 = vmatprep.subr.mxu0 0.0
          %2602 = vmatpush1.msra.mxu0 0.0
          %2603 = vmatprep.subr.mxu0 0.0
          %2604 = vmatpush1.msra.mxu0 0.0
          %2605 = vmatprep.subr.mxu0 0.0
          %2606 = vmatpush1.msra.mxu0 %v2525
          %2607 = vmatprep.subr.mxu0 0.0
          %2608 = vmatpush2.msra.mxu0 0.0
          %2609 = vmatprep.subr.mxu0 0.0
          %2610 = vmatpush2.msra.mxu0 0.0
          %2611 = vmatprep.subr.mxu0 0.0
          %2612 = vmatpush2.msra.mxu0 0.0
          %2613 = vmatprep.subr.mxu0 0.0
          %2614 = vmatpush2.msra.mxu0 0.0
          %2615 = vmatprep.subr.mxu0 0.0
          %2616 = vmatpush2.msra.mxu0 0.0
          %2617 = vmatprep.subr.mxu0 0.0
          %2618 = vmatpush2.msra.mxu0 0.0
          %2619 = vmatprep.subr.mxu0 0.0
          %2620 = vmatpush2.msra.mxu0 0.0
          %2621 = vmatprep.subr.mxu0 0.0
          %2622 = vmatpush2.msra.mxu0 0.0
          %2623 = vmatprep.subr.mxu0 0.0
          %2624 = vmatpush2.msra.mxu0 0.0
          %2625 = vmatprep.subr.mxu0 0.0
          %2626 = vmatpush2.msra.mxu0 0.0
          %2627 = vmatprep.subr.mxu0 0.0
          %2628 = vmatpush2.msra.mxu0 0.0
          %2629 = vmatprep.subr.mxu0 0.0
          %2630 = vmatpush2.msra.mxu0 0.0
          %2631 = vmatprep.subr.mxu0 0.0
          %2632 = vmatpush2.msra.mxu0 0.0
          %2633 = vmatprep.subr.mxu0 0.0
          %2634 = vmatpush2.msra.mxu0 0.0
          %2635 = vmatprep.subr.mxu0 0.0
          %2636 = vmatpush2.msra.mxu0 0.0
          %2637 = vmatprep.subr.mxu0 0.0
          %2638 = vmatpush2.msra.mxu0 0.0
          %2639 = vmatprep.mubr.f32.mxu0 0.0
          %2640 = vmatmul.mubr.f32.gmra.mxu0 %v2528
          %v2641 = vpop.f32.mrf.mxu0
          %v2642 = vadd.f32 0.0, %v2641
          %v2643 = vpop.f32.mrf.mxu0
          %2644 = vmatprep.mubr.f32.mxu0 0.0
          %2645 = vmatmul.mubr.f32.gmra.mxu0 %v2531
          %v2646 = vpop.f32.mrf.mxu0
          %v2647 = vadd.f32 0.0, %v2646
          %v2648 = vpop.f32.mrf.mxu0
          %2649 = vmatprep.mubr.f32.mxu0 0.0
          %2650 = vmatmul.mubr.f32.gmra.mxu0 %v2534
          %v2651 = vpop.f32.mrf.mxu0
          %v2652 = vadd.f32 0.0, %v2651
          %v2653 = vpop.f32.mrf.mxu0
          %2654 = vmatprep.mubr.f32.mxu0 0.0
          %2655 = vmatmul.mubr.f32.gmra.mxu0 %v2537
          %v2656 = vpop.f32.mrf.mxu0
          %v2657 = vadd.f32 0.0, %v2656
          %v2658 = vpop.f32.mrf.mxu0
          %2659 = vmatprep.mubr.f32.mxu0 0.0
          %2660 = vmatmul.mubr.f32.gmra.mxu0 %v2540
          %v2661 = vpop.f32.mrf.mxu0
          %v2662 = vadd.f32 0.0, %v2661
          %v2663 = vpop.f32.mrf.mxu0
          %2664 = vmatprep.mubr.f32.mxu0 0.0
          %2665 = vmatmul.mubr.f32.gmra.mxu0 %v2543
          %v2666 = vpop.f32.mrf.mxu0
          %v2667 = vadd.f32 0.0, %v2666
          %v2668 = vpop.f32.mrf.mxu0
          %2669 = vmatprep.mubr.f32.mxu0 0.0
          %2670 = vmatmul.mubr.f32.gmra.mxu0 %v2546
          %v2671 = vpop.f32.mrf.mxu0
          %v2672 = vadd.f32 0.0, %v2671
          %v2673 = vpop.f32.mrf.mxu0
          %2674 = vmatprep.mubr.f32.mxu0 0.0
          %2675 = vmatmul.mubr.f32.gmra.mxu0 %v2549
          %v2676 = vpop.f32.mrf.mxu0
          %v2677 = vadd.f32 0.0, %v2676
          %v2678 = vpop.f32.mrf.mxu0
          %2679 = vmatprep.mubr.f32.mxu0 0.0
          %2680 = vmatmul.mubr.f32.gmra.mxu0 %v2552
          %v2681 = vpop.f32.mrf.mxu0
          %v2682 = vadd.f32 0.0, %v2681
          %v2683 = vpop.f32.mrf.mxu0
          %2684 = vmatprep.mubr.f32.mxu0 0.0
          %2685 = vmatmul.mubr.f32.gmra.mxu0 %v2555
          %v2686 = vpop.f32.mrf.mxu0
          %v2687 = vadd.f32 0.0, %v2686
          %v2688 = vpop.f32.mrf.mxu0
          %2689 = vmatprep.mubr.f32.mxu0 0.0
          %2690 = vmatmul.mubr.f32.gmra.mxu0 %v2558
          %v2691 = vpop.f32.mrf.mxu0
          %v2692 = vadd.f32 0.0, %v2691
          %v2693 = vpop.f32.mrf.mxu0
          %2694 = vmatprep.mubr.f32.mxu0 0.0
          %2695 = vmatmul.mubr.f32.gmra.mxu0 %v2561
          %v2696 = vpop.f32.mrf.mxu0
          %v2697 = vadd.f32 0.0, %v2696
          %v2698 = vpop.f32.mrf.mxu0
          %2699 = vmatprep.mubr.f32.mxu0 0.0
          %2700 = vmatmul.mubr.f32.gmra.mxu0 %v2564
          %v2701 = vpop.f32.mrf.mxu0
          %v2702 = vadd.f32 0.0, %v2701
          %v2703 = vpop.f32.mrf.mxu0
          %2704 = vmatprep.mubr.f32.mxu0 0.0
          %2705 = vmatmul.mubr.f32.gmra.mxu0 %v2567
          %v2706 = vpop.f32.mrf.mxu0
          %v2707 = vadd.f32 0.0, %v2706
          %v2708 = vpop.f32.mrf.mxu0
          %2709 = vmatprep.mubr.f32.mxu0 0.0
          %2710 = vmatmul.mubr.f32.gmra.mxu0 %v2570
          %v2711 = vpop.f32.mrf.mxu0
          %v2712 = vadd.f32 0.0, %v2711
          %v2713 = vpop.f32.mrf.mxu0
          %2714 = vmatprep.mubr.f32.mxu0 0.0
          %2715 = vmatmul.mubr.f32.gmra.mxu0 %v2573
          %v2716 = vpop.f32.mrf.mxu0
          %v2717 = vadd.f32 0.0, %v2716
          %v2718 = vpop.f32.mrf.mxu0
          %2719 = vdwg.mxu0
          %v2720 = vadd.f32 %v2642, 0.0
          %v2721 = vadd.f32 %v2647, 0.0
          %v2722 = vadd.f32 %v2652, 0.0
          %v2723 = vadd.f32 %v2657, 0.0
          %v2724 = vadd.f32 %v2662, 0.0
          %v2725 = vadd.f32 %v2667, 0.0
          %v2726 = vadd.f32 %v2672, 0.0
          %v2727 = vadd.f32 %v2677, 0.0
          %v2728 = vadd.f32 %v2682, 0.0
          %v2729 = vadd.f32 %v2687, 0.0
          %v2730 = vadd.f32 %v2692, 0.0
          %v2731 = vadd.f32 %v2697, 0.0
          %v2732 = vadd.f32 %v2702, 0.0
          %v2733 = vadd.f32 %v2707, 0.0
          %v2734 = vadd.f32 %v2712, 0.0
          %v2735 = vadd.f32 %v2717, 0.0
          %2752 = vset.pattern.permute.xlu0 0
          %2753 = vperm.xlu0 %2752, %v2720
          %v2754 = vpop.permute.xlu0 %2753
          %2755 = vset.pattern.permute.xlu0 0
          %2756 = vperm.xlu0 %2755, %v2721
          %v2757 = vpop.permute.xlu0 %2756
          %2758 = vset.pattern.permute.xlu0 0
          %2759 = vperm.xlu0 %2758, %v2722
          %v2760 = vpop.permute.xlu0 %2759
          %2761 = vset.pattern.permute.xlu0 0
          %2762 = vperm.xlu0 %2761, %v2723
          %v2763 = vpop.permute.xlu0 %2762
          %2764 = vset.pattern.permute.xlu0 0
          %2765 = vperm.xlu0 %2764, %v2724
          %v2766 = vpop.permute.xlu0 %2765
          %2767 = vset.pattern.permute.xlu0 0
          %2768 = vperm.xlu0 %2767, %v2725
          %v2769 = vpop.permute.xlu0 %2768
          %2770 = vset.pattern.permute.xlu0 0
          %2771 = vperm.xlu0 %2770, %v2726
          %v2772 = vpop.permute.xlu0 %2771
          %2773 = vset.pattern.permute.xlu0 0
          %2774 = vperm.xlu0 %2773, %v2727
          %v2775 = vpop.permute.xlu0 %2774
          %2776 = vset.pattern.permute.xlu0 0
          %2777 = vperm.xlu0 %2776, %v2728
          %v2778 = vpop.permute.xlu0 %2777
          %2779 = vset.pattern.permute.xlu0 0
          %2780 = vperm.xlu0 %2779, %v2729
          %v2781 = vpop.permute.xlu0 %2780
          %2782 = vset.pattern.permute.xlu0 0
          %2783 = vperm.xlu0 %2782, %v2730
          %v2784 = vpop.permute.xlu0 %2783
          %2785 = vset.pattern.permute.xlu0 0
          %2786 = vperm.xlu0 %2785, %v2731
          %v2787 = vpop.permute.xlu0 %2786
          %2788 = vset.pattern.permute.xlu0 0
          %2789 = vperm.xlu0 %2788, %v2732
          %v2790 = vpop.permute.xlu0 %2789
          %2791 = vset.pattern.permute.xlu0 0
          %2792 = vperm.xlu0 %2791, %v2733
          %v2793 = vpop.permute.xlu0 %2792
          %2794 = vset.pattern.permute.xlu0 0
          %2795 = vperm.xlu0 %2794, %v2734
          %v2796 = vpop.permute.xlu0 %2795
          %2797 = vset.pattern.permute.xlu0 0
          %2798 = vperm.xlu0 %2797, %v2735
          %v2799 = vpop.permute.xlu0 %2798
          %v2800 = vlaneseq
          %v2801 = vand.u32 %v2800, 127
          %v2802 = vlaneseq
          %v2803 = vshrl.u32 %v2802, 7
          %v2804 = vsub.s32 %v2801, %v2803
          %v2805 = vrot.slane %v2754, %v2804
          %v2806 = vadd.s32 %v2801, 4294967288
          %v2807 = vlaneseq
          %v2808 = vshrl.u32 %v2807, 7
          %v2809 = vsub.s32 %v2806, %v2808
          %v2810 = vrot.slane %v2757, %v2809
          %vm2811 = vcmask 130112
          %v2812 = vsel %vm2811, %v2810, %v2805
          %v2813 = vlaneseq
          %v2814 = vshrl.u32 %v2813, 7
          %v2815 = vsub.s32 %v2801, %v2814
          %v2816 = vrot.slane %v2760, %v2815
          %v2817 = vlaneseq
          %v2818 = vshrl.u32 %v2817, 7
          %v2819 = vsub.s32 %v2806, %v2818
          %v2820 = vrot.slane %v2763, %v2819
          %v2821 = vsel %vm2811, %v2820, %v2816
          %v2822 = vlaneseq
          %v2823 = vshrl.u32 %v2822, 7
          %v2824 = vsub.s32 %v2801, %v2823
          %v2825 = vrot.slane %v2766, %v2824
          %v2826 = vlaneseq
          %v2827 = vshrl.u32 %v2826, 7
          %v2828 = vsub.s32 %v2806, %v2827
          %v2829 = vrot.slane %v2769, %v2828
          %v2830 = vsel %vm2811, %v2829, %v2825
          %v2831 = vlaneseq
          %v2832 = vshrl.u32 %v2831, 7
          %v2833 = vsub.s32 %v2801, %v2832
          %v2834 = vrot.slane %v2772, %v2833
          %v2835 = vlaneseq
          %v2836 = vshrl.u32 %v2835, 7
          %v2837 = vsub.s32 %v2806, %v2836
          %v2838 = vrot.slane %v2775, %v2837
          %v2839 = vsel %vm2811, %v2838, %v2834
          %v2840 = vlaneseq
          %v2841 = vshrl.u32 %v2840, 7
          %v2842 = vsub.s32 %v2801, %v2841
          %v2843 = vrot.slane %v2778, %v2842
          %v2844 = vlaneseq
          %v2845 = vshrl.u32 %v2844, 7
          %v2846 = vsub.s32 %v2806, %v2845
          %v2847 = vrot.slane %v2781, %v2846
          %v2848 = vsel %vm2811, %v2847, %v2843
          %v2849 = vlaneseq
          %v2850 = vshrl.u32 %v2849, 7
          %v2851 = vsub.s32 %v2801, %v2850
          %v2852 = vrot.slane %v2784, %v2851
          %v2853 = vlaneseq
          %v2854 = vshrl.u32 %v2853, 7
          %v2855 = vsub.s32 %v2806, %v2854
          %v2856 = vrot.slane %v2787, %v2855
          %v2857 = vsel %vm2811, %v2856, %v2852
          %v2858 = vlaneseq
          %v2859 = vshrl.u32 %v2858, 7
          %v2860 = vsub.s32 %v2801, %v2859
          %v2861 = vrot.slane %v2790, %v2860
          %v2862 = vlaneseq
          %v2863 = vshrl.u32 %v2862, 7
          %v2864 = vsub.s32 %v2806, %v2863
          %v2865 = vrot.slane %v2793, %v2864
          %v2866 = vsel %vm2811, %v2865, %v2861
          %v2867 = vlaneseq
          %v2868 = vshrl.u32 %v2867, 7
          %v2869 = vsub.s32 %v2801, %v2868
          %v2870 = vrot.slane %v2796, %v2869
          %v2871 = vlaneseq
          %v2872 = vshrl.u32 %v2871, 7
          %v2873 = vsub.s32 %v2806, %v2872
          %v2874 = vrot.slane %v2799, %v2873
          %v2875 = vsel %vm2811, %v2874, %v2870
          %vm2876 = vcmask 1041409
          %v2877 = vsel %vm2876, %v2821, %v2812
          %vm2878 = vcmask 1042434
          %v2879 = vsel %vm2878, %v2830, %v2877
          %vm2880 = vcmask 1043459
          %v2881 = vsel %vm2880, %v2839, %v2879
          %vm2882 = vcmask 1044484
          %v2883 = vsel %vm2882, %v2848, %v2881
          %vm2884 = vcmask 1045509
          %v2885 = vsel %vm2884, %v2857, %v2883
          %vm2886 = vcmask 1046534
          %v2887 = vsel %vm2886, %v2866, %v2885
          %vm2888 = vcmask 1047559
          %v2889 = vsel %vm2888, %v2875, %v2887
          %v2891 = vsel %vm676, %v2889, -1e+30
          %v2892 = vsel %vm2082, %v2891, -inf
          %2893 = vmax.xlane.f32.xlu0 %v2892
          %v2894 = vpop.xlane.xlu0 %2893
          %v2895 = vsub.f32 %v2891, %v2894
          %v2896 = vmul.f32 %v2895, 1.442695
          %v2897 = vpow.pop %v2896
          %v2898 = vsel %vm2082, %v2897, 0.0
          %2899 = vadd.xlane.f32.xlu0 %v2898
          %v2900 = vpop.xlane.xlu0 %2899
          %v2901 = vrcp.pop %v2900
          %v2902 = vmul.f32 %v2897, %v2901
          %v2903 = vld [vmem:[%s16] sm:$0x1]
          %v2905 = vlaneseq
          %v2906 = vshrl.u32 %v2905, 7
          %v2907 = vsub.s32 0, %v2906
          %v2908 = vrot.slane %v2903, %v2907
          %v2911 = vsel %vm2082, %v2902, 0
          %2913 = vmatprep.subr.mxu0 0.0
          %2914 = vmatpush1.msra.mxu0 0.0
          %2915 = vmatprep.subr.mxu0 0.0
          %2916 = vmatpush1.msra.mxu0 0.0
          %2917 = vmatprep.subr.mxu0 0.0
          %2918 = vmatpush1.msra.mxu0 0.0
          %2919 = vmatprep.subr.mxu0 0.0
          %2920 = vmatpush1.msra.mxu0 0.0
          %2921 = vmatprep.subr.mxu0 0.0
          %2922 = vmatpush1.msra.mxu0 0.0
          %2923 = vmatprep.subr.mxu0 0.0
          %2924 = vmatpush1.msra.mxu0 0.0
          %2925 = vmatprep.subr.mxu0 0.0
          %2926 = vmatpush1.msra.mxu0 0.0
          %2927 = vmatprep.subr.mxu0 0.0
          %2928 = vmatpush1.msra.mxu0 0.0
          %2929 = vmatprep.subr.mxu0 0.0
          %2930 = vmatpush1.msra.mxu0 0.0
          %2931 = vmatprep.subr.mxu0 0.0
          %2932 = vmatpush1.msra.mxu0 0.0
          %2933 = vmatprep.subr.mxu0 0.0
          %2934 = vmatpush1.msra.mxu0 0.0
          %2935 = vmatprep.subr.mxu0 0.0
          %2936 = vmatpush1.msra.mxu0 0.0
          %2937 = vmatprep.subr.mxu0 0.0
          %2938 = vmatpush1.msra.mxu0 0.0
          %2939 = vmatprep.subr.mxu0 0.0
          %2940 = vmatpush1.msra.mxu0 0.0
          %2941 = vmatprep.subr.mxu0 0.0
          %2942 = vmatpush1.msra.mxu0 %v2070
          %2943 = vmatprep.subr.mxu0 0.0
          %2944 = vmatpush1.msra.mxu0 %v2069
          %2945 = vmatprep.subr.mxu0 0.0
          %2946 = vmatpush2.msra.mxu0 0.0
          %2947 = vmatprep.subr.mxu0 0.0
          %2948 = vmatpush2.msra.mxu0 0.0
          %2949 = vmatprep.subr.mxu0 0.0
          %2950 = vmatpush2.msra.mxu0 0.0
          %2951 = vmatprep.subr.mxu0 0.0
          %2952 = vmatpush2.msra.mxu0 0.0
          %2953 = vmatprep.subr.mxu0 0.0
          %2954 = vmatpush2.msra.mxu0 0.0
          %2955 = vmatprep.subr.mxu0 0.0
          %2956 = vmatpush2.msra.mxu0 0.0
          %2957 = vmatprep.subr.mxu0 0.0
          %2958 = vmatpush2.msra.mxu0 0.0
          %2959 = vmatprep.subr.mxu0 0.0
          %2960 = vmatpush2.msra.mxu0 0.0
          %2961 = vmatprep.subr.mxu0 0.0
          %2962 = vmatpush2.msra.mxu0 0.0
          %2963 = vmatprep.subr.mxu0 0.0
          %2964 = vmatpush2.msra.mxu0 0.0
          %2965 = vmatprep.subr.mxu0 0.0
          %2966 = vmatpush2.msra.mxu0 0.0
          %2967 = vmatprep.subr.mxu0 0.0
          %2968 = vmatpush2.msra.mxu0 0.0
          %2969 = vmatprep.subr.mxu0 0.0
          %2970 = vmatpush2.msra.mxu0 0.0
          %2971 = vmatprep.subr.mxu0 0.0
          %2972 = vmatpush2.msra.mxu0 0.0
          %2973 = vmatprep.subr.mxu0 0.0
          %2974 = vmatpush2.msra.mxu0 0.0
          %2975 = vmatprep.subr.mxu0 0.0
          %2976 = vmatpush2.msra.mxu0 0.0
          %2977 = vmatprep.mubr.f32.mxu0 0.0
          %2978 = vmatmul.mubr.f32.gmra.mxu0 %v2911
          %v2979 = vpop.f32.mrf.mxu0
          %v2980 = vadd.f32 %v2908, %v2979
          %v2981 = vpop.f32.mrf.mxu0
          %2982 = vdwg.mxu0
          %v2983 = vmax.f32 %v2980, 0.0
          %s2984 = scalar_lea.vmem [#allocation3], %s674
          %2985 = vst.msk [vmem:[%s2984] sm:$0xff] %vm2526, %v2983
          %p2986 = scmp.eq.s32.totalorder %s38, 1
          // Predicated region
          $region121: #{tpu_custom_call.1} parent=115 // pred_check
            %p2987 = pneg %p2986
          $region122: #{tpu_custom_call.1} parent=115 // pred_check_branch
            %2989 = sbr.rel (%p2987) target = $region124
          $region123: #{tpu_custom_call.1} parent=115 // pred_region
            %v2990 = vld [vmem:[%s17] sm:$0x3]
            %v2991 = vld [vmem:[#allocation3] sm:$0xff]
            %v2992 = vld [vmem:[#allocation3 + $0x8] sm:$0xff]
            %v2994 = vsel %vm2082, %v2990, 0
            %2996 = vmatprep.subr.mxu0 0.0
            %2997 = vmatpush1.msra.mxu0 0.0
            %2998 = vmatprep.subr.mxu0 0.0
            %2999 = vmatpush1.msra.mxu0 0.0
            %3000 = vmatprep.subr.mxu0 0.0
            %3001 = vmatpush1.msra.mxu0 0.0
            %3002 = vmatprep.subr.mxu0 0.0
            %3003 = vmatpush1.msra.mxu0 0.0
            %3004 = vmatprep.subr.mxu0 0.0
            %3005 = vmatpush1.msra.mxu0 0.0
            %3006 = vmatprep.subr.mxu0 0.0
            %3007 = vmatpush1.msra.mxu0 0.0
            %3008 = vmatprep.subr.mxu0 0.0
            %3009 = vmatpush1.msra.mxu0 0.0
            %3010 = vmatprep.subr.mxu0 0.0
            %3011 = vmatpush1.msra.mxu0 0.0
            %3012 = vmatprep.subr.mxu0 0.0
            %3013 = vmatpush1.msra.mxu0 0.0
            %3014 = vmatprep.subr.mxu0 0.0
            %3015 = vmatpush1.msra.mxu0 0.0
            %3016 = vmatprep.subr.mxu0 0.0
            %3017 = vmatpush1.msra.mxu0 0.0
            %3018 = vmatprep.subr.mxu0 0.0
            %3019 = vmatpush1.msra.mxu0 0.0
            %3020 = vmatprep.subr.mxu0 0.0
            %3021 = vmatpush1.msra.mxu0 0.0
            %3022 = vmatprep.subr.mxu0 0.0
            %3023 = vmatpush1.msra.mxu0 0.0
            %3024 = vmatprep.subr.mxu0 0.0
            %3025 = vmatpush1.msra.mxu0 %v2992
            %3026 = vmatprep.subr.mxu0 0.0
            %3027 = vmatpush1.msra.mxu0 %v2991
            %3028 = vmatprep.subr.mxu0 0.0
            %3029 = vmatpush2.msra.mxu0 0.0
            %3030 = vmatprep.subr.mxu0 0.0
            %3031 = vmatpush2.msra.mxu0 0.0
            %3032 = vmatprep.subr.mxu0 0.0
            %3033 = vmatpush2.msra.mxu0 0.0
            %3034 = vmatprep.subr.mxu0 0.0
            %3035 = vmatpush2.msra.mxu0 0.0
            %3036 = vmatprep.subr.mxu0 0.0
            %3037 = vmatpush2.msra.mxu0 0.0
            %3038 = vmatprep.subr.mxu0 0.0
            %3039 = vmatpush2.msra.mxu0 0.0
            %3040 = vmatprep.subr.mxu0 0.0
            %3041 = vmatpush2.msra.mxu0 0.0
            %3042 = vmatprep.subr.mxu0 0.0
            %3043 = vmatpush2.msra.mxu0 0.0
            %3044 = vmatprep.subr.mxu0 0.0
            %3045 = vmatpush2.msra.mxu0 0.0
            %3046 = vmatprep.subr.mxu0 0.0
            %3047 = vmatpush2.msra.mxu0 0.0
            %3048 = vmatprep.subr.mxu0 0.0
            %3049 = vmatpush2.msra.mxu0 0.0
            %3050 = vmatprep.subr.mxu0 0.0
            %3051 = vmatpush2.msra.mxu0 0.0
            %3052 = vmatprep.subr.mxu0 0.0
            %3053 = vmatpush2.msra.mxu0 0.0
            %3054 = vmatprep.subr.mxu0 0.0
            %3055 = vmatpush2.msra.mxu0 0.0
            %3056 = vmatprep.subr.mxu0 0.0
            %3057 = vmatpush2.msra.mxu0 0.0
            %3058 = vmatprep.subr.mxu0 0.0
            %3059 = vmatpush2.msra.mxu0 0.0
            %3060 = vmatprep.mubr.f32.mxu0 0.0
            %3061 = vmatmul.mubr.f32.gmra.mxu0 %v2994
            %v3062 = vpop.f32.mrf.mxu0
            %v3063 = vadd.f32 0.0, %v3062
            %v3064 = vpop.f32.mrf.mxu0
            %3065 = vdwg.mxu0
            %v3066 = vld [vmem:[%s18] sm:$0x3]
            %3068 = vset.pattern.permute.xlu0 0
            %3069 = vperm.xlu0 %3068, %v3066
            %v3070 = vpop.permute.xlu0 %3069
            %v3072 = vmul.f32 %v3063, %v3070
            %v3073 = vld [vmem:[%s19] sm:$0xff]
            %v3074 = vld [vmem:[%s20] sm:$0x1]
            %v3076 = vlaneseq
            %v3077 = vshrl.u32 %v3076, 7
            %v3078 = vsub.s32 0, %v3077
            %v3079 = vrot.slane %v3074, %v3078
            %v3082 = vsel %vm2526, %v3072, 0
            %3084 = vmatprep.subr.mxu0 0.0
            %3085 = vmatpush1.msra.mxu0 0.0
            %3086 = vmatprep.subr.mxu0 0.0
            %3087 = vmatpush1.msra.mxu0 0.0
            %3088 = vmatprep.subr.mxu0 0.0
            %3089 = vmatpush1.msra.mxu0 0.0
            %3090 = vmatprep.subr.mxu0 0.0
            %3091 = vmatpush1.msra.mxu0 0.0
            %3092 = vmatprep.subr.mxu0 0.0
            %3093 = vmatpush1.msra.mxu0 0.0
            %3094 = vmatprep.subr.mxu0 0.0
            %3095 = vmatpush1.msra.mxu0 0.0
            %3096 = vmatprep.subr.mxu0 0.0
            %3097 = vmatpush1.msra.mxu0 0.0
            %3098 = vmatprep.subr.mxu0 0.0
            %3099 = vmatpush1.msra.mxu0 0.0
            %3100 = vmatprep.subr.mxu0 0.0
            %3101 = vmatpush1.msra.mxu0 0.0
            %3102 = vmatprep.subr.mxu0 0.0
            %3103 = vmatpush1.msra.mxu0 0.0
            %3104 = vmatprep.subr.mxu0 0.0
            %3105 = vmatpush1.msra.mxu0 0.0
            %3106 = vmatprep.subr.mxu0 0.0
            %3107 = vmatpush1.msra.mxu0 0.0
            %3108 = vmatprep.subr.mxu0 0.0
            %3109 = vmatpush1.msra.mxu0 0.0
            %3110 = vmatprep.subr.mxu0 0.0
            %3111 = vmatpush1.msra.mxu0 0.0
            %3112 = vmatprep.subr.mxu0 0.0
            %3113 = vmatpush1.msra.mxu0 0.0
            %3114 = vmatprep.subr.mxu0 0.0
            %3115 = vmatpush1.msra.mxu0 %v3073
            %3116 = vmatprep.subr.mxu0 0.0
            %3117 = vmatpush2.msra.mxu0 0.0
            %3118 = vmatprep.subr.mxu0 0.0
            %3119 = vmatpush2.msra.mxu0 0.0
            %3120 = vmatprep.subr.mxu0 0.0
            %3121 = vmatpush2.msra.mxu0 0.0
            %3122 = vmatprep.subr.mxu0 0.0
            %3123 = vmatpush2.msra.mxu0 0.0
            %3124 = vmatprep.subr.mxu0 0.0
            %3125 = vmatpush2.msra.mxu0 0.0
            %3126 = vmatprep.subr.mxu0 0.0
            %3127 = vmatpush2.msra.mxu0 0.0
            %3128 = vmatprep.subr.mxu0 0.0
            %3129 = vmatpush2.msra.mxu0 0.0
            %3130 = vmatprep.subr.mxu0 0.0
            %3131 = vmatpush2.msra.mxu0 0.0
            %3132 = vmatprep.subr.mxu0 0.0
            %3133 = vmatpush2.msra.mxu0 0.0
            %3134 = vmatprep.subr.mxu0 0.0
            %3135 = vmatpush2.msra.mxu0 0.0
            %3136 = vmatprep.subr.mxu0 0.0
            %3137 = vmatpush2.msra.mxu0 0.0
            %3138 = vmatprep.subr.mxu0 0.0
            %3139 = vmatpush2.msra.mxu0 0.0
            %3140 = vmatprep.subr.mxu0 0.0
            %3141 = vmatpush2.msra.mxu0 0.0
            %3142 = vmatprep.subr.mxu0 0.0
            %3143 = vmatpush2.msra.mxu0 0.0
            %3144 = vmatprep.subr.mxu0 0.0
            %3145 = vmatpush2.msra.mxu0 0.0
            %3146 = vmatprep.subr.mxu0 0.0
            %3147 = vmatpush2.msra.mxu0 0.0
            %3148 = vmatprep.mubr.f32.mxu0 0.0
            %3149 = vmatmul.mubr.f32.gmra.mxu0 %v3082
            %v3150 = vpop.f32.mrf.mxu0
            %v3151 = vadd.f32 %v3079, %v3150
            %v3152 = vpop.f32.mrf.mxu0
            %3153 = vdwg.mxu0
            %vm3154 = vcmask 25600
            %3155 = vst.msk [vmem:[#allocation6] sm:$0x3] %vm3154, %v3151
          $region124: #{tpu_custom_call.1} parent=115 // pred_fallthru
            _
        $region116: #{tpu_custom_call.1} parent=103 // pred_fallthru
          _
        // Predicated region
        $region125: #{tpu_custom_call.1} parent=103 // pred_check
          %p3156 = pneg %p509
        $region126: #{tpu_custom_call.1} parent=103 // pred_check_branch
          %3158 = sbr.rel (%p3156) target = $region128
        $region127: #{tpu_custom_call.1} parent=103 // pred_region
          %s3160 = ssub.s32 32, 32
          %3161 = vsyncadd [#allocation7], %s3160
          %s3163 = sshll.u32 [#allocation6], 4
          %s3164 = int_to_ptr.vmem [resolvable:$true] %s3163
          %3166 = dma.vmem_to_hbm [thread:$0]  %s3164, 32, %s21, [#allocation7]
        $region128: #{tpu_custom_call.1} parent=103 // pred_fallthru
          _
        // Predicated region
        $region129: #{tpu_custom_call.1} parent=103 // pred_check
          %p3167 = pneg %p509
        $region130: #{tpu_custom_call.1} parent=103 // pred_check_branch
          %3169 = sbr.rel (%p3167) target = $region132
        $region131: #{tpu_custom_call.1} parent=103 // pred_region
          %3170 = dma.done [#allocation7], 32
        $region132: #{tpu_custom_call.1} parent=103 // pred_fallthru
          _
      $region104: #{tpu_custom_call.1} parent=5 // pred_fallthru
        _
      %p3171 = scmp.le.s32.totalorder 2, %s28
      // Predicated region
      $region133: #{tpu_custom_call.1} parent=5 // pred_check
        %p3172 = pneg %p3171
      $region134: #{tpu_custom_call.1} parent=5 // pred_check_branch
        %3174 = sbr.rel (%p3172) target = $region136
      $region135: #{tpu_custom_call.1} parent=5 // pred_region
        %s3175 = ssub.s32 %s28, 2
      $region136: #{tpu_custom_call.1} parent=5 // pred_fallthru
        _
    $region6: #{tpu_custom_call.1} parent=1 // loop_footer
      %s32 = sadd.s32 1, %s28
    $region7: #{tpu_custom_call.1} parent=1 // loop_footer_branch
      %27 = sbr.rel target = $region3
    $region8: #{tpu_custom_call.1} parent=1 // loop_exit
      _
    %3176 = vsyncpa [#allocation7], 1
    %s3177 = scalar_lea.sflag [#allocation7], 1
    %3178 = vsyncpa %s3177, 1

</llo_original>
